<compile_context>
chip_gen: v7x
topology: tpu7x:2x2x1
jax: 0.10.0
libtpu: 0.0.40
codegen_flags: <defaults>
</compile_context>

<pallas_src>
import numpy as np
import jax
import jax.numpy as jnp
from jax import lax
from jax.experimental import pallas as pl
from jax.experimental.pallas import tpu as pltpu


# ----------------------------- module geometry ------------------------------

N_BATCH = 2
C0, C1 = 4, 8                  # branch channels (expansion = 1)
H0, W0 = 16, 16                # hi-res branch spatial
H1, W1 = 8, 8                  # lo-res branch spatial
HW0 = H0 * W0                  # 256 lanes (two full 128-lane groups)
HW1 = H1 * W1                  # 64 valid lo-res positions
HW1P = 128                     # lo-res spatial padded to one full lane group

# tap order = kh*3 + kw (matches HWIO weight flattening)
_TAPS = tuple((dh, dw) for dh in (-1, 0, 1) for dw in (-1, 0, 1))


# ------------------------------- Pallas kernel -------------------------------

def _hr_module_kernel(x0_ref, x1_ref,
                      w_b0c1, b_b0c1, w_b0c2, b_b0c2,
                      w_b1c1, b_b1c1, w_b1c2, b_b1c2,
                      w_f01, b_f01, w_f10, b_f10,
                      mask_hi_ref, mask_lo_ref, up_ref, sel_ref,
                      y0_ref, y1_ref):
    # Layout: (C, H*W) per image — channels on sublanes, spatial on lanes.
    x0 = x0_ref[0]            # (C0, HW0)
    x1 = x1_ref[0]            # (C1, HW1P), valid spatial in lanes [0, 64)

    def conv3x3_bn(x, w_ref, b_ref, mask_ref, w_img, hw):
        # x: (Cin, hw). w_ref: (9, Cout, Cin) with BN scale folded in.
        # mask_ref: (9, hw) 0/1 boundary masks. Returns BN(conv3x3(x)).
        cout = w_ref.shape[1]
        acc = jnp.zeros((cout, hw), jnp.float32)
        for t, (dh, dw) in enumerate(_TAPS):
            off = dh * w_img + dw
            shifted = x if off == 0 else pltpu.roll(x, (-off) % hw, 1)
            tap = shifted * mask_ref[t:t + 1, :]       # zero out-of-image reads
            acc = acc + jnp.dot(w_ref[t], tap,
                                preferred_element_type=jnp.float32)
        return acc + b_ref[...]                        # folded BN shift

    # --- branch 0: BasicBlock on the 16x16 / C0 map ---
    h = jnp.maximum(conv3x3_bn(x0, w_b0c1, b_b0c1, mask_hi_ref, W0, HW0), 0.0)
    xb0 = jnp.maximum(conv3x3_bn(h, w_b0c2, b_b0c2, mask_hi_ref, W0, HW0) + x0,
                      0.0)

    # --- branch 1: BasicBlock on the 8x8 / C1 map (lane-padded to 128) ---
    h = jnp.maximum(conv3x3_bn(x1, w_b1c1, b_b1c1, mask_lo_ref, W1, HW1P), 0.0)
    xb1 = jnp.maximum(conv3x3_bn(h, w_b1c2, b_b1c2, mask_lo_ref, W1, HW1P) + x1,
                      0.0)

    # --- fuse i=0: y0 = relu(xb0 + nearest_up2(BN(conv1x1(xb1)))) ---
    t = jnp.dot(w_f01[...], xb1, preferred_element_type=jnp.float32) + b_f01[...]
    t_up = jnp.dot(t, up_ref[...], preferred_element_type=jnp.float32)  # (C0,HW0)
    y0_ref[0] = jnp.maximum(xb0 + t_up, 0.0)

    # --- fuse i=1: y1 = relu(BN(conv3x3 stride2(xb0)) + xb1) ---
    # stride-2 conv = full-res conv followed by a 0/1 selection matmul
    f_full = conv3x3_bn(xb0, w_f10, b_f10, mask_hi_ref, W0, HW0)        # (C1,HW0)
    f_sub = jnp.dot(f_full, sel_ref[...], preferred_element_type=jnp.float32)
    y1_ref[0] = jnp.maximum(f_sub + xb1, 0.0)


# ------------------------------ kernel wrapper --------------------------------

def hr_module_forward(prep, x0_nhwc, x1_nhwc):
    n = x0_nhwc.shape[0]
    # NHWC -> (N, C, H*W): channels on sublanes, spatial on the lane axis.
    x0t = x0_nhwc.reshape(n, HW0, C0).transpose(0, 2, 1)
    x1t = x1_nhwc.reshape(n, HW1, C1).transpose(0, 2, 1)
    x1t = jnp.pad(x1t, ((0, 0), (0, 0), (0, HW1P - HW1)))

    def bspec(c, hw):
        return pl.BlockSpec((1, c, hw), lambda i: (i, 0, 0))

    def cspec(shape):
        nd = len(shape)
        return pl.BlockSpec(shape, lambda i, _nd=nd: (0,) * _nd)

    consts = (prep["w_b0c1"], prep["b_b0c1"], prep["w_b0c2"], prep["b_b0c2"],
              prep["w_b1c1"], prep["b_b1c1"], prep["w_b1c2"], prep["b_b1c2"],
              prep["w_f01"], prep["b_f01"], prep["w_f10"], prep["b_f10"],
              prep["mask_hi"], prep["mask_lo"], prep["up"], prep["sel"])

    y0t, y1t = pl.pallas_call(
        _hr_module_kernel,
        grid=(n,),
        in_specs=[bspec(C0, HW0), bspec(C1, HW1P)]
                 + [cspec(c.shape) for c in consts],
        out_specs=[bspec(C0, HW0), bspec(C1, HW1P)],
        out_shape=[jax.ShapeDtypeStruct((n, C0, HW0), jnp.float32),
                   jax.ShapeDtypeStruct((n, C1, HW1P), jnp.float32)],
        compiler_params=pltpu.CompilerParams(
            dimension_semantics=("parallel",)),
    )(x0t, x1t, *consts)

    y0 = y0t.transpose(0, 2, 1).reshape(n, H0, W0, C0)
    y1 = y1t[:, :, :HW1].transpose(0, 2, 1).reshape(n, H1, W1, C1)
    return [y0, y1]


# --------------------------- parameter init & prep ----------------------------

def _conv_w(key, kh, kw, cin, cout):
    return (0.1 * jax.random.normal(key, (kh, kw, cin, cout))).astype(jnp.float32)


def _bn_params(key, c, eps=1e-5):
    k1, k2 = jax.random.split(key)
    gamma = 1.0 + 0.1 * jax.random.normal(k1, (c,))
    beta = 0.1 * jax.random.normal(k2, (c,))
    running_mean = jnp.zeros((c,))
    running_var = jnp.ones((c,))
    scale = gamma / jnp.sqrt(running_var + eps)
    shift = beta - running_mean * scale
    return scale.astype(jnp.float32), shift.astype(jnp.float32)


def init_params(key):
    keys = jax.random.split(key, 12)
    p = {}
    # branch 0: one BasicBlock (conv3x3+bn+relu, conv3x3+bn, +x, relu)
    p["b0_conv1_w"] = _conv_w(keys[0], 3, 3, C0, C0)
    p["b0_bn1"] = _bn_params(keys[1], C0)
    p["b0_conv2_w"] = _conv_w(keys[2], 3, 3, C0, C0)
    p["b0_bn2"] = _bn_params(keys[3], C0)
    # branch 1: one BasicBlock
    p["b1_conv1_w"] = _conv_w(keys[4], 3, 3, C1, C1)
    p["b1_bn1"] = _bn_params(keys[5], C1)
    p["b1_conv2_w"] = _conv_w(keys[6], 3, 3, C1, C1)
    p["b1_bn2"] = _bn_params(keys[7], C1)
    # fuse_layers[0][1]: Conv1x1 (C1->C0) + BN + Upsample x2 (nearest)
    p["f01_w"] = _conv_w(keys[8], 1, 1, C1, C0)
    p["f01_bn"] = _bn_params(keys[9], C0)
    # fuse_layers[1][0]: Conv3x3 stride2 (C0->C1) + BN (no ReLU)
    p["f10_w"] = _conv_w(keys[10], 3, 3, C0, C1)
    p["f10_bn"] = _bn_params(keys[11], C1)
    return p


def _fold3x3(w_hwio, bn):
    # (3,3,Cin,Cout) HWIO + BN -> per-tap scale-folded (9, Cout, Cin) + (Cout,1)
    scale, shift = bn
    cin, cout = w_hwio.shape[2], w_hwio.shape[3]
    w = jnp.transpose(w_hwio, (0, 1, 3, 2)).reshape(9, cout, cin)
    w = w * scale[None, :, None]
    return w.astype(jnp.float32), shift.reshape(cout, 1).astype(jnp.float32)


def _fold1x1(w_hwio, bn):
    scale, shift = bn
    cout = w_hwio.shape[3]
    w = jnp.transpose(w_hwio[0, 0], (1, 0)) * scale[:, None]   # (Cout, Cin)
    return w.astype(jnp.float32), shift.reshape(cout, 1).astype(jnp.float32)


def _conv_masks(h, w, hw_pad):
    m = np.zeros((9, hw_pad), np.float32)
    for t, (dh, dw) in enumerate(_TAPS):
        for hh in range(h):
            for ww in range(w):
                if 0 <= hh + dh < h and 0 <= ww + dw < w:
                    m[t, hh * w + ww] = 1.0
    return m


def _upsample_matrix():
    # (HW1P, HW0): nearest x2, low-res (padded to 128 slots) -> hi-res 16x16
    u = np.zeros((HW1P, HW0), np.float32)
    for h in range(H0):
        for w in range(W0):
            u[(h // 2) * W1 + (w // 2), h * W0 + w] = 1.0
    return u


def _subsample_matrix():
    # (HW0, HW1P): select even (h, w) hi-res positions into low-res slots
    s = np.zeros((HW0, HW1P), np.float32)
    for ho in range(H1):
        for wo in range(W1):
            s[(2 * ho) * W0 + 2 * wo, ho * W1 + wo] = 1.0
    return s


def prepare_params(params):
    prep = {}
    prep["w_b0c1"], prep["b_b0c1"] = _fold3x3(params["b0_conv1_w"], params["b0_bn1"])
    prep["w_b0c2"], prep["b_b0c2"] = _fold3x3(params["b0_conv2_w"], params["b0_bn2"])
    prep["w_b1c1"], prep["b_b1c1"] = _fold3x3(params["b1_conv1_w"], params["b1_bn1"])
    prep["w_b1c2"], prep["b_b1c2"] = _fold3x3(params["b1_conv2_w"], params["b1_bn2"])
    prep["w_f01"], prep["b_f01"] = _fold1x1(params["f01_w"], params["f01_bn"])
    prep["w_f10"], prep["b_f10"] = _fold3x3(params["f10_w"], params["f10_bn"])
    prep["mask_hi"] = jnp.asarray(_conv_masks(H0, W0, HW0))
    prep["mask_lo"] = jnp.asarray(_conv_masks(H1, W1, HW1P))
    prep["up"] = jnp.asarray(_upsample_matrix())
    prep["sel"] = jnp.asarray(_subsample_matrix())
    return prep


# ---------------------------- pure-JAX reference ------------------------------

def _conv_ref(x, w, stride, pad):
    return lax.conv_general_dilated(
        x, w, (stride, stride), [(pad, pad), (pad, pad)],
        dimension_numbers=("NHWC", "HWIO", "NHWC"),
        precision=lax.Precision.HIGHEST)


def hr_module_forward_ref(params, x0, x1):
    def bn(x, sb):
        s, b = sb
        return x * s + b

    def block(x, w1, b1, w2, b2):
        out = jax.nn.relu(bn(_conv_ref(x, w1, 1, 1), b1))
        return jax.nn.relu(bn(_conv_ref(out, w2, 1, 1), b2) + x)

    xb0 = block(x0, params["b0_conv1_w"], params["b0_bn1"],
                params["b0_conv2_w"], params["b0_bn2"])
    xb1 = block(x1, params["b1_conv1_w"], params["b1_bn1"],
                params["b1_conv2_w"], params["b1_bn2"])
    t = bn(_conv_ref(xb1, params["f01_w"], 1, 0), params["f01_bn"])
    t_up = jnp.repeat(jnp.repeat(t, 2, axis=1), 2, axis=2)
    y0 = jax.nn.relu(xb0 + t_up)
    y1 = jax.nn.relu(bn(_conv_ref(xb0, params["f10_w"], 2, 1),
                        params["f10_bn"]) + xb1)
    return [y0, y1]


# ----------------------------------- main -------------------------------------

if __name__ == "__main__":
    key = jax.random.PRNGKey(0)
    kx0, kx1, kp = jax.random.split(key, 3)

    # PyTorch NCHW equivalents: x[0]=(2,4,16,16), x[1]=(2,8,8,8); here NHWC.
    x0 = jax.random.normal(kx0, (N_BATCH, H0, W0, C0), jnp.float32)
    x1 = jax.random.normal(kx1, (N_BATCH, H1, W1, C1), jnp.float32)

    params = init_params(kp)
    prep = prepare_params(params)

    fwd = jax.jit(hr_module_forward)
    outs = fwd(prep, x0, x1)
    outs = [jax.block_until_ready(o) for o in outs]

    refs = hr_module_forward_ref(params, x0, x1)
    assert outs[0].shape == (N_BATCH, H0, W0, C0)
    assert outs[1].shape == (N_BATCH, H1, W1, C1)
    for o, r in zip(outs, refs):
        err = float(jnp.max(jnp.abs(o - r)))
        if err > 5e-3:
            raise AssertionError(f"Pallas/reference mismatch: max abs err {err}")

    print("KERNEL_OK")
</pallas_src>

<mosaic_0001>
module attributes {stable_mosaic.version = 11 : i64} {
  func.func @_hr_module_kernel(%arg0: i32, %arg1: memref<1x4x256xf32, #tpu.memory_space<vmem>>, %arg2: memref<1x8x128xf32, #tpu.memory_space<vmem>>, %arg3: memref<9x4x4xf32, #tpu.memory_space<vmem>>, %arg4: memref<4x1xf32, #tpu.memory_space<vmem>>, %arg5: memref<9x4x4xf32, #tpu.memory_space<vmem>>, %arg6: memref<4x1xf32, #tpu.memory_space<vmem>>, %arg7: memref<9x8x8xf32, #tpu.memory_space<vmem>>, %arg8: memref<8x1xf32, #tpu.memory_space<vmem>>, %arg9: memref<9x8x8xf32, #tpu.memory_space<vmem>>, %arg10: memref<8x1xf32, #tpu.memory_space<vmem>>, %arg11: memref<4x8xf32, #tpu.memory_space<vmem>>, %arg12: memref<4x1xf32, #tpu.memory_space<vmem>>, %arg13: memref<9x8x4xf32, #tpu.memory_space<vmem>>, %arg14: memref<8x1xf32, #tpu.memory_space<vmem>>, %arg15: memref<9x256xf32, #tpu.memory_space<vmem>>, %arg16: memref<9x128xf32, #tpu.memory_space<vmem>>, %arg17: memref<128x256xf32, #tpu.memory_space<vmem>>, %arg18: memref<256x128xf32, #tpu.memory_space<vmem>>, %arg19: memref<1x4x256xf32, #tpu.memory_space<vmem>>, %arg20: memref<1x8x128xf32, #tpu.memory_space<vmem>>) attributes {dimension_semantics = [#tpu.dimension_semantics<parallel>], iteration_bounds = array<i64: 2>, scalar_prefetch = 0 : i64, scratch_operands = 0 : i64, tpu.core_type = #tpu.core_type<tc>, window_params = [{transform_indices = @transform_0, window_bounds = array<i64: 1, 4, 256>}, {transform_indices = @transform_1, window_bounds = array<i64: 1, 8, 128>}, {pipeline_mode = #tpu.pipeline_mode<synchronous>, transform_indices = @transform_2, window_bounds = array<i64: 9, 4, 4>}, {pipeline_mode = #tpu.pipeline_mode<synchronous>, transform_indices = @transform_3, window_bounds = array<i64: 4, 1>}, {pipeline_mode = #tpu.pipeline_mode<synchronous>, transform_indices = @transform_4, window_bounds = array<i64: 9, 4, 4>}, {pipeline_mode = #tpu.pipeline_mode<synchronous>, transform_indices = @transform_5, window_bounds = array<i64: 4, 1>}, {pipeline_mode = #tpu.pipeline_mode<synchronous>, transform_indices = @transform_6, window_bounds = array<i64: 9, 8, 8>}, {pipeline_mode = #tpu.pipeline_mode<synchronous>, transform_indices = @transform_7, window_bounds = array<i64: 8, 1>}, {pipeline_mode = #tpu.pipeline_mode<synchronous>, transform_indices = @transform_8, window_bounds = array<i64: 9, 8, 8>}, {pipeline_mode = #tpu.pipeline_mode<synchronous>, transform_indices = @transform_9, window_bounds = array<i64: 8, 1>}, {pipeline_mode = #tpu.pipeline_mode<synchronous>, transform_indices = @transform_10, window_bounds = array<i64: 4, 8>}, {pipeline_mode = #tpu.pipeline_mode<synchronous>, transform_indices = @transform_11, window_bounds = array<i64: 4, 1>}, {pipeline_mode = #tpu.pipeline_mode<synchronous>, transform_indices = @transform_12, window_bounds = array<i64: 9, 8, 4>}, {pipeline_mode = #tpu.pipeline_mode<synchronous>, transform_indices = @transform_13, window_bounds = array<i64: 8, 1>}, {pipeline_mode = #tpu.pipeline_mode<synchronous>, transform_indices = @transform_14, window_bounds = array<i64: 9, 256>}, {pipeline_mode = #tpu.pipeline_mode<synchronous>, transform_indices = @transform_15, window_bounds = array<i64: 9, 128>}, {pipeline_mode = #tpu.pipeline_mode<synchronous>, transform_indices = @transform_16, window_bounds = array<i64: 128, 256>}, {pipeline_mode = #tpu.pipeline_mode<synchronous>, transform_indices = @transform_17, window_bounds = array<i64: 256, 128>}, {transform_indices = @transform_18, window_bounds = array<i64: 1, 4, 256>}, {transform_indices = @transform_19, window_bounds = array<i64: 1, 8, 128>}]} {
    %c0 = arith.constant 0 : index
    %c0_0 = arith.constant 0 : index
    %c0_1 = arith.constant 0 : index
    %0 = vector.load %arg1[%c0, %c0_0, %c0_1] : memref<1x4x256xf32, #tpu.memory_space<vmem>>, vector<1x4x256xf32>
    %1 = vector.shape_cast %0 : vector<1x4x256xf32> to vector<4x256xf32>
    %c0_2 = arith.constant 0 : index
    %c0_3 = arith.constant 0 : index
    %c0_4 = arith.constant 0 : index
    %2 = vector.load %arg2[%c0_2, %c0_3, %c0_4] : memref<1x8x128xf32, #tpu.memory_space<vmem>>, vector<1x8x128xf32>
    %3 = vector.shape_cast %2 : vector<1x8x128xf32> to vector<8x128xf32>
    %cst = arith.constant 0.000000e+00 : f32
    %4 = vector.broadcast %cst : f32 to vector<4x256xf32>
    %c17_i32 = arith.constant 17 : i32
    %5 = tpu.dynamic_rotate %1 by %c17_i32 dim 1 : vector<4x256xf32>, i32 -> vector<4x256xf32>
    %c0_5 = arith.constant 0 : index
    %c0_6 = arith.constant 0 : index
    %6 = vector.load %arg15[%c0_5, %c0_6] : memref<9x256xf32, #tpu.memory_space<vmem>>, vector<1x256xf32>
    %7 = vector.broadcast %6 : vector<1x256xf32> to vector<4x256xf32>
    %8 = arith.mulf %5, %7 : vector<4x256xf32>
    %c0_7 = arith.constant 0 : index
    %c0_8 = arith.constant 0 : index
    %c0_9 = arith.constant 0 : index
    %9 = vector.load %arg3[%c0_7, %c0_8, %c0_9] : memref<9x4x4xf32, #tpu.memory_space<vmem>>, vector<1x4x4xf32>
    %10 = vector.shape_cast %9 : vector<1x4x4xf32> to vector<4x4xf32>
    %cst_10 = arith.constant dense<0.000000e+00> : vector<4x256xf32>
    %11 = tpu.matmul %10, %8, %cst_10 {dimension_numbers = #tpu.dot_dimension_numbers<[1], [0], [0], [1], [0, 0, 1, 1], [], []>} : vector<4x4xf32>, vector<4x256xf32>, vector<4x256xf32> -> vector<4x256xf32>
    %12 = arith.addf %4, %11 : vector<4x256xf32>
    %c16_i32 = arith.constant 16 : i32
    %13 = tpu.dynamic_rotate %1 by %c16_i32 dim 1 : vector<4x256xf32>, i32 -> vector<4x256xf32>
    %c1 = arith.constant 1 : index
    %c0_11 = arith.constant 0 : index
    %14 = vector.load %arg15[%c1, %c0_11] : memref<9x256xf32, #tpu.memory_space<vmem>>, vector<1x256xf32>
    %15 = vector.broadcast %14 : vector<1x256xf32> to vector<4x256xf32>
    %16 = arith.mulf %13, %15 : vector<4x256xf32>
    %c1_12 = arith.constant 1 : index
    %c0_13 = arith.constant 0 : index
    %c0_14 = arith.constant 0 : index
    %17 = vector.load %arg3[%c1_12, %c0_13, %c0_14] : memref<9x4x4xf32, #tpu.memory_space<vmem>>, vector<1x4x4xf32>
    %18 = vector.shape_cast %17 : vector<1x4x4xf32> to vector<4x4xf32>
    %cst_15 = arith.constant dense<0.000000e+00> : vector<4x256xf32>
    %19 = tpu.matmul %18, %16, %cst_15 {dimension_numbers = #tpu.dot_dimension_numbers<[1], [0], [0], [1], [0, 0, 1, 1], [], []>} : vector<4x4xf32>, vector<4x256xf32>, vector<4x256xf32> -> vector<4x256xf32>
    %20 = arith.addf %12, %19 : vector<4x256xf32>
    %c15_i32 = arith.constant 15 : i32
    %21 = tpu.dynamic_rotate %1 by %c15_i32 dim 1 : vector<4x256xf32>, i32 -> vector<4x256xf32>
    %c2 = arith.constant 2 : index
    %c0_16 = arith.constant 0 : index
    %22 = vector.load %arg15[%c2, %c0_16] : memref<9x256xf32, #tpu.memory_space<vmem>>, vector<1x256xf32>
    %23 = vector.broadcast %22 : vector<1x256xf32> to vector<4x256xf32>
    %24 = arith.mulf %21, %23 : vector<4x256xf32>
    %c2_17 = arith.constant 2 : index
    %c0_18 = arith.constant 0 : index
    %c0_19 = arith.constant 0 : index
    %25 = vector.load %arg3[%c2_17, %c0_18, %c0_19] : memref<9x4x4xf32, #tpu.memory_space<vmem>>, vector<1x4x4xf32>
    %26 = vector.shape_cast %25 : vector<1x4x4xf32> to vector<4x4xf32>
    %cst_20 = arith.constant dense<0.000000e+00> : vector<4x256xf32>
    %27 = tpu.matmul %26, %24, %cst_20 {dimension_numbers = #tpu.dot_dimension_numbers<[1], [0], [0], [1], [0, 0, 1, 1], [], []>} : vector<4x4xf32>, vector<4x256xf32>, vector<4x256xf32> -> vector<4x256xf32>
    %28 = arith.addf %20, %27 : vector<4x256xf32>
    %c1_i32 = arith.constant 1 : i32
    %29 = tpu.dynamic_rotate %1 by %c1_i32 dim 1 : vector<4x256xf32>, i32 -> vector<4x256xf32>
    %c3 = arith.constant 3 : index
    %c0_21 = arith.constant 0 : index
    %30 = vector.load %arg15[%c3, %c0_21] : memref<9x256xf32, #tpu.memory_space<vmem>>, vector<1x256xf32>
    %31 = vector.broadcast %30 : vector<1x256xf32> to vector<4x256xf32>
    %32 = arith.mulf %29, %31 : vector<4x256xf32>
    %c3_22 = arith.constant 3 : index
    %c0_23 = arith.constant 0 : index
    %c0_24 = arith.constant 0 : index
    %33 = vector.load %arg3[%c3_22, %c0_23, %c0_24] : memref<9x4x4xf32, #tpu.memory_space<vmem>>, vector<1x4x4xf32>
    %34 = vector.shape_cast %33 : vector<1x4x4xf32> to vector<4x4xf32>
    %cst_25 = arith.constant dense<0.000000e+00> : vector<4x256xf32>
    %35 = tpu.matmul %34, %32, %cst_25 {dimension_numbers = #tpu.dot_dimension_numbers<[1], [0], [0], [1], [0, 0, 1, 1], [], []>} : vector<4x4xf32>, vector<4x256xf32>, vector<4x256xf32> -> vector<4x256xf32>
    %36 = arith.addf %28, %35 : vector<4x256xf32>
    %c4 = arith.constant 4 : index
    %c0_26 = arith.constant 0 : index
    %37 = vector.load %arg15[%c4, %c0_26] : memref<9x256xf32, #tpu.memory_space<vmem>>, vector<1x256xf32>
    %38 = vector.broadcast %37 : vector<1x256xf32> to vector<4x256xf32>
    %39 = arith.mulf %1, %38 : vector<4x256xf32>
    %c4_27 = arith.constant 4 : index
    %c0_28 = arith.constant 0 : index
    %c0_29 = arith.constant 0 : index
    %40 = vector.load %arg3[%c4_27, %c0_28, %c0_29] : memref<9x4x4xf32, #tpu.memory_space<vmem>>, vector<1x4x4xf32>
    %41 = vector.shape_cast %40 : vector<1x4x4xf32> to vector<4x4xf32>
    %cst_30 = arith.constant dense<0.000000e+00> : vector<4x256xf32>
    %42 = tpu.matmul %41, %39, %cst_30 {dimension_numbers = #tpu.dot_dimension_numbers<[1], [0], [0], [1], [0, 0, 1, 1], [], []>} : vector<4x4xf32>, vector<4x256xf32>, vector<4x256xf32> -> vector<4x256xf32>
    %43 = arith.addf %36, %42 : vector<4x256xf32>
    %c255_i32 = arith.constant 255 : i32
    %44 = tpu.dynamic_rotate %1 by %c255_i32 dim 1 : vector<4x256xf32>, i32 -> vector<4x256xf32>
    %c5 = arith.constant 5 : index
    %c0_31 = arith.constant 0 : index
    %45 = vector.load %arg15[%c5, %c0_31] : memref<9x256xf32, #tpu.memory_space<vmem>>, vector<1x256xf32>
    %46 = vector.broadcast %45 : vector<1x256xf32> to vector<4x256xf32>
    %47 = arith.mulf %44, %46 : vector<4x256xf32>
    %c5_32 = arith.constant 5 : index
    %c0_33 = arith.constant 0 : index
    %c0_34 = arith.constant 0 : index
    %48 = vector.load %arg3[%c5_32, %c0_33, %c0_34] : memref<9x4x4xf32, #tpu.memory_space<vmem>>, vector<1x4x4xf32>
    %49 = vector.shape_cast %48 : vector<1x4x4xf32> to vector<4x4xf32>
    %cst_35 = arith.constant dense<0.000000e+00> : vector<4x256xf32>
    %50 = tpu.matmul %49, %47, %cst_35 {dimension_numbers = #tpu.dot_dimension_numbers<[1], [0], [0], [1], [0, 0, 1, 1], [], []>} : vector<4x4xf32>, vector<4x256xf32>, vector<4x256xf32> -> vector<4x256xf32>
    %51 = arith.addf %43, %50 : vector<4x256xf32>
    %c241_i32 = arith.constant 241 : i32
    %52 = tpu.dynamic_rotate %1 by %c241_i32 dim 1 : vector<4x256xf32>, i32 -> vector<4x256xf32>
    %c6 = arith.constant 6 : index
    %c0_36 = arith.constant 0 : index
    %53 = vector.load %arg15[%c6, %c0_36] : memref<9x256xf32, #tpu.memory_space<vmem>>, vector<1x256xf32>
    %54 = vector.broadcast %53 : vector<1x256xf32> to vector<4x256xf32>
    %55 = arith.mulf %52, %54 : vector<4x256xf32>
    %c6_37 = arith.constant 6 : index
    %c0_38 = arith.constant 0 : index
    %c0_39 = arith.constant 0 : index
    %56 = vector.load %arg3[%c6_37, %c0_38, %c0_39] : memref<9x4x4xf32, #tpu.memory_space<vmem>>, vector<1x4x4xf32>
    %57 = vector.shape_cast %56 : vector<1x4x4xf32> to vector<4x4xf32>
    %cst_40 = arith.constant dense<0.000000e+00> : vector<4x256xf32>
    %58 = tpu.matmul %57, %55, %cst_40 {dimension_numbers = #tpu.dot_dimension_numbers<[1], [0], [0], [1], [0, 0, 1, 1], [], []>} : vector<4x4xf32>, vector<4x256xf32>, vector<4x256xf32> -> vector<4x256xf32>
    %59 = arith.addf %51, %58 : vector<4x256xf32>
    %c240_i32 = arith.constant 240 : i32
    %60 = tpu.dynamic_rotate %1 by %c240_i32 dim 1 : vector<4x256xf32>, i32 -> vector<4x256xf32>
    %c7 = arith.constant 7 : index
    %c0_41 = arith.constant 0 : index
    %61 = vector.load %arg15[%c7, %c0_41] : memref<9x256xf32, #tpu.memory_space<vmem>>, vector<1x256xf32>
    %62 = vector.broadcast %61 : vector<1x256xf32> to vector<4x256xf32>
    %63 = arith.mulf %60, %62 : vector<4x256xf32>
    %c7_42 = arith.constant 7 : index
    %c0_43 = arith.constant 0 : index
    %c0_44 = arith.constant 0 : index
    %64 = vector.load %arg3[%c7_42, %c0_43, %c0_44] : memref<9x4x4xf32, #tpu.memory_space<vmem>>, vector<1x4x4xf32>
    %65 = vector.shape_cast %64 : vector<1x4x4xf32> to vector<4x4xf32>
    %cst_45 = arith.constant dense<0.000000e+00> : vector<4x256xf32>
    %66 = tpu.matmul %65, %63, %cst_45 {dimension_numbers = #tpu.dot_dimension_numbers<[1], [0], [0], [1], [0, 0, 1, 1], [], []>} : vector<4x4xf32>, vector<4x256xf32>, vector<4x256xf32> -> vector<4x256xf32>
    %67 = arith.addf %59, %66 : vector<4x256xf32>
    %c239_i32 = arith.constant 239 : i32
    %68 = tpu.dynamic_rotate %1 by %c239_i32 dim 1 : vector<4x256xf32>, i32 -> vector<4x256xf32>
    %c8 = arith.constant 8 : index
    %c0_46 = arith.constant 0 : index
    %69 = vector.load %arg15[%c8, %c0_46] : memref<9x256xf32, #tpu.memory_space<vmem>>, vector<1x256xf32>
    %70 = vector.broadcast %69 : vector<1x256xf32> to vector<4x256xf32>
    %71 = arith.mulf %68, %70 : vector<4x256xf32>
    %c8_47 = arith.constant 8 : index
    %c0_48 = arith.constant 0 : index
    %c0_49 = arith.constant 0 : index
    %72 = vector.load %arg3[%c8_47, %c0_48, %c0_49] : memref<9x4x4xf32, #tpu.memory_space<vmem>>, vector<1x4x4xf32>
    %73 = vector.shape_cast %72 : vector<1x4x4xf32> to vector<4x4xf32>
    %cst_50 = arith.constant dense<0.000000e+00> : vector<4x256xf32>
    %74 = tpu.matmul %73, %71, %cst_50 {dimension_numbers = #tpu.dot_dimension_numbers<[1], [0], [0], [1], [0, 0, 1, 1], [], []>} : vector<4x4xf32>, vector<4x256xf32>, vector<4x256xf32> -> vector<4x256xf32>
    %75 = arith.addf %67, %74 : vector<4x256xf32>
    %c0_51 = arith.constant 0 : index
    %c0_52 = arith.constant 0 : index
    %76 = vector.load %arg4[%c0_51, %c0_52] : memref<4x1xf32, #tpu.memory_space<vmem>>, vector<4x1xf32>
    %77 = vector.broadcast %76 : vector<4x1xf32> to vector<4x256xf32>
    %78 = arith.addf %75, %77 : vector<4x256xf32>
    %cst_53 = arith.constant 0.000000e+00 : f32
    %79 = vector.broadcast %cst_53 : f32 to vector<4x256xf32>
    %80 = arith.maximumf %78, %79 : vector<4x256xf32>
    %cst_54 = arith.constant 0.000000e+00 : f32
    %81 = vector.broadcast %cst_54 : f32 to vector<4x256xf32>
    %c17_i32_55 = arith.constant 17 : i32
    %82 = tpu.dynamic_rotate %80 by %c17_i32_55 dim 1 : vector<4x256xf32>, i32 -> vector<4x256xf32>
    %c0_56 = arith.constant 0 : index
    %c0_57 = arith.constant 0 : index
    %83 = vector.load %arg15[%c0_56, %c0_57] : memref<9x256xf32, #tpu.memory_space<vmem>>, vector<1x256xf32>
    %84 = vector.broadcast %83 : vector<1x256xf32> to vector<4x256xf32>
    %85 = arith.mulf %82, %84 : vector<4x256xf32>
    %c0_58 = arith.constant 0 : index
    %c0_59 = arith.constant 0 : index
    %c0_60 = arith.constant 0 : index
    %86 = vector.load %arg5[%c0_58, %c0_59, %c0_60] : memref<9x4x4xf32, #tpu.memory_space<vmem>>, vector<1x4x4xf32>
    %87 = vector.shape_cast %86 : vector<1x4x4xf32> to vector<4x4xf32>
    %cst_61 = arith.constant dense<0.000000e+00> : vector<4x256xf32>
    %88 = tpu.matmul %87, %85, %cst_61 {dimension_numbers = #tpu.dot_dimension_numbers<[1], [0], [0], [1], [0, 0, 1, 1], [], []>} : vector<4x4xf32>, vector<4x256xf32>, vector<4x256xf32> -> vector<4x256xf32>
    %89 = arith.addf %81, %88 : vector<4x256xf32>
    %c16_i32_62 = arith.constant 16 : i32
    %90 = tpu.dynamic_rotate %80 by %c16_i32_62 dim 1 : vector<4x256xf32>, i32 -> vector<4x256xf32>
    %c1_63 = arith.constant 1 : index
    %c0_64 = arith.constant 0 : index
    %91 = vector.load %arg15[%c1_63, %c0_64] : memref<9x256xf32, #tpu.memory_space<vmem>>, vector<1x256xf32>
    %92 = vector.broadcast %91 : vector<1x256xf32> to vector<4x256xf32>
    %93 = arith.mulf %90, %92 : vector<4x256xf32>
    %c1_65 = arith.constant 1 : index
    %c0_66 = arith.constant 0 : index
    %c0_67 = arith.constant 0 : index
    %94 = vector.load %arg5[%c1_65, %c0_66, %c0_67] : memref<9x4x4xf32, #tpu.memory_space<vmem>>, vector<1x4x4xf32>
    %95 = vector.shape_cast %94 : vector<1x4x4xf32> to vector<4x4xf32>
    %cst_68 = arith.constant dense<0.000000e+00> : vector<4x256xf32>
    %96 = tpu.matmul %95, %93, %cst_68 {dimension_numbers = #tpu.dot_dimension_numbers<[1], [0], [0], [1], [0, 0, 1, 1], [], []>} : vector<4x4xf32>, vector<4x256xf32>, vector<4x256xf32> -> vector<4x256xf32>
    %97 = arith.addf %89, %96 : vector<4x256xf32>
    %c15_i32_69 = arith.constant 15 : i32
    %98 = tpu.dynamic_rotate %80 by %c15_i32_69 dim 1 : vector<4x256xf32>, i32 -> vector<4x256xf32>
    %c2_70 = arith.constant 2 : index
    %c0_71 = arith.constant 0 : index
    %99 = vector.load %arg15[%c2_70, %c0_71] : memref<9x256xf32, #tpu.memory_space<vmem>>, vector<1x256xf32>
    %100 = vector.broadcast %99 : vector<1x256xf32> to vector<4x256xf32>
    %101 = arith.mulf %98, %100 : vector<4x256xf32>
    %c2_72 = arith.constant 2 : index
    %c0_73 = arith.constant 0 : index
    %c0_74 = arith.constant 0 : index
    %102 = vector.load %arg5[%c2_72, %c0_73, %c0_74] : memref<9x4x4xf32, #tpu.memory_space<vmem>>, vector<1x4x4xf32>
    %103 = vector.shape_cast %102 : vector<1x4x4xf32> to vector<4x4xf32>
    %cst_75 = arith.constant dense<0.000000e+00> : vector<4x256xf32>
    %104 = tpu.matmul %103, %101, %cst_75 {dimension_numbers = #tpu.dot_dimension_numbers<[1], [0], [0], [1], [0, 0, 1, 1], [], []>} : vector<4x4xf32>, vector<4x256xf32>, vector<4x256xf32> -> vector<4x256xf32>
    %105 = arith.addf %97, %104 : vector<4x256xf32>
    %c1_i32_76 = arith.constant 1 : i32
    %106 = tpu.dynamic_rotate %80 by %c1_i32_76 dim 1 : vector<4x256xf32>, i32 -> vector<4x256xf32>
    %c3_77 = arith.constant 3 : index
    %c0_78 = arith.constant 0 : index
    %107 = vector.load %arg15[%c3_77, %c0_78] : memref<9x256xf32, #tpu.memory_space<vmem>>, vector<1x256xf32>
    %108 = vector.broadcast %107 : vector<1x256xf32> to vector<4x256xf32>
    %109 = arith.mulf %106, %108 : vector<4x256xf32>
    %c3_79 = arith.constant 3 : index
    %c0_80 = arith.constant 0 : index
    %c0_81 = arith.constant 0 : index
    %110 = vector.load %arg5[%c3_79, %c0_80, %c0_81] : memref<9x4x4xf32, #tpu.memory_space<vmem>>, vector<1x4x4xf32>
    %111 = vector.shape_cast %110 : vector<1x4x4xf32> to vector<4x4xf32>
    %cst_82 = arith.constant dense<0.000000e+00> : vector<4x256xf32>
    %112 = tpu.matmul %111, %109, %cst_82 {dimension_numbers = #tpu.dot_dimension_numbers<[1], [0], [0], [1], [0, 0, 1, 1], [], []>} : vector<4x4xf32>, vector<4x256xf32>, vector<4x256xf32> -> vector<4x256xf32>
    %113 = arith.addf %105, %112 : vector<4x256xf32>
    %c4_83 = arith.constant 4 : index
    %c0_84 = arith.constant 0 : index
    %114 = vector.load %arg15[%c4_83, %c0_84] : memref<9x256xf32, #tpu.memory_space<vmem>>, vector<1x256xf32>
    %115 = vector.broadcast %114 : vector<1x256xf32> to vector<4x256xf32>
    %116 = arith.mulf %80, %115 : vector<4x256xf32>
    %c4_85 = arith.constant 4 : index
    %c0_86 = arith.constant 0 : index
    %c0_87 = arith.constant 0 : index
    %117 = vector.load %arg5[%c4_85, %c0_86, %c0_87] : memref<9x4x4xf32, #tpu.memory_space<vmem>>, vector<1x4x4xf32>
    %118 = vector.shape_cast %117 : vector<1x4x4xf32> to vector<4x4xf32>
    %cst_88 = arith.constant dense<0.000000e+00> : vector<4x256xf32>
    %119 = tpu.matmul %118, %116, %cst_88 {dimension_numbers = #tpu.dot_dimension_numbers<[1], [0], [0], [1], [0, 0, 1, 1], [], []>} : vector<4x4xf32>, vector<4x256xf32>, vector<4x256xf32> -> vector<4x256xf32>
    %120 = arith.addf %113, %119 : vector<4x256xf32>
    %c255_i32_89 = arith.constant 255 : i32
    %121 = tpu.dynamic_rotate %80 by %c255_i32_89 dim 1 : vector<4x256xf32>, i32 -> vector<4x256xf32>
    %c5_90 = arith.constant 5 : index
    %c0_91 = arith.constant 0 : index
    %122 = vector.load %arg15[%c5_90, %c0_91] : memref<9x256xf32, #tpu.memory_space<vmem>>, vector<1x256xf32>
    %123 = vector.broadcast %122 : vector<1x256xf32> to vector<4x256xf32>
    %124 = arith.mulf %121, %123 : vector<4x256xf32>
    %c5_92 = arith.constant 5 : index
    %c0_93 = arith.constant 0 : index
    %c0_94 = arith.constant 0 : index
    %125 = vector.load %arg5[%c5_92, %c0_93, %c0_94] : memref<9x4x4xf32, #tpu.memory_space<vmem>>, vector<1x4x4xf32>
    %126 = vector.shape_cast %125 : vector<1x4x4xf32> to vector<4x4xf32>
    %cst_95 = arith.constant dense<0.000000e+00> : vector<4x256xf32>
    %127 = tpu.matmul %126, %124, %cst_95 {dimension_numbers = #tpu.dot_dimension_numbers<[1], [0], [0], [1], [0, 0, 1, 1], [], []>} : vector<4x4xf32>, vector<4x256xf32>, vector<4x256xf32> -> vector<4x256xf32>
    %128 = arith.addf %120, %127 : vector<4x256xf32>
    %c241_i32_96 = arith.constant 241 : i32
    %129 = tpu.dynamic_rotate %80 by %c241_i32_96 dim 1 : vector<4x256xf32>, i32 -> vector<4x256xf32>
    %c6_97 = arith.constant 6 : index
    %c0_98 = arith.constant 0 : index
    %130 = vector.load %arg15[%c6_97, %c0_98] : memref<9x256xf32, #tpu.memory_space<vmem>>, vector<1x256xf32>
    %131 = vector.broadcast %130 : vector<1x256xf32> to vector<4x256xf32>
    %132 = arith.mulf %129, %131 : vector<4x256xf32>
    %c6_99 = arith.constant 6 : index
    %c0_100 = arith.constant 0 : index
    %c0_101 = arith.constant 0 : index
    %133 = vector.load %arg5[%c6_99, %c0_100, %c0_101] : memref<9x4x4xf32, #tpu.memory_space<vmem>>, vector<1x4x4xf32>
    %134 = vector.shape_cast %133 : vector<1x4x4xf32> to vector<4x4xf32>
    %cst_102 = arith.constant dense<0.000000e+00> : vector<4x256xf32>
    %135 = tpu.matmul %134, %132, %cst_102 {dimension_numbers = #tpu.dot_dimension_numbers<[1], [0], [0], [1], [0, 0, 1, 1], [], []>} : vector<4x4xf32>, vector<4x256xf32>, vector<4x256xf32> -> vector<4x256xf32>
    %136 = arith.addf %128, %135 : vector<4x256xf32>
    %c240_i32_103 = arith.constant 240 : i32
    %137 = tpu.dynamic_rotate %80 by %c240_i32_103 dim 1 : vector<4x256xf32>, i32 -> vector<4x256xf32>
    %c7_104 = arith.constant 7 : index
    %c0_105 = arith.constant 0 : index
    %138 = vector.load %arg15[%c7_104, %c0_105] : memref<9x256xf32, #tpu.memory_space<vmem>>, vector<1x256xf32>
    %139 = vector.broadcast %138 : vector<1x256xf32> to vector<4x256xf32>
    %140 = arith.mulf %137, %139 : vector<4x256xf32>
    %c7_106 = arith.constant 7 : index
    %c0_107 = arith.constant 0 : index
    %c0_108 = arith.constant 0 : index
    %141 = vector.load %arg5[%c7_106, %c0_107, %c0_108] : memref<9x4x4xf32, #tpu.memory_space<vmem>>, vector<1x4x4xf32>
    %142 = vector.shape_cast %141 : vector<1x4x4xf32> to vector<4x4xf32>
    %cst_109 = arith.constant dense<0.000000e+00> : vector<4x256xf32>
    %143 = tpu.matmul %142, %140, %cst_109 {dimension_numbers = #tpu.dot_dimension_numbers<[1], [0], [0], [1], [0, 0, 1, 1], [], []>} : vector<4x4xf32>, vector<4x256xf32>, vector<4x256xf32> -> vector<4x256xf32>
    %144 = arith.addf %136, %143 : vector<4x256xf32>
    %c239_i32_110 = arith.constant 239 : i32
    %145 = tpu.dynamic_rotate %80 by %c239_i32_110 dim 1 : vector<4x256xf32>, i32 -> vector<4x256xf32>
    %c8_111 = arith.constant 8 : index
    %c0_112 = arith.constant 0 : index
    %146 = vector.load %arg15[%c8_111, %c0_112] : memref<9x256xf32, #tpu.memory_space<vmem>>, vector<1x256xf32>
    %147 = vector.broadcast %146 : vector<1x256xf32> to vector<4x256xf32>
    %148 = arith.mulf %145, %147 : vector<4x256xf32>
    %c8_113 = arith.constant 8 : index
    %c0_114 = arith.constant 0 : index
    %c0_115 = arith.constant 0 : index
    %149 = vector.load %arg5[%c8_113, %c0_114, %c0_115] : memref<9x4x4xf32, #tpu.memory_space<vmem>>, vector<1x4x4xf32>
    %150 = vector.shape_cast %149 : vector<1x4x4xf32> to vector<4x4xf32>
    %cst_116 = arith.constant dense<0.000000e+00> : vector<4x256xf32>
    %151 = tpu.matmul %150, %148, %cst_116 {dimension_numbers = #tpu.dot_dimension_numbers<[1], [0], [0], [1], [0, 0, 1, 1], [], []>} : vector<4x4xf32>, vector<4x256xf32>, vector<4x256xf32> -> vector<4x256xf32>
    %152 = arith.addf %144, %151 : vector<4x256xf32>
    %c0_117 = arith.constant 0 : index
    %c0_118 = arith.constant 0 : index
    %153 = vector.load %arg6[%c0_117, %c0_118] : memref<4x1xf32, #tpu.memory_space<vmem>>, vector<4x1xf32>
    %154 = vector.broadcast %153 : vector<4x1xf32> to vector<4x256xf32>
    %155 = arith.addf %152, %154 : vector<4x256xf32>
    %156 = arith.addf %155, %1 : vector<4x256xf32>
    %cst_119 = arith.constant 0.000000e+00 : f32
    %157 = vector.broadcast %cst_119 : f32 to vector<4x256xf32>
    %158 = arith.maximumf %156, %157 : vector<4x256xf32>
    %cst_120 = arith.constant 0.000000e+00 : f32
    %159 = vector.broadcast %cst_120 : f32 to vector<8x128xf32>
    %c9_i32 = arith.constant 9 : i32
    %160 = tpu.dynamic_rotate %3 by %c9_i32 dim 1 : vector<8x128xf32>, i32 -> vector<8x128xf32>
    %c0_121 = arith.constant 0 : index
    %c0_122 = arith.constant 0 : index
    %161 = vector.load %arg16[%c0_121, %c0_122] : memref<9x128xf32, #tpu.memory_space<vmem>>, vector<1x128xf32>
    %162 = vector.broadcast %161 : vector<1x128xf32> to vector<8x128xf32>
    %163 = arith.mulf %160, %162 : vector<8x128xf32>
    %c0_123 = arith.constant 0 : index
    %c0_124 = arith.constant 0 : index
    %c0_125 = arith.constant 0 : index
    %164 = vector.load %arg7[%c0_123, %c0_124, %c0_125] : memref<9x8x8xf32, #tpu.memory_space<vmem>>, vector<1x8x8xf32>
    %165 = vector.shape_cast %164 : vector<1x8x8xf32> to vector<8x8xf32>
    %cst_126 = arith.constant dense<0.000000e+00> : vector<8x128xf32>
    %166 = tpu.matmul %165, %163, %cst_126 {dimension_numbers = #tpu.dot_dimension_numbers<[1], [0], [0], [1], [0, 0, 1, 1], [], []>} : vector<8x8xf32>, vector<8x128xf32>, vector<8x128xf32> -> vector<8x128xf32>
    %167 = arith.addf %159, %166 : vector<8x128xf32>
    %c8_i32 = arith.constant 8 : i32
    %168 = tpu.dynamic_rotate %3 by %c8_i32 dim 1 : vector<8x128xf32>, i32 -> vector<8x128xf32>
    %c1_127 = arith.constant 1 : index
    %c0_128 = arith.constant 0 : index
    %169 = vector.load %arg16[%c1_127, %c0_128] : memref<9x128xf32, #tpu.memory_space<vmem>>, vector<1x128xf32>
    %170 = vector.broadcast %169 : vector<1x128xf32> to vector<8x128xf32>
    %171 = arith.mulf %168, %170 : vector<8x128xf32>
    %c1_129 = arith.constant 1 : index
    %c0_130 = arith.constant 0 : index
    %c0_131 = arith.constant 0 : index
    %172 = vector.load %arg7[%c1_129, %c0_130, %c0_131] : memref<9x8x8xf32, #tpu.memory_space<vmem>>, vector<1x8x8xf32>
    %173 = vector.shape_cast %172 : vector<1x8x8xf32> to vector<8x8xf32>
    %cst_132 = arith.constant dense<0.000000e+00> : vector<8x128xf32>
    %174 = tpu.matmul %173, %171, %cst_132 {dimension_numbers = #tpu.dot_dimension_numbers<[1], [0], [0], [1], [0, 0, 1, 1], [], []>} : vector<8x8xf32>, vector<8x128xf32>, vector<8x128xf32> -> vector<8x128xf32>
    %175 = arith.addf %167, %174 : vector<8x128xf32>
    %c7_i32 = arith.constant 7 : i32
    %176 = tpu.dynamic_rotate %3 by %c7_i32 dim 1 : vector<8x128xf32>, i32 -> vector<8x128xf32>
    %c2_133 = arith.constant 2 : index
    %c0_134 = arith.constant 0 : index
    %177 = vector.load %arg16[%c2_133, %c0_134] : memref<9x128xf32, #tpu.memory_space<vmem>>, vector<1x128xf32>
    %178 = vector.broadcast %177 : vector<1x128xf32> to vector<8x128xf32>
    %179 = arith.mulf %176, %178 : vector<8x128xf32>
    %c2_135 = arith.constant 2 : index
    %c0_136 = arith.constant 0 : index
    %c0_137 = arith.constant 0 : index
    %180 = vector.load %arg7[%c2_135, %c0_136, %c0_137] : memref<9x8x8xf32, #tpu.memory_space<vmem>>, vector<1x8x8xf32>
    %181 = vector.shape_cast %180 : vector<1x8x8xf32> to vector<8x8xf32>
    %cst_138 = arith.constant dense<0.000000e+00> : vector<8x128xf32>
    %182 = tpu.matmul %181, %179, %cst_138 {dimension_numbers = #tpu.dot_dimension_numbers<[1], [0], [0], [1], [0, 0, 1, 1], [], []>} : vector<8x8xf32>, vector<8x128xf32>, vector<8x128xf32> -> vector<8x128xf32>
    %183 = arith.addf %175, %182 : vector<8x128xf32>
    %c1_i32_139 = arith.constant 1 : i32
    %184 = tpu.dynamic_rotate %3 by %c1_i32_139 dim 1 : vector<8x128xf32>, i32 -> vector<8x128xf32>
    %c3_140 = arith.constant 3 : index
    %c0_141 = arith.constant 0 : index
    %185 = vector.load %arg16[%c3_140, %c0_141] : memref<9x128xf32, #tpu.memory_space<vmem>>, vector<1x128xf32>
    %186 = vector.broadcast %185 : vector<1x128xf32> to vector<8x128xf32>
    %187 = arith.mulf %184, %186 : vector<8x128xf32>
    %c3_142 = arith.constant 3 : index
    %c0_143 = arith.constant 0 : index
    %c0_144 = arith.constant 0 : index
    %188 = vector.load %arg7[%c3_142, %c0_143, %c0_144] : memref<9x8x8xf32, #tpu.memory_space<vmem>>, vector<1x8x8xf32>
    %189 = vector.shape_cast %188 : vector<1x8x8xf32> to vector<8x8xf32>
    %cst_145 = arith.constant dense<0.000000e+00> : vector<8x128xf32>
    %190 = tpu.matmul %189, %187, %cst_145 {dimension_numbers = #tpu.dot_dimension_numbers<[1], [0], [0], [1], [0, 0, 1, 1], [], []>} : vector<8x8xf32>, vector<8x128xf32>, vector<8x128xf32> -> vector<8x128xf32>
    %191 = arith.addf %183, %190 : vector<8x128xf32>
    %c4_146 = arith.constant 4 : index
    %c0_147 = arith.constant 0 : index
    %192 = vector.load %arg16[%c4_146, %c0_147] : memref<9x128xf32, #tpu.memory_space<vmem>>, vector<1x128xf32>
    %193 = vector.broadcast %192 : vector<1x128xf32> to vector<8x128xf32>
    %194 = arith.mulf %3, %193 : vector<8x128xf32>
    %c4_148 = arith.constant 4 : index
    %c0_149 = arith.constant 0 : index
    %c0_150 = arith.constant 0 : index
    %195 = vector.load %arg7[%c4_148, %c0_149, %c0_150] : memref<9x8x8xf32, #tpu.memory_space<vmem>>, vector<1x8x8xf32>
    %196 = vector.shape_cast %195 : vector<1x8x8xf32> to vector<8x8xf32>
    %cst_151 = arith.constant dense<0.000000e+00> : vector<8x128xf32>
    %197 = tpu.matmul %196, %194, %cst_151 {dimension_numbers = #tpu.dot_dimension_numbers<[1], [0], [0], [1], [0, 0, 1, 1], [], []>} : vector<8x8xf32>, vector<8x128xf32>, vector<8x128xf32> -> vector<8x128xf32>
    %198 = arith.addf %191, %197 : vector<8x128xf32>
    %c127_i32 = arith.constant 127 : i32
    %199 = tpu.dynamic_rotate %3 by %c127_i32 dim 1 : vector<8x128xf32>, i32 -> vector<8x128xf32>
    %c5_152 = arith.constant 5 : index
    %c0_153 = arith.constant 0 : index
    %200 = vector.load %arg16[%c5_152, %c0_153] : memref<9x128xf32, #tpu.memory_space<vmem>>, vector<1x128xf32>
    %201 = vector.broadcast %200 : vector<1x128xf32> to vector<8x128xf32>
    %202 = arith.mulf %199, %201 : vector<8x128xf32>
    %c5_154 = arith.constant 5 : index
    %c0_155 = arith.constant 0 : index
    %c0_156 = arith.constant 0 : index
    %203 = vector.load %arg7[%c5_154, %c0_155, %c0_156] : memref<9x8x8xf32, #tpu.memory_space<vmem>>, vector<1x8x8xf32>
    %204 = vector.shape_cast %203 : vector<1x8x8xf32> to vector<8x8xf32>
    %cst_157 = arith.constant dense<0.000000e+00> : vector<8x128xf32>
    %205 = tpu.matmul %204, %202, %cst_157 {dimension_numbers = #tpu.dot_dimension_numbers<[1], [0], [0], [1], [0, 0, 1, 1], [], []>} : vector<8x8xf32>, vector<8x128xf32>, vector<8x128xf32> -> vector<8x128xf32>
    %206 = arith.addf %198, %205 : vector<8x128xf32>
    %c121_i32 = arith.constant 121 : i32
    %207 = tpu.dynamic_rotate %3 by %c121_i32 dim 1 : vector<8x128xf32>, i32 -> vector<8x128xf32>
    %c6_158 = arith.constant 6 : index
    %c0_159 = arith.constant 0 : index
    %208 = vector.load %arg16[%c6_158, %c0_159] : memref<9x128xf32, #tpu.memory_space<vmem>>, vector<1x128xf32>
    %209 = vector.broadcast %208 : vector<1x128xf32> to vector<8x128xf32>
    %210 = arith.mulf %207, %209 : vector<8x128xf32>
    %c6_160 = arith.constant 6 : index
    %c0_161 = arith.constant 0 : index
    %c0_162 = arith.constant 0 : index
    %211 = vector.load %arg7[%c6_160, %c0_161, %c0_162] : memref<9x8x8xf32, #tpu.memory_space<vmem>>, vector<1x8x8xf32>
    %212 = vector.shape_cast %211 : vector<1x8x8xf32> to vector<8x8xf32>
    %cst_163 = arith.constant dense<0.000000e+00> : vector<8x128xf32>
    %213 = tpu.matmul %212, %210, %cst_163 {dimension_numbers = #tpu.dot_dimension_numbers<[1], [0], [0], [1], [0, 0, 1, 1], [], []>} : vector<8x8xf32>, vector<8x128xf32>, vector<8x128xf32> -> vector<8x128xf32>
    %214 = arith.addf %206, %213 : vector<8x128xf32>
    %c120_i32 = arith.constant 120 : i32
    %215 = tpu.dynamic_rotate %3 by %c120_i32 dim 1 : vector<8x128xf32>, i32 -> vector<8x128xf32>
    %c7_164 = arith.constant 7 : index
    %c0_165 = arith.constant 0 : index
    %216 = vector.load %arg16[%c7_164, %c0_165] : memref<9x128xf32, #tpu.memory_space<vmem>>, vector<1x128xf32>
    %217 = vector.broadcast %216 : vector<1x128xf32> to vector<8x128xf32>
    %218 = arith.mulf %215, %217 : vector<8x128xf32>
    %c7_166 = arith.constant 7 : index
    %c0_167 = arith.constant 0 : index
    %c0_168 = arith.constant 0 : index
    %219 = vector.load %arg7[%c7_166, %c0_167, %c0_168] : memref<9x8x8xf32, #tpu.memory_space<vmem>>, vector<1x8x8xf32>
    %220 = vector.shape_cast %219 : vector<1x8x8xf32> to vector<8x8xf32>
    %cst_169 = arith.constant dense<0.000000e+00> : vector<8x128xf32>
    %221 = tpu.matmul %220, %218, %cst_169 {dimension_numbers = #tpu.dot_dimension_numbers<[1], [0], [0], [1], [0, 0, 1, 1], [], []>} : vector<8x8xf32>, vector<8x128xf32>, vector<8x128xf32> -> vector<8x128xf32>
    %222 = arith.addf %214, %221 : vector<8x128xf32>
    %c119_i32 = arith.constant 119 : i32
    %223 = tpu.dynamic_rotate %3 by %c119_i32 dim 1 : vector<8x128xf32>, i32 -> vector<8x128xf32>
    %c8_170 = arith.constant 8 : index
    %c0_171 = arith.constant 0 : index
    %224 = vector.load %arg16[%c8_170, %c0_171] : memref<9x128xf32, #tpu.memory_space<vmem>>, vector<1x128xf32>
    %225 = vector.broadcast %224 : vector<1x128xf32> to vector<8x128xf32>
    %226 = arith.mulf %223, %225 : vector<8x128xf32>
    %c8_172 = arith.constant 8 : index
    %c0_173 = arith.constant 0 : index
    %c0_174 = arith.constant 0 : index
    %227 = vector.load %arg7[%c8_172, %c0_173, %c0_174] : memref<9x8x8xf32, #tpu.memory_space<vmem>>, vector<1x8x8xf32>
    %228 = vector.shape_cast %227 : vector<1x8x8xf32> to vector<8x8xf32>
    %cst_175 = arith.constant dense<0.000000e+00> : vector<8x128xf32>
    %229 = tpu.matmul %228, %226, %cst_175 {dimension_numbers = #tpu.dot_dimension_numbers<[1], [0], [0], [1], [0, 0, 1, 1], [], []>} : vector<8x8xf32>, vector<8x128xf32>, vector<8x128xf32> -> vector<8x128xf32>
    %230 = arith.addf %222, %229 : vector<8x128xf32>
    %c0_176 = arith.constant 0 : index
    %c0_177 = arith.constant 0 : index
    %231 = vector.load %arg8[%c0_176, %c0_177] : memref<8x1xf32, #tpu.memory_space<vmem>>, vector<8x1xf32>
    %232 = vector.broadcast %231 : vector<8x1xf32> to vector<8x128xf32>
    %233 = arith.addf %230, %232 : vector<8x128xf32>
    %cst_178 = arith.constant 0.000000e+00 : f32
    %234 = vector.broadcast %cst_178 : f32 to vector<8x128xf32>
    %235 = arith.maximumf %233, %234 : vector<8x128xf32>
    %cst_179 = arith.constant 0.000000e+00 : f32
    %236 = vector.broadcast %cst_179 : f32 to vector<8x128xf32>
    %c9_i32_180 = arith.constant 9 : i32
    %237 = tpu.dynamic_rotate %235 by %c9_i32_180 dim 1 : vector<8x128xf32>, i32 -> vector<8x128xf32>
    %c0_181 = arith.constant 0 : index
    %c0_182 = arith.constant 0 : index
    %238 = vector.load %arg16[%c0_181, %c0_182] : memref<9x128xf32, #tpu.memory_space<vmem>>, vector<1x128xf32>
    %239 = vector.broadcast %238 : vector<1x128xf32> to vector<8x128xf32>
    %240 = arith.mulf %237, %239 : vector<8x128xf32>
    %c0_183 = arith.constant 0 : index
    %c0_184 = arith.constant 0 : index
    %c0_185 = arith.constant 0 : index
    %241 = vector.load %arg9[%c0_183, %c0_184, %c0_185] : memref<9x8x8xf32, #tpu.memory_space<vmem>>, vector<1x8x8xf32>
    %242 = vector.shape_cast %241 : vector<1x8x8xf32> to vector<8x8xf32>
    %cst_186 = arith.constant dense<0.000000e+00> : vector<8x128xf32>
    %243 = tpu.matmul %242, %240, %cst_186 {dimension_numbers = #tpu.dot_dimension_numbers<[1], [0], [0], [1], [0, 0, 1, 1], [], []>} : vector<8x8xf32>, vector<8x128xf32>, vector<8x128xf32> -> vector<8x128xf32>
    %244 = arith.addf %236, %243 : vector<8x128xf32>
    %c8_i32_187 = arith.constant 8 : i32
    %245 = tpu.dynamic_rotate %235 by %c8_i32_187 dim 1 : vector<8x128xf32>, i32 -> vector<8x128xf32>
    %c1_188 = arith.constant 1 : index
    %c0_189 = arith.constant 0 : index
    %246 = vector.load %arg16[%c1_188, %c0_189] : memref<9x128xf32, #tpu.memory_space<vmem>>, vector<1x128xf32>
    %247 = vector.broadcast %246 : vector<1x128xf32> to vector<8x128xf32>
    %248 = arith.mulf %245, %247 : vector<8x128xf32>
    %c1_190 = arith.constant 1 : index
    %c0_191 = arith.constant 0 : index
    %c0_192 = arith.constant 0 : index
    %249 = vector.load %arg9[%c1_190, %c0_191, %c0_192] : memref<9x8x8xf32, #tpu.memory_space<vmem>>, vector<1x8x8xf32>
    %250 = vector.shape_cast %249 : vector<1x8x8xf32> to vector<8x8xf32>
    %cst_193 = arith.constant dense<0.000000e+00> : vector<8x128xf32>
    %251 = tpu.matmul %250, %248, %cst_193 {dimension_numbers = #tpu.dot_dimension_numbers<[1], [0], [0], [1], [0, 0, 1, 1], [], []>} : vector<8x8xf32>, vector<8x128xf32>, vector<8x128xf32> -> vector<8x128xf32>
    %252 = arith.addf %244, %251 : vector<8x128xf32>
    %c7_i32_194 = arith.constant 7 : i32
    %253 = tpu.dynamic_rotate %235 by %c7_i32_194 dim 1 : vector<8x128xf32>, i32 -> vector<8x128xf32>
    %c2_195 = arith.constant 2 : index
    %c0_196 = arith.constant 0 : index
    %254 = vector.load %arg16[%c2_195, %c0_196] : memref<9x128xf32, #tpu.memory_space<vmem>>, vector<1x128xf32>
    %255 = vector.broadcast %254 : vector<1x128xf32> to vector<8x128xf32>
    %256 = arith.mulf %253, %255 : vector<8x128xf32>
    %c2_197 = arith.constant 2 : index
    %c0_198 = arith.constant 0 : index
    %c0_199 = arith.constant 0 : index
    %257 = vector.load %arg9[%c2_197, %c0_198, %c0_199] : memref<9x8x8xf32, #tpu.memory_space<vmem>>, vector<1x8x8xf32>
    %258 = vector.shape_cast %257 : vector<1x8x8xf32> to vector<8x8xf32>
    %cst_200 = arith.constant dense<0.000000e+00> : vector<8x128xf32>
    %259 = tpu.matmul %258, %256, %cst_200 {dimension_numbers = #tpu.dot_dimension_numbers<[1], [0], [0], [1], [0, 0, 1, 1], [], []>} : vector<8x8xf32>, vector<8x128xf32>, vector<8x128xf32> -> vector<8x128xf32>
    %260 = arith.addf %252, %259 : vector<8x128xf32>
    %c1_i32_201 = arith.constant 1 : i32
    %261 = tpu.dynamic_rotate %235 by %c1_i32_201 dim 1 : vector<8x128xf32>, i32 -> vector<8x128xf32>
    %c3_202 = arith.constant 3 : index
    %c0_203 = arith.constant 0 : index
    %262 = vector.load %arg16[%c3_202, %c0_203] : memref<9x128xf32, #tpu.memory_space<vmem>>, vector<1x128xf32>
    %263 = vector.broadcast %262 : vector<1x128xf32> to vector<8x128xf32>
    %264 = arith.mulf %261, %263 : vector<8x128xf32>
    %c3_204 = arith.constant 3 : index
    %c0_205 = arith.constant 0 : index
    %c0_206 = arith.constant 0 : index
    %265 = vector.load %arg9[%c3_204, %c0_205, %c0_206] : memref<9x8x8xf32, #tpu.memory_space<vmem>>, vector<1x8x8xf32>
    %266 = vector.shape_cast %265 : vector<1x8x8xf32> to vector<8x8xf32>
    %cst_207 = arith.constant dense<0.000000e+00> : vector<8x128xf32>
    %267 = tpu.matmul %266, %264, %cst_207 {dimension_numbers = #tpu.dot_dimension_numbers<[1], [0], [0], [1], [0, 0, 1, 1], [], []>} : vector<8x8xf32>, vector<8x128xf32>, vector<8x128xf32> -> vector<8x128xf32>
    %268 = arith.addf %260, %267 : vector<8x128xf32>
    %c4_208 = arith.constant 4 : index
    %c0_209 = arith.constant 0 : index
    %269 = vector.load %arg16[%c4_208, %c0_209] : memref<9x128xf32, #tpu.memory_space<vmem>>, vector<1x128xf32>
    %270 = vector.broadcast %269 : vector<1x128xf32> to vector<8x128xf32>
    %271 = arith.mulf %235, %270 : vector<8x128xf32>
    %c4_210 = arith.constant 4 : index
    %c0_211 = arith.constant 0 : index
    %c0_212 = arith.constant 0 : index
    %272 = vector.load %arg9[%c4_210, %c0_211, %c0_212] : memref<9x8x8xf32, #tpu.memory_space<vmem>>, vector<1x8x8xf32>
    %273 = vector.shape_cast %272 : vector<1x8x8xf32> to vector<8x8xf32>
    %cst_213 = arith.constant dense<0.000000e+00> : vector<8x128xf32>
    %274 = tpu.matmul %273, %271, %cst_213 {dimension_numbers = #tpu.dot_dimension_numbers<[1], [0], [0], [1], [0, 0, 1, 1], [], []>} : vector<8x8xf32>, vector<8x128xf32>, vector<8x128xf32> -> vector<8x128xf32>
    %275 = arith.addf %268, %274 : vector<8x128xf32>
    %c127_i32_214 = arith.constant 127 : i32
    %276 = tpu.dynamic_rotate %235 by %c127_i32_214 dim 1 : vector<8x128xf32>, i32 -> vector<8x128xf32>
    %c5_215 = arith.constant 5 : index
    %c0_216 = arith.constant 0 : index
    %277 = vector.load %arg16[%c5_215, %c0_216] : memref<9x128xf32, #tpu.memory_space<vmem>>, vector<1x128xf32>
    %278 = vector.broadcast %277 : vector<1x128xf32> to vector<8x128xf32>
    %279 = arith.mulf %276, %278 : vector<8x128xf32>
    %c5_217 = arith.constant 5 : index
    %c0_218 = arith.constant 0 : index
    %c0_219 = arith.constant 0 : index
    %280 = vector.load %arg9[%c5_217, %c0_218, %c0_219] : memref<9x8x8xf32, #tpu.memory_space<vmem>>, vector<1x8x8xf32>
    %281 = vector.shape_cast %280 : vector<1x8x8xf32> to vector<8x8xf32>
    %cst_220 = arith.constant dense<0.000000e+00> : vector<8x128xf32>
    %282 = tpu.matmul %281, %279, %cst_220 {dimension_numbers = #tpu.dot_dimension_numbers<[1], [0], [0], [1], [0, 0, 1, 1], [], []>} : vector<8x8xf32>, vector<8x128xf32>, vector<8x128xf32> -> vector<8x128xf32>
    %283 = arith.addf %275, %282 : vector<8x128xf32>
    %c121_i32_221 = arith.constant 121 : i32
    %284 = tpu.dynamic_rotate %235 by %c121_i32_221 dim 1 : vector<8x128xf32>, i32 -> vector<8x128xf32>
    %c6_222 = arith.constant 6 : index
    %c0_223 = arith.constant 0 : index
    %285 = vector.load %arg16[%c6_222, %c0_223] : memref<9x128xf32, #tpu.memory_space<vmem>>, vector<1x128xf32>
    %286 = vector.broadcast %285 : vector<1x128xf32> to vector<8x128xf32>
    %287 = arith.mulf %284, %286 : vector<8x128xf32>
    %c6_224 = arith.constant 6 : index
    %c0_225 = arith.constant 0 : index
    %c0_226 = arith.constant 0 : index
    %288 = vector.load %arg9[%c6_224, %c0_225, %c0_226] : memref<9x8x8xf32, #tpu.memory_space<vmem>>, vector<1x8x8xf32>
    %289 = vector.shape_cast %288 : vector<1x8x8xf32> to vector<8x8xf32>
    %cst_227 = arith.constant dense<0.000000e+00> : vector<8x128xf32>
    %290 = tpu.matmul %289, %287, %cst_227 {dimension_numbers = #tpu.dot_dimension_numbers<[1], [0], [0], [1], [0, 0, 1, 1], [], []>} : vector<8x8xf32>, vector<8x128xf32>, vector<8x128xf32> -> vector<8x128xf32>
    %291 = arith.addf %283, %290 : vector<8x128xf32>
    %c120_i32_228 = arith.constant 120 : i32
    %292 = tpu.dynamic_rotate %235 by %c120_i32_228 dim 1 : vector<8x128xf32>, i32 -> vector<8x128xf32>
    %c7_229 = arith.constant 7 : index
    %c0_230 = arith.constant 0 : index
    %293 = vector.load %arg16[%c7_229, %c0_230] : memref<9x128xf32, #tpu.memory_space<vmem>>, vector<1x128xf32>
    %294 = vector.broadcast %293 : vector<1x128xf32> to vector<8x128xf32>
    %295 = arith.mulf %292, %294 : vector<8x128xf32>
    %c7_231 = arith.constant 7 : index
    %c0_232 = arith.constant 0 : index
    %c0_233 = arith.constant 0 : index
    %296 = vector.load %arg9[%c7_231, %c0_232, %c0_233] : memref<9x8x8xf32, #tpu.memory_space<vmem>>, vector<1x8x8xf32>
    %297 = vector.shape_cast %296 : vector<1x8x8xf32> to vector<8x8xf32>
    %cst_234 = arith.constant dense<0.000000e+00> : vector<8x128xf32>
    %298 = tpu.matmul %297, %295, %cst_234 {dimension_numbers = #tpu.dot_dimension_numbers<[1], [0], [0], [1], [0, 0, 1, 1], [], []>} : vector<8x8xf32>, vector<8x128xf32>, vector<8x128xf32> -> vector<8x128xf32>
    %299 = arith.addf %291, %298 : vector<8x128xf32>
    %c119_i32_235 = arith.constant 119 : i32
    %300 = tpu.dynamic_rotate %235 by %c119_i32_235 dim 1 : vector<8x128xf32>, i32 -> vector<8x128xf32>
    %c8_236 = arith.constant 8 : index
    %c0_237 = arith.constant 0 : index
    %301 = vector.load %arg16[%c8_236, %c0_237] : memref<9x128xf32, #tpu.memory_space<vmem>>, vector<1x128xf32>
    %302 = vector.broadcast %301 : vector<1x128xf32> to vector<8x128xf32>
    %303 = arith.mulf %300, %302 : vector<8x128xf32>
    %c8_238 = arith.constant 8 : index
    %c0_239 = arith.constant 0 : index
    %c0_240 = arith.constant 0 : index
    %304 = vector.load %arg9[%c8_238, %c0_239, %c0_240] : memref<9x8x8xf32, #tpu.memory_space<vmem>>, vector<1x8x8xf32>
    %305 = vector.shape_cast %304 : vector<1x8x8xf32> to vector<8x8xf32>
    %cst_241 = arith.constant dense<0.000000e+00> : vector<8x128xf32>
    %306 = tpu.matmul %305, %303, %cst_241 {dimension_numbers = #tpu.dot_dimension_numbers<[1], [0], [0], [1], [0, 0, 1, 1], [], []>} : vector<8x8xf32>, vector<8x128xf32>, vector<8x128xf32> -> vector<8x128xf32>
    %307 = arith.addf %299, %306 : vector<8x128xf32>
    %c0_242 = arith.constant 0 : index
    %c0_243 = arith.constant 0 : index
    %308 = vector.load %arg10[%c0_242, %c0_243] : memref<8x1xf32, #tpu.memory_space<vmem>>, vector<8x1xf32>
    %309 = vector.broadcast %308 : vector<8x1xf32> to vector<8x128xf32>
    %310 = arith.addf %307, %309 : vector<8x128xf32>
    %311 = arith.addf %310, %3 : vector<8x128xf32>
    %cst_244 = arith.constant 0.000000e+00 : f32
    %312 = vector.broadcast %cst_244 : f32 to vector<8x128xf32>
    %313 = arith.maximumf %311, %312 : vector<8x128xf32>
    %c0_245 = arith.constant 0 : index
    %c0_246 = arith.constant 0 : index
    %314 = vector.load %arg11[%c0_245, %c0_246] : memref<4x8xf32, #tpu.memory_space<vmem>>, vector<4x8xf32>
    %cst_247 = arith.constant dense<0.000000e+00> : vector<4x128xf32>
    %315 = tpu.matmul %314, %313, %cst_247 {dimension_numbers = #tpu.dot_dimension_numbers<[1], [0], [0], [1], [0, 0, 1, 1], [], []>} : vector<4x8xf32>, vector<8x128xf32>, vector<4x128xf32> -> vector<4x128xf32>
    %c0_248 = arith.constant 0 : index
    %c0_249 = arith.constant 0 : index
    %316 = vector.load %arg12[%c0_248, %c0_249] : memref<4x1xf32, #tpu.memory_space<vmem>>, vector<4x1xf32>
    %317 = vector.broadcast %316 : vector<4x1xf32> to vector<4x128xf32>
    %318 = arith.addf %315, %317 : vector<4x128xf32>
    %c0_250 = arith.constant 0 : index
    %c0_251 = arith.constant 0 : index
    %319 = vector.load %arg17[%c0_250, %c0_251] : memref<128x256xf32, #tpu.memory_space<vmem>>, vector<128x256xf32>
    %cst_252 = arith.constant dense<0.000000e+00> : vector<4x256xf32>
    %320 = tpu.matmul %318, %319, %cst_252 {dimension_numbers = #tpu.dot_dimension_numbers<[1], [0], [0], [1], [0, 0, 1, 1], [], []>} : vector<4x128xf32>, vector<128x256xf32>, vector<4x256xf32> -> vector<4x256xf32>
    %321 = arith.addf %158, %320 : vector<4x256xf32>
    %cst_253 = arith.constant 0.000000e+00 : f32
    %322 = vector.broadcast %cst_253 : f32 to vector<4x256xf32>
    %323 = arith.maximumf %321, %322 : vector<4x256xf32>
    %c0_254 = arith.constant 0 : index
    %c0_255 = arith.constant 0 : index
    %c0_256 = arith.constant 0 : index
    %324 = vector.load %arg19[%c0_254, %c0_255, %c0_256] : memref<1x4x256xf32, #tpu.memory_space<vmem>>, vector<1x4x256xf32>
    %325 = vector.shape_cast %324 : vector<1x4x256xf32> to vector<4x256xf32>
    %326 = vector.shape_cast %323 : vector<4x256xf32> to vector<1x4x256xf32>
    tpu.vector_store %arg19[%c0_254, %c0_255, %c0_256], %326 {strides = array<i32>} : memref<1x4x256xf32, #tpu.memory_space<vmem>>, vector<1x4x256xf32>,
    %cst_257 = arith.constant 0.000000e+00 : f32
    %327 = vector.broadcast %cst_257 : f32 to vector<8x256xf32>
    %c17_i32_258 = arith.constant 17 : i32
    %328 = tpu.dynamic_rotate %158 by %c17_i32_258 dim 1 : vector<4x256xf32>, i32 -> vector<4x256xf32>
    %c0_259 = arith.constant 0 : index
    %c0_260 = arith.constant 0 : index
    %329 = vector.load %arg15[%c0_259, %c0_260] : memref<9x256xf32, #tpu.memory_space<vmem>>, vector<1x256xf32>
    %330 = vector.broadcast %329 : vector<1x256xf32> to vector<4x256xf32>
    %331 = arith.mulf %328, %330 : vector<4x256xf32>
    %c0_261 = arith.constant 0 : index
    %c0_262 = arith.constant 0 : index
    %c0_263 = arith.constant 0 : index
    %332 = vector.load %arg13[%c0_261, %c0_262, %c0_263] : memref<9x8x4xf32, #tpu.memory_space<vmem>>, vector<1x8x4xf32>
    %333 = vector.shape_cast %332 : vector<1x8x4xf32> to vector<8x4xf32>
    %cst_264 = arith.constant dense<0.000000e+00> : vector<8x256xf32>
    %334 = tpu.matmul %333, %331, %cst_264 {dimension_numbers = #tpu.dot_dimension_numbers<[1], [0], [0], [1], [0, 0, 1, 1], [], []>} : vector<8x4xf32>, vector<4x256xf32>, vector<8x256xf32> -> vector<8x256xf32>
    %335 = arith.addf %327, %334 : vector<8x256xf32>
    %c16_i32_265 = arith.constant 16 : i32
    %336 = tpu.dynamic_rotate %158 by %c16_i32_265 dim 1 : vector<4x256xf32>, i32 -> vector<4x256xf32>
    %c1_266 = arith.constant 1 : index
    %c0_267 = arith.constant 0 : index
    %337 = vector.load %arg15[%c1_266, %c0_267] : memref<9x256xf32, #tpu.memory_space<vmem>>, vector<1x256xf32>
    %338 = vector.broadcast %337 : vector<1x256xf32> to vector<4x256xf32>
    %339 = arith.mulf %336, %338 : vector<4x256xf32>
    %c1_268 = arith.constant 1 : index
    %c0_269 = arith.constant 0 : index
    %c0_270 = arith.constant 0 : index
    %340 = vector.load %arg13[%c1_268, %c0_269, %c0_270] : memref<9x8x4xf32, #tpu.memory_space<vmem>>, vector<1x8x4xf32>
    %341 = vector.shape_cast %340 : vector<1x8x4xf32> to vector<8x4xf32>
    %cst_271 = arith.constant dense<0.000000e+00> : vector<8x256xf32>
    %342 = tpu.matmul %341, %339, %cst_271 {dimension_numbers = #tpu.dot_dimension_numbers<[1], [0], [0], [1], [0, 0, 1, 1], [], []>} : vector<8x4xf32>, vector<4x256xf32>, vector<8x256xf32> -> vector<8x256xf32>
    %343 = arith.addf %335, %342 : vector<8x256xf32>
    %c15_i32_272 = arith.constant 15 : i32
    %344 = tpu.dynamic_rotate %158 by %c15_i32_272 dim 1 : vector<4x256xf32>, i32 -> vector<4x256xf32>
    %c2_273 = arith.constant 2 : index
    %c0_274 = arith.constant 0 : index
    %345 = vector.load %arg15[%c2_273, %c0_274] : memref<9x256xf32, #tpu.memory_space<vmem>>, vector<1x256xf32>
    %346 = vector.broadcast %345 : vector<1x256xf32> to vector<4x256xf32>
    %347 = arith.mulf %344, %346 : vector<4x256xf32>
    %c2_275 = arith.constant 2 : index
    %c0_276 = arith.constant 0 : index
    %c0_277 = arith.constant 0 : index
    %348 = vector.load %arg13[%c2_275, %c0_276, %c0_277] : memref<9x8x4xf32, #tpu.memory_space<vmem>>, vector<1x8x4xf32>
    %349 = vector.shape_cast %348 : vector<1x8x4xf32> to vector<8x4xf32>
    %cst_278 = arith.constant dense<0.000000e+00> : vector<8x256xf32>
    %350 = tpu.matmul %349, %347, %cst_278 {dimension_numbers = #tpu.dot_dimension_numbers<[1], [0], [0], [1], [0, 0, 1, 1], [], []>} : vector<8x4xf32>, vector<4x256xf32>, vector<8x256xf32> -> vector<8x256xf32>
    %351 = arith.addf %343, %350 : vector<8x256xf32>
    %c1_i32_279 = arith.constant 1 : i32
    %352 = tpu.dynamic_rotate %158 by %c1_i32_279 dim 1 : vector<4x256xf32>, i32 -> vector<4x256xf32>
    %c3_280 = arith.constant 3 : index
    %c0_281 = arith.constant 0 : index
    %353 = vector.load %arg15[%c3_280, %c0_281] : memref<9x256xf32, #tpu.memory_space<vmem>>, vector<1x256xf32>
    %354 = vector.broadcast %353 : vector<1x256xf32> to vector<4x256xf32>
    %355 = arith.mulf %352, %354 : vector<4x256xf32>
    %c3_282 = arith.constant 3 : index
    %c0_283 = arith.constant 0 : index
    %c0_284 = arith.constant 0 : index
    %356 = vector.load %arg13[%c3_282, %c0_283, %c0_284] : memref<9x8x4xf32, #tpu.memory_space<vmem>>, vector<1x8x4xf32>
    %357 = vector.shape_cast %356 : vector<1x8x4xf32> to vector<8x4xf32>
    %cst_285 = arith.constant dense<0.000000e+00> : vector<8x256xf32>
    %358 = tpu.matmul %357, %355, %cst_285 {dimension_numbers = #tpu.dot_dimension_numbers<[1], [0], [0], [1], [0, 0, 1, 1], [], []>} : vector<8x4xf32>, vector<4x256xf32>, vector<8x256xf32> -> vector<8x256xf32>
    %359 = arith.addf %351, %358 : vector<8x256xf32>
    %c4_286 = arith.constant 4 : index
    %c0_287 = arith.constant 0 : index
    %360 = vector.load %arg15[%c4_286, %c0_287] : memref<9x256xf32, #tpu.memory_space<vmem>>, vector<1x256xf32>
    %361 = vector.broadcast %360 : vector<1x256xf32> to vector<4x256xf32>
    %362 = arith.mulf %158, %361 : vector<4x256xf32>
    %c4_288 = arith.constant 4 : index
    %c0_289 = arith.constant 0 : index
    %c0_290 = arith.constant 0 : index
    %363 = vector.load %arg13[%c4_288, %c0_289, %c0_290] : memref<9x8x4xf32, #tpu.memory_space<vmem>>, vector<1x8x4xf32>
    %364 = vector.shape_cast %363 : vector<1x8x4xf32> to vector<8x4xf32>
    %cst_291 = arith.constant dense<0.000000e+00> : vector<8x256xf32>
    %365 = tpu.matmul %364, %362, %cst_291 {dimension_numbers = #tpu.dot_dimension_numbers<[1], [0], [0], [1], [0, 0, 1, 1], [], []>} : vector<8x4xf32>, vector<4x256xf32>, vector<8x256xf32> -> vector<8x256xf32>
    %366 = arith.addf %359, %365 : vector<8x256xf32>
    %c255_i32_292 = arith.constant 255 : i32
    %367 = tpu.dynamic_rotate %158 by %c255_i32_292 dim 1 : vector<4x256xf32>, i32 -> vector<4x256xf32>
    %c5_293 = arith.constant 5 : index
    %c0_294 = arith.constant 0 : index
    %368 = vector.load %arg15[%c5_293, %c0_294] : memref<9x256xf32, #tpu.memory_space<vmem>>, vector<1x256xf32>
    %369 = vector.broadcast %368 : vector<1x256xf32> to vector<4x256xf32>
    %370 = arith.mulf %367, %369 : vector<4x256xf32>
    %c5_295 = arith.constant 5 : index
    %c0_296 = arith.constant 0 : index
    %c0_297 = arith.constant 0 : index
    %371 = vector.load %arg13[%c5_295, %c0_296, %c0_297] : memref<9x8x4xf32, #tpu.memory_space<vmem>>, vector<1x8x4xf32>
    %372 = vector.shape_cast %371 : vector<1x8x4xf32> to vector<8x4xf32>
    %cst_298 = arith.constant dense<0.000000e+00> : vector<8x256xf32>
    %373 = tpu.matmul %372, %370, %cst_298 {dimension_numbers = #tpu.dot_dimension_numbers<[1], [0], [0], [1], [0, 0, 1, 1], [], []>} : vector<8x4xf32>, vector<4x256xf32>, vector<8x256xf32> -> vector<8x256xf32>
    %374 = arith.addf %366, %373 : vector<8x256xf32>
    %c241_i32_299 = arith.constant 241 : i32
    %375 = tpu.dynamic_rotate %158 by %c241_i32_299 dim 1 : vector<4x256xf32>, i32 -> vector<4x256xf32>
    %c6_300 = arith.constant 6 : index
    %c0_301 = arith.constant 0 : index
    %376 = vector.load %arg15[%c6_300, %c0_301] : memref<9x256xf32, #tpu.memory_space<vmem>>, vector<1x256xf32>
    %377 = vector.broadcast %376 : vector<1x256xf32> to vector<4x256xf32>
    %378 = arith.mulf %375, %377 : vector<4x256xf32>
    %c6_302 = arith.constant 6 : index
    %c0_303 = arith.constant 0 : index
    %c0_304 = arith.constant 0 : index
    %379 = vector.load %arg13[%c6_302, %c0_303, %c0_304] : memref<9x8x4xf32, #tpu.memory_space<vmem>>, vector<1x8x4xf32>
    %380 = vector.shape_cast %379 : vector<1x8x4xf32> to vector<8x4xf32>
    %cst_305 = arith.constant dense<0.000000e+00> : vector<8x256xf32>
    %381 = tpu.matmul %380, %378, %cst_305 {dimension_numbers = #tpu.dot_dimension_numbers<[1], [0], [0], [1], [0, 0, 1, 1], [], []>} : vector<8x4xf32>, vector<4x256xf32>, vector<8x256xf32> -> vector<8x256xf32>
    %382 = arith.addf %374, %381 : vector<8x256xf32>
    %c240_i32_306 = arith.constant 240 : i32
    %383 = tpu.dynamic_rotate %158 by %c240_i32_306 dim 1 : vector<4x256xf32>, i32 -> vector<4x256xf32>
    %c7_307 = arith.constant 7 : index
    %c0_308 = arith.constant 0 : index
    %384 = vector.load %arg15[%c7_307, %c0_308] : memref<9x256xf32, #tpu.memory_space<vmem>>, vector<1x256xf32>
    %385 = vector.broadcast %384 : vector<1x256xf32> to vector<4x256xf32>
    %386 = arith.mulf %383, %385 : vector<4x256xf32>
    %c7_309 = arith.constant 7 : index
    %c0_310 = arith.constant 0 : index
    %c0_311 = arith.constant 0 : index
    %387 = vector.load %arg13[%c7_309, %c0_310, %c0_311] : memref<9x8x4xf32, #tpu.memory_space<vmem>>, vector<1x8x4xf32>
    %388 = vector.shape_cast %387 : vector<1x8x4xf32> to vector<8x4xf32>
    %cst_312 = arith.constant dense<0.000000e+00> : vector<8x256xf32>
    %389 = tpu.matmul %388, %386, %cst_312 {dimension_numbers = #tpu.dot_dimension_numbers<[1], [0], [0], [1], [0, 0, 1, 1], [], []>} : vector<8x4xf32>, vector<4x256xf32>, vector<8x256xf32> -> vector<8x256xf32>
    %390 = arith.addf %382, %389 : vector<8x256xf32>
    %c239_i32_313 = arith.constant 239 : i32
    %391 = tpu.dynamic_rotate %158 by %c239_i32_313 dim 1 : vector<4x256xf32>, i32 -> vector<4x256xf32>
    %c8_314 = arith.constant 8 : index
    %c0_315 = arith.constant 0 : index
    %392 = vector.load %arg15[%c8_314, %c0_315] : memref<9x256xf32, #tpu.memory_space<vmem>>, vector<1x256xf32>
    %393 = vector.broadcast %392 : vector<1x256xf32> to vector<4x256xf32>
    %394 = arith.mulf %391, %393 : vector<4x256xf32>
    %c8_316 = arith.constant 8 : index
    %c0_317 = arith.constant 0 : index
    %c0_318 = arith.constant 0 : index
    %395 = vector.load %arg13[%c8_316, %c0_317, %c0_318] : memref<9x8x4xf32, #tpu.memory_space<vmem>>, vector<1x8x4xf32>
    %396 = vector.shape_cast %395 : vector<1x8x4xf32> to vector<8x4xf32>
    %cst_319 = arith.constant dense<0.000000e+00> : vector<8x256xf32>
    %397 = tpu.matmul %396, %394, %cst_319 {dimension_numbers = #tpu.dot_dimension_numbers<[1], [0], [0], [1], [0, 0, 1, 1], [], []>} : vector<8x4xf32>, vector<4x256xf32>, vector<8x256xf32> -> vector<8x256xf32>
    %398 = arith.addf %390, %397 : vector<8x256xf32>
    %c0_320 = arith.constant 0 : index
    %c0_321 = arith.constant 0 : index
    %399 = vector.load %arg14[%c0_320, %c0_321] : memref<8x1xf32, #tpu.memory_space<vmem>>, vector<8x1xf32>
    %400 = vector.broadcast %399 : vector<8x1xf32> to vector<8x256xf32>
    %401 = arith.addf %398, %400 : vector<8x256xf32>
    %c0_322 = arith.constant 0 : index
    %c0_323 = arith.constant 0 : index
    %402 = vector.load %arg18[%c0_322, %c0_323] : memref<256x128xf32, #tpu.memory_space<vmem>>, vector<256x128xf32>
    %cst_324 = arith.constant dense<0.000000e+00> : vector<8x128xf32>
    %403 = tpu.matmul %401, %402, %cst_324 {dimension_numbers = #tpu.dot_dimension_numbers<[1], [0], [0], [1], [0, 0, 1, 1], [], []>} : vector<8x256xf32>, vector<256x128xf32>, vector<8x128xf32> -> vector<8x128xf32>
    %404 = arith.addf %403, %313 : vector<8x128xf32>
    %cst_325 = arith.constant 0.000000e+00 : f32
    %405 = vector.broadcast %cst_325 : f32 to vector<8x128xf32>
    %406 = arith.maximumf %404, %405 : vector<8x128xf32>
    %c0_326 = arith.constant 0 : index
    %c0_327 = arith.constant 0 : index
    %c0_328 = arith.constant 0 : index
    %407 = vector.load %arg20[%c0_326, %c0_327, %c0_328] : memref<1x8x128xf32, #tpu.memory_space<vmem>>, vector<1x8x128xf32>
    %408 = vector.shape_cast %407 : vector<1x8x128xf32> to vector<8x128xf32>
    %409 = vector.shape_cast %406 : vector<8x128xf32> to vector<1x8x128xf32>
    tpu.vector_store %arg20[%c0_326, %c0_327, %c0_328], %409 {strides = array<i32>} : memref<1x8x128xf32, #tpu.memory_space<vmem>>, vector<1x8x128xf32>,
    return
  }
  func.func @transform_0(%arg0: i32) -> (i32, i32, i32) {
    %c0_i32 = arith.constant 0 : i32
    %c0_i32_0 = arith.constant 0 : i32
    %c0_i32_1 = arith.constant 0 : i32
    return %arg0, %c0_i32, %c0_i32_0 : i32, i32, i32
  }
  func.func @transform_1(%arg0: i32) -> (i32, i32, i32) {
    %c0_i32 = arith.constant 0 : i32
    %c0_i32_0 = arith.constant 0 : i32
    %c0_i32_1 = arith.constant 0 : i32
    return %arg0, %c0_i32, %c0_i32_0 : i32, i32, i32
  }
  func.func @transform_2(%arg0: i32) -> (i32, i32, i32) {
    %c0_i32 = arith.constant 0 : i32
    %c0_i32_0 = arith.constant 0 : i32
    %c0_i32_1 = arith.constant 0 : i32
    %c0_i32_2 = arith.constant 0 : i32
    return %c0_i32, %c0_i32_0, %c0_i32_1 : i32, i32, i32
  }
  func.func @transform_3(%arg0: i32) -> (i32, i32) {
    %c0_i32 = arith.constant 0 : i32
    %c0_i32_0 = arith.constant 0 : i32
    %c0_i32_1 = arith.constant 0 : i32
    return %c0_i32, %c0_i32_0 : i32, i32
  }
  func.func @transform_4(%arg0: i32) -> (i32, i32, i32) {
    %c0_i32 = arith.constant 0 : i32
    %c0_i32_0 = arith.constant 0 : i32
    %c0_i32_1 = arith.constant 0 : i32
    %c0_i32_2 = arith.constant 0 : i32
    return %c0_i32, %c0_i32_0, %c0_i32_1 : i32, i32, i32
  }
  func.func @transform_5(%arg0: i32) -> (i32, i32) {
    %c0_i32 = arith.constant 0 : i32
    %c0_i32_0 = arith.constant 0 : i32
    %c0_i32_1 = arith.constant 0 : i32
    return %c0_i32, %c0_i32_0 : i32, i32
  }
  func.func @transform_6(%arg0: i32) -> (i32, i32, i32) {
    %c0_i32 = arith.constant 0 : i32
    %c0_i32_0 = arith.constant 0 : i32
    %c0_i32_1 = arith.constant 0 : i32
    %c0_i32_2 = arith.constant 0 : i32
    return %c0_i32, %c0_i32_0, %c0_i32_1 : i32, i32, i32
  }
  func.func @transform_7(%arg0: i32) -> (i32, i32) {
    %c0_i32 = arith.constant 0 : i32
    %c0_i32_0 = arith.constant 0 : i32
    %c0_i32_1 = arith.constant 0 : i32
    return %c0_i32, %c0_i32_0 : i32, i32
  }
  func.func @transform_8(%arg0: i32) -> (i32, i32, i32) {
    %c0_i32 = arith.constant 0 : i32
    %c0_i32_0 = arith.constant 0 : i32
    %c0_i32_1 = arith.constant 0 : i32
    %c0_i32_2 = arith.constant 0 : i32
    return %c0_i32, %c0_i32_0, %c0_i32_1 : i32, i32, i32
  }
  func.func @transform_9(%arg0: i32) -> (i32, i32) {
    %c0_i32 = arith.constant 0 : i32
    %c0_i32_0 = arith.constant 0 : i32
    %c0_i32_1 = arith.constant 0 : i32
    return %c0_i32, %c0_i32_0 : i32, i32
  }
  func.func @transform_10(%arg0: i32) -> (i32, i32) {
    %c0_i32 = arith.constant 0 : i32
    %c0_i32_0 = arith.constant 0 : i32
    %c0_i32_1 = arith.constant 0 : i32
    return %c0_i32, %c0_i32_0 : i32, i32
  }
  func.func @transform_11(%arg0: i32) -> (i32, i32) {
    %c0_i32 = arith.constant 0 : i32
    %c0_i32_0 = arith.constant 0 : i32
    %c0_i32_1 = arith.constant 0 : i32
    return %c0_i32, %c0_i32_0 : i32, i32
  }
  func.func @transform_12(%arg0: i32) -> (i32, i32, i32) {
    %c0_i32 = arith.constant 0 : i32
    %c0_i32_0 = arith.constant 0 : i32
    %c0_i32_1 = arith.constant 0 : i32
    %c0_i32_2 = arith.constant 0 : i32
    return %c0_i32, %c0_i32_0, %c0_i32_1 : i32, i32, i32
  }
  func.func @transform_13(%arg0: i32) -> (i32, i32) {
    %c0_i32 = arith.constant 0 : i32
    %c0_i32_0 = arith.constant 0 : i32
    %c0_i32_1 = arith.constant 0 : i32
    return %c0_i32, %c0_i32_0 : i32, i32
  }
  func.func @transform_14(%arg0: i32) -> (i32, i32) {
    %c0_i32 = arith.constant 0 : i32
    %c0_i32_0 = arith.constant 0 : i32
    %c0_i32_1 = arith.constant 0 : i32
    return %c0_i32, %c0_i32_0 : i32, i32
  }
  func.func @transform_15(%arg0: i32) -> (i32, i32) {
    %c0_i32 = arith.constant 0 : i32
    %c0_i32_0 = arith.constant 0 : i32
    %c0_i32_1 = arith.constant 0 : i32
    return %c0_i32, %c0_i32_0 : i32, i32
  }
  func.func @transform_16(%arg0: i32) -> (i32, i32) {
    %c0_i32 = arith.constant 0 : i32
    %c0_i32_0 = arith.constant 0 : i32
    %c0_i32_1 = arith.constant 0 : i32
    return %c0_i32, %c0_i32_0 : i32, i32
  }
  func.func @transform_17(%arg0: i32) -> (i32, i32) {
    %c0_i32 = arith.constant 0 : i32
    %c0_i32_0 = arith.constant 0 : i32
    %c0_i32_1 = arith.constant 0 : i32
    return %c0_i32, %c0_i32_0 : i32, i32
  }
  func.func @transform_18(%arg0: i32) -> (i32, i32, i32) {
    %c0_i32 = arith.constant 0 : i32
    %c0_i32_0 = arith.constant 0 : i32
    %c0_i32_1 = arith.constant 0 : i32
    return %arg0, %c0_i32, %c0_i32_0 : i32, i32, i32
  }
  func.func @transform_19(%arg0: i32) -> (i32, i32, i32) {
    %c0_i32 = arith.constant 0 : i32
    %c0_i32_0 = arith.constant 0 : i32
    %c0_i32_1 = arith.constant 0 : i32
    return %arg0, %c0_i32, %c0_i32_0 : i32, i32, i32
  }
}

</mosaic_0001>

<llo_original>
// kernel: hr_module_forward.1
$region0: #{hr_module_forward.1}
  #allocation0 [shape = 'u32[]', space=smem, size = 0x4, offset = 0x4, fixed_abs, tag = 'smem constant byte address 0x4 - core index']
  #allocation1 [shape = 'u32[144,128]{1,0:T(1,128)}', space=vmem, size = 0x12000, scoped, tag = 'internal scratch']
  %s0 = inlined_call_operand.vmem [shape: f32[2,4,256], index: 0, kind: input, shape index: {}]
  %s1 = inlined_call_operand.vmem [shape: f32[2,8,128], index: 1, kind: input, shape index: {}]
  %s2 = inlined_call_operand.vmem [shape: f32[9,4,4], index: 2, kind: input, shape index: {}]
  %s3 = inlined_call_operand.vmem [shape: f32[4,1], index: 3, kind: input, shape index: {}]
  %s4 = inlined_call_operand.vmem [shape: f32[9,4,4], index: 4, kind: input, shape index: {}]
  %s5 = inlined_call_operand.vmem [shape: f32[4,1], index: 5, kind: input, shape index: {}]
  %s6 = inlined_call_operand.vmem [shape: f32[9,8,8], index: 6, kind: input, shape index: {}]
  %s7 = inlined_call_operand.vmem [shape: f32[8,1], index: 7, kind: input, shape index: {}]
  %s8 = inlined_call_operand.vmem [shape: f32[9,8,8], index: 8, kind: input, shape index: {}]
  %s9 = inlined_call_operand.vmem [shape: f32[8,1], index: 9, kind: input, shape index: {}]
  %s10 = inlined_call_operand.vmem [shape: f32[4,8], index: 10, kind: input, shape index: {}]
  %s11 = inlined_call_operand.vmem [shape: f32[4,1], index: 11, kind: input, shape index: {}]
  %s12 = inlined_call_operand.vmem [shape: f32[9,8,4], index: 12, kind: input, shape index: {}]
  %s13 = inlined_call_operand.vmem [shape: f32[8,1], index: 13, kind: input, shape index: {}]
  %s14 = inlined_call_operand.vmem [shape: f32[9,256], index: 14, kind: input, shape index: {}]
  %s15 = inlined_call_operand.vmem [shape: f32[9,128], index: 15, kind: input, shape index: {}]
  %s16 = inlined_call_operand.vmem [shape: f32[128,256], index: 16, kind: input, shape index: {}]
  %s17 = inlined_call_operand.vmem [shape: f32[256,128], index: 17, kind: input, shape index: {}]
  %s18 = inlined_call_operand.vmem [shape: f32[2,4,256], index: 18, kind: output, shape index: {0}]
  %s19 = inlined_call_operand.vmem [shape: f32[2,8,128], index: 19, kind: output, shape index: {1}]
  %20 = xla_tuple %s18, %s19
  %s21 = sld [smem:[#allocation0]]
  $region113: #{hr_module_forward.1} parent=0
    _
  %s23 = ssub.s32 1, %s21
  %s24 = scalar_select 0, %s23, %s21
  loop: start=0, step=1, limit=4
  $region2: #{hr_module_forward.1} parent=0 // loop_pre_header
    _
  $region3: #{hr_module_forward.1} parent=0 // loop_header
    %s26 = sphi 0, %s30
    %p27 = scmp.ge.s32.totalorder %s26, 4
    %s36 = sphi 0, %s38
    %s39 = sphi 0, %s36
    %s40 = sphi 0, %s39
    %s56 = sphi 0, %s40
    %s62 = sphi 0, %s64
    %s65 = sphi 0, %s62
    %s66 = sphi 0, %s65
    %s82 = sphi 0, %s66
    %s86 = sphi 0, %s86
    %s88 = sphi 0, %s86
    %s89 = sphi 0, %s88
    %s103 = sphi 0, %s89
    %s107 = sphi 0, %s107
    %s109 = sphi 0, %s107
    %s110 = sphi 0, %s109
    %s124 = sphi 0, %s110
    %s128 = sphi 0, %s128
    %s130 = sphi 0, %s128
    %s131 = sphi 0, %s130
    %s145 = sphi 0, %s131
    %s149 = sphi 0, %s149
    %s151 = sphi 0, %s149
    %s152 = sphi 0, %s151
    %s166 = sphi 0, %s152
    %s170 = sphi 0, %s170
    %s172 = sphi 0, %s170
    %s173 = sphi 0, %s172
    %s187 = sphi 0, %s173
    %s191 = sphi 0, %s191
    %s193 = sphi 0, %s191
    %s194 = sphi 0, %s193
    %s208 = sphi 0, %s194
    %s212 = sphi 0, %s212
    %s214 = sphi 0, %s212
    %s215 = sphi 0, %s214
    %s229 = sphi 0, %s215
    %s233 = sphi 0, %s233
    %s235 = sphi 0, %s233
    %s236 = sphi 0, %s235
    %s250 = sphi 0, %s236
    %s254 = sphi 0, %s254
    %s256 = sphi 0, %s254
    %s257 = sphi 0, %s256
    %s271 = sphi 0, %s257
    %s275 = sphi 0, %s275
    %s277 = sphi 0, %s275
    %s278 = sphi 0, %s277
    %s292 = sphi 0, %s278
    %s296 = sphi 0, %s296
    %s298 = sphi 0, %s296
    %s299 = sphi 0, %s298
    %s313 = sphi 0, %s299
    %s317 = sphi 0, %s317
    %s319 = sphi 0, %s317
    %s320 = sphi 0, %s319
    %s334 = sphi 0, %s320
    %s338 = sphi 0, %s338
    %s340 = sphi 0, %s338
    %s341 = sphi 0, %s340
    %s355 = sphi 0, %s341
    %s359 = sphi 0, %s359
    %s361 = sphi 0, %s359
    %s362 = sphi 0, %s361
    %s376 = sphi 0, %s362
    %s380 = sphi 0, %s380
    %s382 = sphi 0, %s380
    %s383 = sphi 0, %s382
    %s397 = sphi 0, %s383
    %s401 = sphi 0, %s401
    %s403 = sphi 0, %s401
    %s404 = sphi 0, %s403
    %s418 = sphi 0, %s404
    %s424 = sphi 0, %s426
    %s427 = sphi 0, %s424
    %s428 = sphi 0, %s427
    %s444 = sphi 0, %s428
    %s450 = sphi 0, %s452
    %s453 = sphi 0, %s450
    %s454 = sphi 0, %s453
    %s470 = sphi 0, %s454
  $region4: #{hr_module_forward.1} parent=0 // loop_header_branch
    %29 = sbr.rel (%p27) target = $region8
  $region5: #{hr_module_forward.1} parent=0 // loop_body
    %s31 = ssub.s32 %s26, 1
    %s32 = ssub.s32 %s26, 2
    %s33 = sadd.s32 %s26, 1
    %s34 = ssub.s32 %s26, %s33
    %p35 = scmp.eq.s32.totalorder %s34, 0
    %s37 = sadd.s32 %s36, 1
    %s38 = scalar_select %p35, %s36, %s37
    %p41 = pneg %p35
    %p42 = scmp.eq.s32.totalorder %s26, 1
    %p43 = por %p41, %p42
    %p44 = scmp.ne.s32.totalorder %s36, %s39
    %p45 = scmp.eq.s32.totalorder %s26, 0
    %p46 = por %p44, %p45
    %p47 = scmp.ne.s32.totalorder %s36, %s39
    %p48 = scmp.eq.s32.totalorder %s31, 1
    %p49 = por %p47, %p48
    %p50 = scmp.ne.s32.totalorder %s39, %s40
    %p51 = scmp.eq.s32.totalorder %s31, 0
    %p52 = por %p50, %p51
    %p53 = scmp.ne.s32.totalorder %s39, %s40
    %p54 = scmp.eq.s32.totalorder %s32, 1
    %p55 = por %p53, %p54
    %p57 = scmp.ne.s32.totalorder %s40, %s56
    %p58 = scmp.eq.s32.totalorder %s32, 0
    %p59 = por %p57, %p58
    %s60 = ssub.s32 %s26, %s33
    %p61 = scmp.eq.s32.totalorder %s60, 0
    %s63 = sadd.s32 %s62, 1
    %s64 = scalar_select %p61, %s62, %s63
    %p67 = pneg %p61
    %p68 = scmp.eq.s32.totalorder %s26, 1
    %p69 = por %p67, %p68
    %p70 = scmp.ne.s32.totalorder %s62, %s65
    %p71 = scmp.eq.s32.totalorder %s26, 0
    %p72 = por %p70, %p71
    %p73 = scmp.ne.s32.totalorder %s62, %s65
    %p74 = scmp.eq.s32.totalorder %s31, 1
    %p75 = por %p73, %p74
    %p76 = scmp.ne.s32.totalorder %s65, %s66
    %p77 = scmp.eq.s32.totalorder %s31, 0
    %p78 = por %p76, %p77
    %p79 = scmp.ne.s32.totalorder %s65, %s66
    %p80 = scmp.eq.s32.totalorder %s32, 1
    %p81 = por %p79, %p80
    %p83 = scmp.ne.s32.totalorder %s66, %s82
    %p84 = scmp.eq.s32.totalorder %s32, 0
    %p85 = por %p83, %p84
    %s87 = sadd.s32 %s86, 1
    %p90 = scmp.eq.s32.totalorder %s26, 1
    %p91 = scmp.ne.s32.totalorder %s86, %s88
    %p92 = scmp.eq.s32.totalorder %s26, 0
    %p93 = por %p91, %p92
    %p94 = scmp.ne.s32.totalorder %s86, %s88
    %p95 = scmp.eq.s32.totalorder %s31, 1
    %p96 = por %p94, %p95
    %p97 = scmp.ne.s32.totalorder %s88, %s89
    %p98 = scmp.eq.s32.totalorder %s31, 0
    %p99 = por %p97, %p98
    %p100 = scmp.ne.s32.totalorder %s88, %s89
    %p101 = scmp.eq.s32.totalorder %s32, 1
    %p102 = por %p100, %p101
    %p104 = scmp.ne.s32.totalorder %s89, %s103
    %p105 = scmp.eq.s32.totalorder %s32, 0
    %p106 = por %p104, %p105
    %s108 = sadd.s32 %s107, 1
    %p111 = scmp.eq.s32.totalorder %s26, 1
    %p112 = scmp.ne.s32.totalorder %s107, %s109
    %p113 = scmp.eq.s32.totalorder %s26, 0
    %p114 = por %p112, %p113
    %p115 = scmp.ne.s32.totalorder %s107, %s109
    %p116 = scmp.eq.s32.totalorder %s31, 1
    %p117 = por %p115, %p116
    %p118 = scmp.ne.s32.totalorder %s109, %s110
    %p119 = scmp.eq.s32.totalorder %s31, 0
    %p120 = por %p118, %p119
    %p121 = scmp.ne.s32.totalorder %s109, %s110
    %p122 = scmp.eq.s32.totalorder %s32, 1
    %p123 = por %p121, %p122
    %p125 = scmp.ne.s32.totalorder %s110, %s124
    %p126 = scmp.eq.s32.totalorder %s32, 0
    %p127 = por %p125, %p126
    %s129 = sadd.s32 %s128, 1
    %p132 = scmp.eq.s32.totalorder %s26, 1
    %p133 = scmp.ne.s32.totalorder %s128, %s130
    %p134 = scmp.eq.s32.totalorder %s26, 0
    %p135 = por %p133, %p134
    %p136 = scmp.ne.s32.totalorder %s128, %s130
    %p137 = scmp.eq.s32.totalorder %s31, 1
    %p138 = por %p136, %p137
    %p139 = scmp.ne.s32.totalorder %s130, %s131
    %p140 = scmp.eq.s32.totalorder %s31, 0
    %p141 = por %p139, %p140
    %p142 = scmp.ne.s32.totalorder %s130, %s131
    %p143 = scmp.eq.s32.totalorder %s32, 1
    %p144 = por %p142, %p143
    %p146 = scmp.ne.s32.totalorder %s131, %s145
    %p147 = scmp.eq.s32.totalorder %s32, 0
    %p148 = por %p146, %p147
    %s150 = sadd.s32 %s149, 1
    %p153 = scmp.eq.s32.totalorder %s26, 1
    %p154 = scmp.ne.s32.totalorder %s149, %s151
    %p155 = scmp.eq.s32.totalorder %s26, 0
    %p156 = por %p154, %p155
    %p157 = scmp.ne.s32.totalorder %s149, %s151
    %p158 = scmp.eq.s32.totalorder %s31, 1
    %p159 = por %p157, %p158
    %p160 = scmp.ne.s32.totalorder %s151, %s152
    %p161 = scmp.eq.s32.totalorder %s31, 0
    %p162 = por %p160, %p161
    %p163 = scmp.ne.s32.totalorder %s151, %s152
    %p164 = scmp.eq.s32.totalorder %s32, 1
    %p165 = por %p163, %p164
    %p167 = scmp.ne.s32.totalorder %s152, %s166
    %p168 = scmp.eq.s32.totalorder %s32, 0
    %p169 = por %p167, %p168
    %s171 = sadd.s32 %s170, 1
    %p174 = scmp.eq.s32.totalorder %s26, 1
    %p175 = scmp.ne.s32.totalorder %s170, %s172
    %p176 = scmp.eq.s32.totalorder %s26, 0
    %p177 = por %p175, %p176
    %p178 = scmp.ne.s32.totalorder %s170, %s172
    %p179 = scmp.eq.s32.totalorder %s31, 1
    %p180 = por %p178, %p179
    %p181 = scmp.ne.s32.totalorder %s172, %s173
    %p182 = scmp.eq.s32.totalorder %s31, 0
    %p183 = por %p181, %p182
    %p184 = scmp.ne.s32.totalorder %s172, %s173
    %p185 = scmp.eq.s32.totalorder %s32, 1
    %p186 = por %p184, %p185
    %p188 = scmp.ne.s32.totalorder %s173, %s187
    %p189 = scmp.eq.s32.totalorder %s32, 0
    %p190 = por %p188, %p189
    %s192 = sadd.s32 %s191, 1
    %p195 = scmp.eq.s32.totalorder %s26, 1
    %p196 = scmp.ne.s32.totalorder %s191, %s193
    %p197 = scmp.eq.s32.totalorder %s26, 0
    %p198 = por %p196, %p197
    %p199 = scmp.ne.s32.totalorder %s191, %s193
    %p200 = scmp.eq.s32.totalorder %s31, 1
    %p201 = por %p199, %p200
    %p202 = scmp.ne.s32.totalorder %s193, %s194
    %p203 = scmp.eq.s32.totalorder %s31, 0
    %p204 = por %p202, %p203
    %p205 = scmp.ne.s32.totalorder %s193, %s194
    %p206 = scmp.eq.s32.totalorder %s32, 1
    %p207 = por %p205, %p206
    %p209 = scmp.ne.s32.totalorder %s194, %s208
    %p210 = scmp.eq.s32.totalorder %s32, 0
    %p211 = por %p209, %p210
    %s213 = sadd.s32 %s212, 1
    %p216 = scmp.eq.s32.totalorder %s26, 1
    %p217 = scmp.ne.s32.totalorder %s212, %s214
    %p218 = scmp.eq.s32.totalorder %s26, 0
    %p219 = por %p217, %p218
    %p220 = scmp.ne.s32.totalorder %s212, %s214
    %p221 = scmp.eq.s32.totalorder %s31, 1
    %p222 = por %p220, %p221
    %p223 = scmp.ne.s32.totalorder %s214, %s215
    %p224 = scmp.eq.s32.totalorder %s31, 0
    %p225 = por %p223, %p224
    %p226 = scmp.ne.s32.totalorder %s214, %s215
    %p227 = scmp.eq.s32.totalorder %s32, 1
    %p228 = por %p226, %p227
    %p230 = scmp.ne.s32.totalorder %s215, %s229
    %p231 = scmp.eq.s32.totalorder %s32, 0
    %p232 = por %p230, %p231
    %s234 = sadd.s32 %s233, 1
    %p237 = scmp.eq.s32.totalorder %s26, 1
    %p238 = scmp.ne.s32.totalorder %s233, %s235
    %p239 = scmp.eq.s32.totalorder %s26, 0
    %p240 = por %p238, %p239
    %p241 = scmp.ne.s32.totalorder %s233, %s235
    %p242 = scmp.eq.s32.totalorder %s31, 1
    %p243 = por %p241, %p242
    %p244 = scmp.ne.s32.totalorder %s235, %s236
    %p245 = scmp.eq.s32.totalorder %s31, 0
    %p246 = por %p244, %p245
    %p247 = scmp.ne.s32.totalorder %s235, %s236
    %p248 = scmp.eq.s32.totalorder %s32, 1
    %p249 = por %p247, %p248
    %p251 = scmp.ne.s32.totalorder %s236, %s250
    %p252 = scmp.eq.s32.totalorder %s32, 0
    %p253 = por %p251, %p252
    %s255 = sadd.s32 %s254, 1
    %p258 = scmp.eq.s32.totalorder %s26, 1
    %p259 = scmp.ne.s32.totalorder %s254, %s256
    %p260 = scmp.eq.s32.totalorder %s26, 0
    %p261 = por %p259, %p260
    %p262 = scmp.ne.s32.totalorder %s254, %s256
    %p263 = scmp.eq.s32.totalorder %s31, 1
    %p264 = por %p262, %p263
    %p265 = scmp.ne.s32.totalorder %s256, %s257
    %p266 = scmp.eq.s32.totalorder %s31, 0
    %p267 = por %p265, %p266
    %p268 = scmp.ne.s32.totalorder %s256, %s257
    %p269 = scmp.eq.s32.totalorder %s32, 1
    %p270 = por %p268, %p269
    %p272 = scmp.ne.s32.totalorder %s257, %s271
    %p273 = scmp.eq.s32.totalorder %s32, 0
    %p274 = por %p272, %p273
    %s276 = sadd.s32 %s275, 1
    %p279 = scmp.eq.s32.totalorder %s26, 1
    %p280 = scmp.ne.s32.totalorder %s275, %s277
    %p281 = scmp.eq.s32.totalorder %s26, 0
    %p282 = por %p280, %p281
    %p283 = scmp.ne.s32.totalorder %s275, %s277
    %p284 = scmp.eq.s32.totalorder %s31, 1
    %p285 = por %p283, %p284
    %p286 = scmp.ne.s32.totalorder %s277, %s278
    %p287 = scmp.eq.s32.totalorder %s31, 0
    %p288 = por %p286, %p287
    %p289 = scmp.ne.s32.totalorder %s277, %s278
    %p290 = scmp.eq.s32.totalorder %s32, 1
    %p291 = por %p289, %p290
    %p293 = scmp.ne.s32.totalorder %s278, %s292
    %p294 = scmp.eq.s32.totalorder %s32, 0
    %p295 = por %p293, %p294
    %s297 = sadd.s32 %s296, 1
    %p300 = scmp.eq.s32.totalorder %s26, 1
    %p301 = scmp.ne.s32.totalorder %s296, %s298
    %p302 = scmp.eq.s32.totalorder %s26, 0
    %p303 = por %p301, %p302
    %p304 = scmp.ne.s32.totalorder %s296, %s298
    %p305 = scmp.eq.s32.totalorder %s31, 1
    %p306 = por %p304, %p305
    %p307 = scmp.ne.s32.totalorder %s298, %s299
    %p308 = scmp.eq.s32.totalorder %s31, 0
    %p309 = por %p307, %p308
    %p310 = scmp.ne.s32.totalorder %s298, %s299
    %p311 = scmp.eq.s32.totalorder %s32, 1
    %p312 = por %p310, %p311
    %p314 = scmp.ne.s32.totalorder %s299, %s313
    %p315 = scmp.eq.s32.totalorder %s32, 0
    %p316 = por %p314, %p315
    %s318 = sadd.s32 %s317, 1
    %p321 = scmp.eq.s32.totalorder %s26, 1
    %p322 = scmp.ne.s32.totalorder %s317, %s319
    %p323 = scmp.eq.s32.totalorder %s26, 0
    %p324 = por %p322, %p323
    %p325 = scmp.ne.s32.totalorder %s317, %s319
    %p326 = scmp.eq.s32.totalorder %s31, 1
    %p327 = por %p325, %p326
    %p328 = scmp.ne.s32.totalorder %s319, %s320
    %p329 = scmp.eq.s32.totalorder %s31, 0
    %p330 = por %p328, %p329
    %p331 = scmp.ne.s32.totalorder %s319, %s320
    %p332 = scmp.eq.s32.totalorder %s32, 1
    %p333 = por %p331, %p332
    %p335 = scmp.ne.s32.totalorder %s320, %s334
    %p336 = scmp.eq.s32.totalorder %s32, 0
    %p337 = por %p335, %p336
    %s339 = sadd.s32 %s338, 1
    %p342 = scmp.eq.s32.totalorder %s26, 1
    %p343 = scmp.ne.s32.totalorder %s338, %s340
    %p344 = scmp.eq.s32.totalorder %s26, 0
    %p345 = por %p343, %p344
    %p346 = scmp.ne.s32.totalorder %s338, %s340
    %p347 = scmp.eq.s32.totalorder %s31, 1
    %p348 = por %p346, %p347
    %p349 = scmp.ne.s32.totalorder %s340, %s341
    %p350 = scmp.eq.s32.totalorder %s31, 0
    %p351 = por %p349, %p350
    %p352 = scmp.ne.s32.totalorder %s340, %s341
    %p353 = scmp.eq.s32.totalorder %s32, 1
    %p354 = por %p352, %p353
    %p356 = scmp.ne.s32.totalorder %s341, %s355
    %p357 = scmp.eq.s32.totalorder %s32, 0
    %p358 = por %p356, %p357
    %s360 = sadd.s32 %s359, 1
    %p363 = scmp.eq.s32.totalorder %s26, 1
    %p364 = scmp.ne.s32.totalorder %s359, %s361
    %p365 = scmp.eq.s32.totalorder %s26, 0
    %p366 = por %p364, %p365
    %p367 = scmp.ne.s32.totalorder %s359, %s361
    %p368 = scmp.eq.s32.totalorder %s31, 1
    %p369 = por %p367, %p368
    %p370 = scmp.ne.s32.totalorder %s361, %s362
    %p371 = scmp.eq.s32.totalorder %s31, 0
    %p372 = por %p370, %p371
    %p373 = scmp.ne.s32.totalorder %s361, %s362
    %p374 = scmp.eq.s32.totalorder %s32, 1
    %p375 = por %p373, %p374
    %p377 = scmp.ne.s32.totalorder %s362, %s376
    %p378 = scmp.eq.s32.totalorder %s32, 0
    %p379 = por %p377, %p378
    %s381 = sadd.s32 %s380, 1
    %p384 = scmp.eq.s32.totalorder %s26, 1
    %p385 = scmp.ne.s32.totalorder %s380, %s382
    %p386 = scmp.eq.s32.totalorder %s26, 0
    %p387 = por %p385, %p386
    %p388 = scmp.ne.s32.totalorder %s380, %s382
    %p389 = scmp.eq.s32.totalorder %s31, 1
    %p390 = por %p388, %p389
    %p391 = scmp.ne.s32.totalorder %s382, %s383
    %p392 = scmp.eq.s32.totalorder %s31, 0
    %p393 = por %p391, %p392
    %p394 = scmp.ne.s32.totalorder %s382, %s383
    %p395 = scmp.eq.s32.totalorder %s32, 1
    %p396 = por %p394, %p395
    %p398 = scmp.ne.s32.totalorder %s383, %s397
    %p399 = scmp.eq.s32.totalorder %s32, 0
    %p400 = por %p398, %p399
    %s402 = sadd.s32 %s401, 1
    %p405 = scmp.eq.s32.totalorder %s26, 1
    %p406 = scmp.ne.s32.totalorder %s401, %s403
    %p407 = scmp.eq.s32.totalorder %s26, 0
    %p408 = por %p406, %p407
    %p409 = scmp.ne.s32.totalorder %s401, %s403
    %p410 = scmp.eq.s32.totalorder %s31, 1
    %p411 = por %p409, %p410
    %p412 = scmp.ne.s32.totalorder %s403, %s404
    %p413 = scmp.eq.s32.totalorder %s31, 0
    %p414 = por %p412, %p413
    %p415 = scmp.ne.s32.totalorder %s403, %s404
    %p416 = scmp.eq.s32.totalorder %s32, 1
    %p417 = por %p415, %p416
    %p419 = scmp.ne.s32.totalorder %s404, %s418
    %p420 = scmp.eq.s32.totalorder %s32, 0
    %p421 = por %p419, %p420
    %s422 = ssub.s32 %s26, %s33
    %p423 = scmp.eq.s32.totalorder %s422, 0
    %s425 = sadd.s32 %s424, 1
    %s426 = scalar_select %p423, %s424, %s425
    %p429 = pneg %p423
    %p430 = scmp.eq.s32.totalorder %s26, 1
    %p431 = por %p429, %p430
    %p432 = scmp.ne.s32.totalorder %s424, %s427
    %p433 = scmp.eq.s32.totalorder %s26, 0
    %p434 = por %p432, %p433
    %p435 = scmp.ne.s32.totalorder %s424, %s427
    %p436 = scmp.eq.s32.totalorder %s31, 1
    %p437 = por %p435, %p436
    %p438 = scmp.ne.s32.totalorder %s427, %s428
    %p439 = scmp.eq.s32.totalorder %s31, 0
    %p440 = por %p438, %p439
    %p441 = scmp.ne.s32.totalorder %s427, %s428
    %p442 = scmp.eq.s32.totalorder %s32, 1
    %p443 = por %p441, %p442
    %p445 = scmp.ne.s32.totalorder %s428, %s444
    %p446 = scmp.eq.s32.totalorder %s32, 0
    %p447 = por %p445, %p446
    %s448 = ssub.s32 %s26, %s33
    %p449 = scmp.eq.s32.totalorder %s448, 0
    %s451 = sadd.s32 %s450, 1
    %s452 = scalar_select %p449, %s450, %s451
    %p455 = pneg %p449
    %p456 = scmp.eq.s32.totalorder %s26, 1
    %p457 = por %p455, %p456
    %p458 = scmp.ne.s32.totalorder %s450, %s453
    %p459 = scmp.eq.s32.totalorder %s26, 0
    %p460 = por %p458, %p459
    %p461 = scmp.ne.s32.totalorder %s450, %s453
    %p462 = scmp.eq.s32.totalorder %s31, 1
    %p463 = por %p461, %p462
    %p464 = scmp.ne.s32.totalorder %s453, %s454
    %p465 = scmp.eq.s32.totalorder %s31, 0
    %p466 = por %p464, %p465
    %p467 = scmp.ne.s32.totalorder %s453, %s454
    %p468 = scmp.eq.s32.totalorder %s32, 1
    %p469 = por %p467, %p468
    %p471 = scmp.ne.s32.totalorder %s454, %s470
    %p472 = scmp.eq.s32.totalorder %s32, 0
    %p473 = por %p471, %p472
    %p474 = scmp.le.s32.totalorder 1, %s26
    %p475 = scmp.lt.s32.totalorder %s26, 3
    %p476 = pnand %p474, %p475
    %p477 = pneg %p476
    // Predicated region
    $region9: #{hr_module_forward.1} parent=5 // pred_check
      _
    $region10: #{hr_module_forward.1} parent=5 // pred_check_branch
      %479 = sbr.rel (%p476) target = $region12
    $region11: #{hr_module_forward.1} parent=5 // pred_region
      %s480 = ssub.s32 %s26, 1
      // Predicated region
      $region13: #{hr_module_forward.1} parent=11 // pred_check
        %p481 = pneg %p99
      $region14: #{hr_module_forward.1} parent=11 // pred_check_branch
        %483 = sbr.rel (%p481) target = $region16
      $region15: #{hr_module_forward.1} parent=11 // pred_region
        _
      $region16: #{hr_module_forward.1} parent=11 // pred_fallthru
        _
      // Predicated region
      $region17: #{hr_module_forward.1} parent=11 // pred_check
        %p484 = pneg %p120
      $region18: #{hr_module_forward.1} parent=11 // pred_check_branch
        %486 = sbr.rel (%p484) target = $region20
      $region19: #{hr_module_forward.1} parent=11 // pred_region
        _
      $region20: #{hr_module_forward.1} parent=11 // pred_fallthru
        _
      // Predicated region
      $region21: #{hr_module_forward.1} parent=11 // pred_check
        %p487 = pneg %p141
      $region22: #{hr_module_forward.1} parent=11 // pred_check_branch
        %489 = sbr.rel (%p487) target = $region24
      $region23: #{hr_module_forward.1} parent=11 // pred_region
        _
      $region24: #{hr_module_forward.1} parent=11 // pred_fallthru
        _
      // Predicated region
      $region25: #{hr_module_forward.1} parent=11 // pred_check
        %p490 = pneg %p162
      $region26: #{hr_module_forward.1} parent=11 // pred_check_branch
        %492 = sbr.rel (%p490) target = $region28
      $region27: #{hr_module_forward.1} parent=11 // pred_region
        _
      $region28: #{hr_module_forward.1} parent=11 // pred_fallthru
        _
      // Predicated region
      $region29: #{hr_module_forward.1} parent=11 // pred_check
        %p493 = pneg %p183
      $region30: #{hr_module_forward.1} parent=11 // pred_check_branch
        %495 = sbr.rel (%p493) target = $region32
      $region31: #{hr_module_forward.1} parent=11 // pred_region
        _
      $region32: #{hr_module_forward.1} parent=11 // pred_fallthru
        _
      // Predicated region
      $region33: #{hr_module_forward.1} parent=11 // pred_check
        %p496 = pneg %p204
      $region34: #{hr_module_forward.1} parent=11 // pred_check_branch
        %498 = sbr.rel (%p496) target = $region36
      $region35: #{hr_module_forward.1} parent=11 // pred_region
        _
      $region36: #{hr_module_forward.1} parent=11 // pred_fallthru
        _
      // Predicated region
      $region37: #{hr_module_forward.1} parent=11 // pred_check
        %p499 = pneg %p225
      $region38: #{hr_module_forward.1} parent=11 // pred_check_branch
        %501 = sbr.rel (%p499) target = $region40
      $region39: #{hr_module_forward.1} parent=11 // pred_region
        _
      $region40: #{hr_module_forward.1} parent=11 // pred_fallthru
        _
      // Predicated region
      $region41: #{hr_module_forward.1} parent=11 // pred_check
        %p502 = pneg %p246
      $region42: #{hr_module_forward.1} parent=11 // pred_check_branch
        %504 = sbr.rel (%p502) target = $region44
      $region43: #{hr_module_forward.1} parent=11 // pred_region
        _
      $region44: #{hr_module_forward.1} parent=11 // pred_fallthru
        _
      // Predicated region
      $region45: #{hr_module_forward.1} parent=11 // pred_check
        %p505 = pneg %p267
      $region46: #{hr_module_forward.1} parent=11 // pred_check_branch
        %507 = sbr.rel (%p505) target = $region48
      $region47: #{hr_module_forward.1} parent=11 // pred_region
        _
      $region48: #{hr_module_forward.1} parent=11 // pred_fallthru
        _
      // Predicated region
      $region49: #{hr_module_forward.1} parent=11 // pred_check
        %p508 = pneg %p288
      $region50: #{hr_module_forward.1} parent=11 // pred_check_branch
        %510 = sbr.rel (%p508) target = $region52
      $region51: #{hr_module_forward.1} parent=11 // pred_region
        _
      $region52: #{hr_module_forward.1} parent=11 // pred_fallthru
        _
      // Predicated region
      $region53: #{hr_module_forward.1} parent=11 // pred_check
        %p511 = pneg %p309
      $region54: #{hr_module_forward.1} parent=11 // pred_check_branch
        %513 = sbr.rel (%p511) target = $region56
      $region55: #{hr_module_forward.1} parent=11 // pred_region
        _
      $region56: #{hr_module_forward.1} parent=11 // pred_fallthru
        _
      // Predicated region
      $region57: #{hr_module_forward.1} parent=11 // pred_check
        %p514 = pneg %p330
      $region58: #{hr_module_forward.1} parent=11 // pred_check_branch
        %516 = sbr.rel (%p514) target = $region60
      $region59: #{hr_module_forward.1} parent=11 // pred_region
        _
      $region60: #{hr_module_forward.1} parent=11 // pred_fallthru
        _
      // Predicated region
      $region61: #{hr_module_forward.1} parent=11 // pred_check
        %p517 = pneg %p351
      $region62: #{hr_module_forward.1} parent=11 // pred_check_branch
        %519 = sbr.rel (%p517) target = $region64
      $region63: #{hr_module_forward.1} parent=11 // pred_region
        _
      $region64: #{hr_module_forward.1} parent=11 // pred_fallthru
        _
      // Predicated region
      $region65: #{hr_module_forward.1} parent=11 // pred_check
        %p520 = pneg %p372
      $region66: #{hr_module_forward.1} parent=11 // pred_check_branch
        %522 = sbr.rel (%p520) target = $region68
      $region67: #{hr_module_forward.1} parent=11 // pred_region
        _
      $region68: #{hr_module_forward.1} parent=11 // pred_fallthru
        _
      // Predicated region
      $region69: #{hr_module_forward.1} parent=11 // pred_check
        %p523 = pneg %p393
      $region70: #{hr_module_forward.1} parent=11 // pred_check_branch
        %525 = sbr.rel (%p523) target = $region72
      $region71: #{hr_module_forward.1} parent=11 // pred_region
        _
      $region72: #{hr_module_forward.1} parent=11 // pred_fallthru
        _
      // Predicated region
      $region73: #{hr_module_forward.1} parent=11 // pred_check
        %p526 = pneg %p414
      $region74: #{hr_module_forward.1} parent=11 // pred_check_branch
        %528 = sbr.rel (%p526) target = $region76
      $region75: #{hr_module_forward.1} parent=11 // pred_region
        _
      $region76: #{hr_module_forward.1} parent=11 // pred_fallthru
        _
    $region12: #{hr_module_forward.1} parent=5 // pred_fallthru
      _
    %p529 = scmp.lt.s32.totalorder %s26, 2
    // Predicated region
    $region77: #{hr_module_forward.1} parent=5 // pred_check
      %p530 = pneg %p529
    $region78: #{hr_module_forward.1} parent=5 // pred_check_branch
      %532 = sbr.rel (%p530) target = $region80
    $region79: #{hr_module_forward.1} parent=5 // pred_region
      // Predicated region
      $region81: #{hr_module_forward.1} parent=79 // pred_check
        %p533 = pneg %p46
      $region82: #{hr_module_forward.1} parent=79 // pred_check_branch
        %535 = sbr.rel (%p533) target = $region84
      $region83: #{hr_module_forward.1} parent=79 // pred_region
        %p536 = scmp.lt.s32.totalorder %s26, 1
        %s537 = scalar_select %p536, %s26, 1
        %s538 = smul.addr %s537, 2
        %s539 = smul.addr %s538, 4
        %s540 = scalar_lea.vmem %s0, %s539
      $region84: #{hr_module_forward.1} parent=79 // pred_fallthru
        _
      // Predicated region
      $region85: #{hr_module_forward.1} parent=79 // pred_check
        %p541 = pneg %p72
      $region86: #{hr_module_forward.1} parent=79 // pred_check_branch
        %543 = sbr.rel (%p541) target = $region88
      $region87: #{hr_module_forward.1} parent=79 // pred_region
        %p544 = scmp.lt.s32.totalorder %s26, 1
        %s545 = scalar_select %p544, %s26, 1
        %s546 = smul.addr %s545, 8
        %s547 = scalar_lea.vmem %s1, %s546
      $region88: #{hr_module_forward.1} parent=79 // pred_fallthru
        _
    $region80: #{hr_module_forward.1} parent=5 // pred_fallthru
      _
    %p548 = scmp.le.s32.totalorder 1, %s26
    %p549 = scmp.lt.s32.totalorder %s26, 3
    %p550 = pnand %p548, %p549
    %p551 = pneg %p550
    // Predicated region
    $region89: #{hr_module_forward.1} parent=5 // pred_check
      _
    $region90: #{hr_module_forward.1} parent=5 // pred_check_branch
      %553 = sbr.rel (%p550) target = $region92
    $region91: #{hr_module_forward.1} parent=5 // pred_region
      %s554 = ssub.s32 %s26, 1
      %p555 = scmp.lt.s32.totalorder %s31, 1
      %s556 = scalar_select %p555, %s31, 1
      %s557 = smul.addr %s556, 2
      %s558 = smul.addr %s557, 4
      %s559 = scalar_lea.vmem %s0, %s558
      %p560 = pneg %p52
      %p561 = pneg %p49
      %p562 = scmp.lt.s32.totalorder %s31, 1
      %s563 = scalar_select %p562, %s31, 1
      %s564 = smul.addr %s563, 8
      %s565 = scalar_lea.vmem %s1, %s564
      %p566 = pneg %p78
      %p567 = pneg %p75
      %p568 = pneg %p99
      %p569 = pneg %p96
      %p570 = pneg %p120
      %p571 = pneg %p117
      %p572 = pneg %p141
      %p573 = pneg %p138
      %p574 = pneg %p162
      %p575 = pneg %p159
      %p576 = pneg %p183
      %p577 = pneg %p180
      %p578 = pneg %p204
      %p579 = pneg %p201
      %p580 = pneg %p225
      %p581 = pneg %p222
      %p582 = pneg %p246
      %p583 = pneg %p243
      %p584 = pneg %p267
      %p585 = pneg %p264
      %p586 = pneg %p288
      %p587 = pneg %p285
      %p588 = pneg %p309
      %p589 = pneg %p306
      %p590 = pneg %p330
      %p591 = pneg %p327
      %p592 = pneg %p351
      %p593 = pneg %p348
      %p594 = pneg %p372
      %p595 = pneg %p369
      %p596 = pneg %p393
      %p597 = pneg %p390
      %p598 = pneg %p414
      %p599 = pneg %p411
      %p600 = pneg %p440
      %p601 = pneg %p437
      %p602 = scmp.lt.s32.totalorder %s31, 1
      %s603 = scalar_select %p602, %s31, 1
      %s604 = smul.addr %s603, 2
      %s605 = smul.addr %s604, 4
      %s606 = scalar_lea.vmem %s18, %s605
      %p607 = pneg %p466
      %p608 = pneg %p463
      %p609 = scmp.lt.s32.totalorder %s31, 1
      %s610 = scalar_select %p609, %s31, 1
      %s611 = smul.addr %s610, 8
      %s612 = scalar_lea.vmem %s19, %s611
      %p613 = scmp.lt.s32.totalorder %s31, 1
      %s614 = scalar_select %p613, %s31, 1
      %s615 = smul.addr %s614, 2
      %s616 = smul.addr %s615, 4
      %s617 = scalar_lea.vmem %s0, %s616
      %p618 = scmp.lt.s32.totalorder %s31, 1
      %s619 = scalar_select %p618, %s31, 1
      %s620 = smul.addr %s619, 8
      %s621 = scalar_lea.vmem %s1, %s620
      %p622 = scmp.lt.s32.totalorder %s31, 1
      %s623 = scalar_select %p622, %s31, 1
      %s624 = smul.addr %s623, 2
      %s625 = smul.addr %s624, 4
      %s626 = scalar_lea.vmem %s18, %s625
      %p627 = scmp.lt.s32.totalorder %s31, 1
      %s628 = scalar_select %p627, %s31, 1
      %s629 = smul.addr %s628, 8
      %s630 = scalar_lea.vmem %s19, %s629
      %v631 = vld [vmem:[%s617] sm:$0xff]
      %v632 = vld [vmem:[%s621] sm:$0xff]
      %v634 = vcombine.high %v631, %v631
      %636 = vrot.lane.b32.xlu0 %v631, 17
      %v637 = vpop.permute.xlu0 %636
      %638 = vrot.lane.b32.xlu0 %v634, 17
      %v639 = vpop.permute.xlu0 %638
      %v640 = vlaneseq
      %v641 = vand.u32 %v640, 127
      %vm642 = vcmp.lt.s32.totalorder %v641, 17
      %v643 = vsel %vm642, %v637, %v639
      %v644 = vsel %vm642, %v639, %v637
      %v645 = vld [vmem:[%s14] ss:$8 sm:$0x3]
      %v647 = vlaneseq
      %v648 = vshrl.u32 %v647, 7
      %v649 = vsub.s32 0, %v648
      %v650 = vrot.slane %v645, %v649
      %v651 = vlaneseq
      %v652 = vshrl.u32 %v651, 7
      %v653 = vsub.s32 1, %v652
      %v654 = vrot.slane %v645, %v653
      %v657 = vmul.f32 %v644, %v650
      %v658 = vmul.f32 %v643, %v654
      %v659 = vld [vmem:[%s2] sm:$0xf]
      %660 = vrot.lane.b32.xlu0 %v631, 16
      %v661 = vpop.permute.xlu0 %660
      %662 = vrot.lane.b32.xlu0 %v634, 16
      %v663 = vpop.permute.xlu0 %662
      %vm664 = vcmp.lt.s32.totalorder %v641, 16
      %v665 = vsel %vm664, %v661, %v663
      %v666 = vsel %vm664, %v663, %v661
      %s667 = scalar_lea.vmem %s14, 1
      %v668 = vld [vmem:[%s667] ss:$8 sm:$0x3]
      %v670 = vlaneseq
      %v671 = vshrl.u32 %v670, 7
      %v672 = vsub.s32 0, %v671
      %v673 = vrot.slane %v668, %v672
      %v674 = vlaneseq
      %v675 = vshrl.u32 %v674, 7
      %v676 = vsub.s32 1, %v675
      %v677 = vrot.slane %v668, %v676
      %v680 = vmul.f32 %v666, %v673
      %v681 = vmul.f32 %v665, %v677
      %s682 = scalar_lea.vmem %s2, 4
      %v683 = vld [vmem:[%s682] sm:$0xf]
      %vm684 = vcmask 31744
      %v686 = vsel %vm684, %v683, 0
      %vm688 = vcmask 1043456
      %v690 = vsel %vm688, %v680, 0
      %v693 = vsel %vm688, %v681, 0
      %695 = vmatprep.subr.mxu0 %v693
      %696 = vmatpush1.msra.mxu0 %v690
      %697 = vmatprep.subr.mxu0 0.0
      %698 = vmatpush1.msra.mxu0 0.0
      %699 = vmatprep.subr.mxu0 0.0
      %700 = vmatpush1.msra.mxu0 0.0
      %701 = vmatprep.subr.mxu0 0.0
      %702 = vmatpush1.msra.mxu0 0.0
      %703 = vmatprep.subr.mxu0 0.0
      %704 = vmatpush1.msra.mxu0 0.0
      %705 = vmatprep.subr.mxu0 0.0
      %706 = vmatpush1.msra.mxu0 0.0
      %707 = vmatprep.subr.mxu0 0.0
      %708 = vmatpush1.msra.mxu0 0.0
      %709 = vmatprep.subr.mxu0 0.0
      %710 = vmatpush1.msra.mxu0 0.0
      %711 = vmatprep.subr.mxu0 0.0
      %712 = vmatpush1.msra.mxu0 0.0
      %713 = vmatprep.subr.mxu0 0.0
      %714 = vmatpush1.msra.mxu0 0.0
      %715 = vmatprep.subr.mxu0 0.0
      %716 = vmatpush1.msra.mxu0 0.0
      %717 = vmatprep.subr.mxu0 0.0
      %718 = vmatpush1.msra.mxu0 0.0
      %719 = vmatprep.subr.mxu0 0.0
      %720 = vmatpush1.msra.mxu0 0.0
      %721 = vmatprep.subr.mxu0 0.0
      %722 = vmatpush1.msra.mxu0 0.0
      %723 = vmatprep.subr.mxu0 0.0
      %724 = vmatpush1.msra.mxu0 0.0
      %725 = vmatprep.subr.mxu0 0.0
      %726 = vmatpush1.msra.mxu0 0.0
      %727 = vmatprep.subr.mxu0 0.0
      %728 = vmatpush1.msra.mxu0 0.0
      %729 = vmatprep.subr.mxu0 0.0
      %730 = vmatpush1.msra.mxu0 0.0
      %731 = vmatprep.subr.mxu0 0.0
      %732 = vmatpush1.msra.mxu0 0.0
      %733 = vmatprep.subr.mxu0 0.0
      %734 = vmatpush1.msra.mxu0 0.0
      %735 = vmatprep.subr.mxu0 0.0
      %736 = vmatpush1.msra.mxu0 0.0
      %737 = vmatprep.subr.mxu0 0.0
      %738 = vmatpush1.msra.mxu0 0.0
      %739 = vmatprep.subr.mxu0 0.0
      %740 = vmatpush1.msra.mxu0 0.0
      %741 = vmatprep.subr.mxu0 0.0
      %742 = vmatpush1.msra.mxu0 0.0
      %743 = vmatprep.subr.mxu0 0.0
      %744 = vmatpush1.msra.mxu0 0.0
      %745 = vmatprep.subr.mxu0 0.0
      %746 = vmatpush1.msra.mxu0 0.0
      %747 = vmatprep.subr.mxu0 0.0
      %748 = vmatpush1.msra.mxu0 0.0
      %749 = vmatprep.subr.mxu0 0.0
      %750 = vmatpush1.msra.mxu0 0.0
      %751 = vmatprep.subr.mxu0 0.0
      %752 = vmatpush1.msra.mxu0 0.0
      %753 = vmatprep.subr.mxu0 0.0
      %754 = vmatpush1.msra.mxu0 0.0
      %755 = vmatprep.subr.mxu0 0.0
      %756 = vmatpush1.msra.mxu0 0.0
      %757 = vmatprep.subr.mxu0 0.0
      %758 = vmatpush1.msra.mxu0 0.0
      %759 = vmatprep.mubr.f32.mxu0 0.0
      %760 = vmatmul.mubr.f32.gmra.mrb[0].mxu0 %v686
      %v761 = vpop.f32.mrb[0].mxu0
      %v762 = vadd.f32 0.0, %v761
      %v763 = vpop.f32.mrb[0].mxu0
      %v764 = vadd.f32 0.0, %v763
      %765 = vdwg.mxu0
      %v767 = vsel %vm684, %v659, 0
      %v770 = vsel %vm688, %v657, 0
      %v773 = vsel %vm688, %v658, 0
      %775 = vmatprep.subr.mxu0 %v773
      %776 = vmatpush1.msra.mxu0 %v770
      %777 = vmatprep.subr.mxu0 0.0
      %778 = vmatpush1.msra.mxu0 0.0
      %779 = vmatprep.subr.mxu0 0.0
      %780 = vmatpush1.msra.mxu0 0.0
      %781 = vmatprep.subr.mxu0 0.0
      %782 = vmatpush1.msra.mxu0 0.0
      %783 = vmatprep.subr.mxu0 0.0
      %784 = vmatpush1.msra.mxu0 0.0
      %785 = vmatprep.subr.mxu0 0.0
      %786 = vmatpush1.msra.mxu0 0.0
      %787 = vmatprep.subr.mxu0 0.0
      %788 = vmatpush1.msra.mxu0 0.0
      %789 = vmatprep.subr.mxu0 0.0
      %790 = vmatpush1.msra.mxu0 0.0
      %791 = vmatprep.subr.mxu0 0.0
      %792 = vmatpush1.msra.mxu0 0.0
      %793 = vmatprep.subr.mxu0 0.0
      %794 = vmatpush1.msra.mxu0 0.0
      %795 = vmatprep.subr.mxu0 0.0
      %796 = vmatpush1.msra.mxu0 0.0
      %797 = vmatprep.subr.mxu0 0.0
      %798 = vmatpush1.msra.mxu0 0.0
      %799 = vmatprep.subr.mxu0 0.0
      %800 = vmatpush1.msra.mxu0 0.0
      %801 = vmatprep.subr.mxu0 0.0
      %802 = vmatpush1.msra.mxu0 0.0
      %803 = vmatprep.subr.mxu0 0.0
      %804 = vmatpush1.msra.mxu0 0.0
      %805 = vmatprep.subr.mxu0 0.0
      %806 = vmatpush1.msra.mxu0 0.0
      %807 = vmatprep.subr.mxu0 0.0
      %808 = vmatpush1.msra.mxu0 0.0
      %809 = vmatprep.subr.mxu0 0.0
      %810 = vmatpush1.msra.mxu0 0.0
      %811 = vmatprep.subr.mxu0 0.0
      %812 = vmatpush1.msra.mxu0 0.0
      %813 = vmatprep.subr.mxu0 0.0
      %814 = vmatpush1.msra.mxu0 0.0
      %815 = vmatprep.subr.mxu0 0.0
      %816 = vmatpush1.msra.mxu0 0.0
      %817 = vmatprep.subr.mxu0 0.0
      %818 = vmatpush1.msra.mxu0 0.0
      %819 = vmatprep.subr.mxu0 0.0
      %820 = vmatpush1.msra.mxu0 0.0
      %821 = vmatprep.subr.mxu0 0.0
      %822 = vmatpush1.msra.mxu0 0.0
      %823 = vmatprep.subr.mxu0 0.0
      %824 = vmatpush1.msra.mxu0 0.0
      %825 = vmatprep.subr.mxu0 0.0
      %826 = vmatpush1.msra.mxu0 0.0
      %827 = vmatprep.subr.mxu0 0.0
      %828 = vmatpush1.msra.mxu0 0.0
      %829 = vmatprep.subr.mxu0 0.0
      %830 = vmatpush1.msra.mxu0 0.0
      %831 = vmatprep.subr.mxu0 0.0
      %832 = vmatpush1.msra.mxu0 0.0
      %833 = vmatprep.subr.mxu0 0.0
      %834 = vmatpush1.msra.mxu0 0.0
      %835 = vmatprep.subr.mxu0 0.0
      %836 = vmatpush1.msra.mxu0 0.0
      %837 = vmatprep.subr.mxu0 0.0
      %838 = vmatpush1.msra.mxu0 0.0
      %839 = vmatprep.mubr.f32.mxu0 0.0
      %840 = vmatmul.mubr.f32.gmra.mrb[0].mxu0 %v767
      %v841 = vpop.f32.mrb[0].mxu0
      %v842 = vadd.f32 %v762, %v841
      %v843 = vpop.f32.mrb[0].mxu0
      %v844 = vadd.f32 %v764, %v843
      %845 = vdwg.mxu0
      %846 = vrot.lane.b32.xlu0 %v631, 15
      %v847 = vpop.permute.xlu0 %846
      %848 = vrot.lane.b32.xlu0 %v634, 15
      %v849 = vpop.permute.xlu0 %848
      %vm850 = vcmp.lt.s32.totalorder %v641, 15
      %v851 = vsel %vm850, %v847, %v849
      %v852 = vsel %vm850, %v849, %v847
      %s853 = scalar_lea.vmem %s14, 2
      %v854 = vld [vmem:[%s853] ss:$8 sm:$0x3]
      %v856 = vlaneseq
      %v857 = vshrl.u32 %v856, 7
      %v858 = vsub.s32 0, %v857
      %v859 = vrot.slane %v854, %v858
      %v860 = vlaneseq
      %v861 = vshrl.u32 %v860, 7
      %v862 = vsub.s32 1, %v861
      %v863 = vrot.slane %v854, %v862
      %v866 = vmul.f32 %v852, %v859
      %v867 = vmul.f32 %v851, %v863
      %s868 = scalar_lea.vmem %s2, 8
      %v869 = vld [vmem:[%s868] sm:$0xf]
      %v871 = vsel %vm684, %v869, 0
      %v874 = vsel %vm688, %v866, 0
      %v877 = vsel %vm688, %v867, 0
      %879 = vmatprep.subr.mxu0 %v877
      %880 = vmatpush1.msra.mxu0 %v874
      %881 = vmatprep.subr.mxu0 0.0
      %882 = vmatpush1.msra.mxu0 0.0
      %883 = vmatprep.subr.mxu0 0.0
      %884 = vmatpush1.msra.mxu0 0.0
      %885 = vmatprep.subr.mxu0 0.0
      %886 = vmatpush1.msra.mxu0 0.0
      %887 = vmatprep.subr.mxu0 0.0
      %888 = vmatpush1.msra.mxu0 0.0
      %889 = vmatprep.subr.mxu0 0.0
      %890 = vmatpush1.msra.mxu0 0.0
      %891 = vmatprep.subr.mxu0 0.0
      %892 = vmatpush1.msra.mxu0 0.0
      %893 = vmatprep.subr.mxu0 0.0
      %894 = vmatpush1.msra.mxu0 0.0
      %895 = vmatprep.subr.mxu0 0.0
      %896 = vmatpush1.msra.mxu0 0.0
      %897 = vmatprep.subr.mxu0 0.0
      %898 = vmatpush1.msra.mxu0 0.0
      %899 = vmatprep.subr.mxu0 0.0
      %900 = vmatpush1.msra.mxu0 0.0
      %901 = vmatprep.subr.mxu0 0.0
      %902 = vmatpush1.msra.mxu0 0.0
      %903 = vmatprep.subr.mxu0 0.0
      %904 = vmatpush1.msra.mxu0 0.0
      %905 = vmatprep.subr.mxu0 0.0
      %906 = vmatpush1.msra.mxu0 0.0
      %907 = vmatprep.subr.mxu0 0.0
      %908 = vmatpush1.msra.mxu0 0.0
      %909 = vmatprep.subr.mxu0 0.0
      %910 = vmatpush1.msra.mxu0 0.0
      %911 = vmatprep.subr.mxu0 0.0
      %912 = vmatpush1.msra.mxu0 0.0
      %913 = vmatprep.subr.mxu0 0.0
      %914 = vmatpush1.msra.mxu0 0.0
      %915 = vmatprep.subr.mxu0 0.0
      %916 = vmatpush1.msra.mxu0 0.0
      %917 = vmatprep.subr.mxu0 0.0
      %918 = vmatpush1.msra.mxu0 0.0
      %919 = vmatprep.subr.mxu0 0.0
      %920 = vmatpush1.msra.mxu0 0.0
      %921 = vmatprep.subr.mxu0 0.0
      %922 = vmatpush1.msra.mxu0 0.0
      %923 = vmatprep.subr.mxu0 0.0
      %924 = vmatpush1.msra.mxu0 0.0
      %925 = vmatprep.subr.mxu0 0.0
      %926 = vmatpush1.msra.mxu0 0.0
      %927 = vmatprep.subr.mxu0 0.0
      %928 = vmatpush1.msra.mxu0 0.0
      %929 = vmatprep.subr.mxu0 0.0
      %930 = vmatpush1.msra.mxu0 0.0
      %931 = vmatprep.subr.mxu0 0.0
      %932 = vmatpush1.msra.mxu0 0.0
      %933 = vmatprep.subr.mxu0 0.0
      %934 = vmatpush1.msra.mxu0 0.0
      %935 = vmatprep.subr.mxu0 0.0
      %936 = vmatpush1.msra.mxu0 0.0
      %937 = vmatprep.subr.mxu0 0.0
      %938 = vmatpush1.msra.mxu0 0.0
      %939 = vmatprep.subr.mxu0 0.0
      %940 = vmatpush1.msra.mxu0 0.0
      %941 = vmatprep.subr.mxu0 0.0
      %942 = vmatpush1.msra.mxu0 0.0
      %943 = vmatprep.mubr.f32.mxu0 0.0
      %944 = vmatmul.mubr.f32.gmra.mrb[0].mxu0 %v871
      %v945 = vpop.f32.mrb[0].mxu0
      %v946 = vadd.f32 0.0, %v945
      %v947 = vpop.f32.mrb[0].mxu0
      %v948 = vadd.f32 0.0, %v947
      %949 = vdwg.mxu0
      %v950 = vadd.f32 %v842, %v946
      %v951 = vadd.f32 %v844, %v948
      %952 = vrot.lane.b32.xlu0 %v631, 1
      %v953 = vpop.permute.xlu0 %952
      %954 = vrot.lane.b32.xlu0 %v634, 1
      %v955 = vpop.permute.xlu0 %954
      %vm956 = vcmp.lt.s32.totalorder %v641, 1
      %v957 = vsel %vm956, %v953, %v955
      %v958 = vsel %vm956, %v955, %v953
      %s959 = scalar_lea.vmem %s14, 3
      %v960 = vld [vmem:[%s959] ss:$8 sm:$0x3]
      %v962 = vlaneseq
      %v963 = vshrl.u32 %v962, 7
      %v964 = vsub.s32 0, %v963
      %v965 = vrot.slane %v960, %v964
      %v966 = vlaneseq
      %v967 = vshrl.u32 %v966, 7
      %v968 = vsub.s32 1, %v967
      %v969 = vrot.slane %v960, %v968
      %v972 = vmul.f32 %v958, %v965
      %v973 = vmul.f32 %v957, %v969
      %s974 = scalar_lea.vmem %s2, 12
      %v975 = vld [vmem:[%s974] sm:$0xf]
      %v977 = vsel %vm684, %v975, 0
      %v980 = vsel %vm688, %v972, 0
      %v983 = vsel %vm688, %v973, 0
      %985 = vmatprep.subr.mxu0 %v983
      %986 = vmatpush1.msra.mxu0 %v980
      %987 = vmatprep.subr.mxu0 0.0
      %988 = vmatpush1.msra.mxu0 0.0
      %989 = vmatprep.subr.mxu0 0.0
      %990 = vmatpush1.msra.mxu0 0.0
      %991 = vmatprep.subr.mxu0 0.0
      %992 = vmatpush1.msra.mxu0 0.0
      %993 = vmatprep.subr.mxu0 0.0
      %994 = vmatpush1.msra.mxu0 0.0
      %995 = vmatprep.subr.mxu0 0.0
      %996 = vmatpush1.msra.mxu0 0.0
      %997 = vmatprep.subr.mxu0 0.0
      %998 = vmatpush1.msra.mxu0 0.0
      %999 = vmatprep.subr.mxu0 0.0
      %1000 = vmatpush1.msra.mxu0 0.0
      %1001 = vmatprep.subr.mxu0 0.0
      %1002 = vmatpush1.msra.mxu0 0.0
      %1003 = vmatprep.subr.mxu0 0.0
      %1004 = vmatpush1.msra.mxu0 0.0
      %1005 = vmatprep.subr.mxu0 0.0
      %1006 = vmatpush1.msra.mxu0 0.0
      %1007 = vmatprep.subr.mxu0 0.0
      %1008 = vmatpush1.msra.mxu0 0.0
      %1009 = vmatprep.subr.mxu0 0.0
      %1010 = vmatpush1.msra.mxu0 0.0
      %1011 = vmatprep.subr.mxu0 0.0
      %1012 = vmatpush1.msra.mxu0 0.0
      %1013 = vmatprep.subr.mxu0 0.0
      %1014 = vmatpush1.msra.mxu0 0.0
      %1015 = vmatprep.subr.mxu0 0.0
      %1016 = vmatpush1.msra.mxu0 0.0
      %1017 = vmatprep.subr.mxu0 0.0
      %1018 = vmatpush1.msra.mxu0 0.0
      %1019 = vmatprep.subr.mxu0 0.0
      %1020 = vmatpush1.msra.mxu0 0.0
      %1021 = vmatprep.subr.mxu0 0.0
      %1022 = vmatpush1.msra.mxu0 0.0
      %1023 = vmatprep.subr.mxu0 0.0
      %1024 = vmatpush1.msra.mxu0 0.0
      %1025 = vmatprep.subr.mxu0 0.0
      %1026 = vmatpush1.msra.mxu0 0.0
      %1027 = vmatprep.subr.mxu0 0.0
      %1028 = vmatpush1.msra.mxu0 0.0
      %1029 = vmatprep.subr.mxu0 0.0
      %1030 = vmatpush1.msra.mxu0 0.0
      %1031 = vmatprep.subr.mxu0 0.0
      %1032 = vmatpush1.msra.mxu0 0.0
      %1033 = vmatprep.subr.mxu0 0.0
      %1034 = vmatpush1.msra.mxu0 0.0
      %1035 = vmatprep.subr.mxu0 0.0
      %1036 = vmatpush1.msra.mxu0 0.0
      %1037 = vmatprep.subr.mxu0 0.0
      %1038 = vmatpush1.msra.mxu0 0.0
      %1039 = vmatprep.subr.mxu0 0.0
      %1040 = vmatpush1.msra.mxu0 0.0
      %1041 = vmatprep.subr.mxu0 0.0
      %1042 = vmatpush1.msra.mxu0 0.0
      %1043 = vmatprep.subr.mxu0 0.0
      %1044 = vmatpush1.msra.mxu0 0.0
      %1045 = vmatprep.subr.mxu0 0.0
      %1046 = vmatpush1.msra.mxu0 0.0
      %1047 = vmatprep.subr.mxu0 0.0
      %1048 = vmatpush1.msra.mxu0 0.0
      %1049 = vmatprep.mubr.f32.mxu0 0.0
      %1050 = vmatmul.mubr.f32.gmra.mrb[0].mxu0 %v977
      %v1051 = vpop.f32.mrb[0].mxu0
      %v1052 = vadd.f32 0.0, %v1051
      %v1053 = vpop.f32.mrb[0].mxu0
      %v1054 = vadd.f32 0.0, %v1053
      %1055 = vdwg.mxu0
      %v1056 = vadd.f32 %v950, %v1052
      %v1057 = vadd.f32 %v951, %v1054
      %s1058 = scalar_lea.vmem %s14, 4
      %v1059 = vld [vmem:[%s1058] ss:$8 sm:$0x3]
      %v1061 = vlaneseq
      %v1062 = vshrl.u32 %v1061, 7
      %v1063 = vsub.s32 0, %v1062
      %v1064 = vrot.slane %v1059, %v1063
      %v1065 = vlaneseq
      %v1066 = vshrl.u32 %v1065, 7
      %v1067 = vsub.s32 1, %v1066
      %v1068 = vrot.slane %v1059, %v1067
      %v1071 = vcombine.low %v1064, %v1068
      %v1073 = vmul.f32 %v631, %v1071
      %s1074 = scalar_lea.vmem %s2, 16
      %v1075 = vld [vmem:[%s1074] sm:$0xf]
      %v1077 = vcombine.high %v1073, %v1073
      %v1079 = vsel %vm684, %v1075, 0
      %v1081 = vsel %vm688, %v1073, 0
      %v1083 = vsel %vm688, %v1077, 0
      %1085 = vmatprep.subr.mxu0 %v1083
      %1086 = vmatpush1.msra.mxu0 %v1081
      %1087 = vmatprep.subr.mxu0 0.0
      %1088 = vmatpush1.msra.mxu0 0.0
      %1089 = vmatprep.subr.mxu0 0.0
      %1090 = vmatpush1.msra.mxu0 0.0
      %1091 = vmatprep.subr.mxu0 0.0
      %1092 = vmatpush1.msra.mxu0 0.0
      %1093 = vmatprep.subr.mxu0 0.0
      %1094 = vmatpush1.msra.mxu0 0.0
      %1095 = vmatprep.subr.mxu0 0.0
      %1096 = vmatpush1.msra.mxu0 0.0
      %1097 = vmatprep.subr.mxu0 0.0
      %1098 = vmatpush1.msra.mxu0 0.0
      %1099 = vmatprep.subr.mxu0 0.0
      %1100 = vmatpush1.msra.mxu0 0.0
      %1101 = vmatprep.subr.mxu0 0.0
      %1102 = vmatpush1.msra.mxu0 0.0
      %1103 = vmatprep.subr.mxu0 0.0
      %1104 = vmatpush1.msra.mxu0 0.0
      %1105 = vmatprep.subr.mxu0 0.0
      %1106 = vmatpush1.msra.mxu0 0.0
      %1107 = vmatprep.subr.mxu0 0.0
      %1108 = vmatpush1.msra.mxu0 0.0
      %1109 = vmatprep.subr.mxu0 0.0
      %1110 = vmatpush1.msra.mxu0 0.0
      %1111 = vmatprep.subr.mxu0 0.0
      %1112 = vmatpush1.msra.mxu0 0.0
      %1113 = vmatprep.subr.mxu0 0.0
      %1114 = vmatpush1.msra.mxu0 0.0
      %1115 = vmatprep.subr.mxu0 0.0
      %1116 = vmatpush1.msra.mxu0 0.0
      %1117 = vmatprep.subr.mxu0 0.0
      %1118 = vmatpush1.msra.mxu0 0.0
      %1119 = vmatprep.subr.mxu0 0.0
      %1120 = vmatpush1.msra.mxu0 0.0
      %1121 = vmatprep.subr.mxu0 0.0
      %1122 = vmatpush1.msra.mxu0 0.0
      %1123 = vmatprep.subr.mxu0 0.0
      %1124 = vmatpush1.msra.mxu0 0.0
      %1125 = vmatprep.subr.mxu0 0.0
      %1126 = vmatpush1.msra.mxu0 0.0
      %1127 = vmatprep.subr.mxu0 0.0
      %1128 = vmatpush1.msra.mxu0 0.0
      %1129 = vmatprep.subr.mxu0 0.0
      %1130 = vmatpush1.msra.mxu0 0.0
      %1131 = vmatprep.subr.mxu0 0.0
      %1132 = vmatpush1.msra.mxu0 0.0
      %1133 = vmatprep.subr.mxu0 0.0
      %1134 = vmatpush1.msra.mxu0 0.0
      %1135 = vmatprep.subr.mxu0 0.0
      %1136 = vmatpush1.msra.mxu0 0.0
      %1137 = vmatprep.subr.mxu0 0.0
      %1138 = vmatpush1.msra.mxu0 0.0
      %1139 = vmatprep.subr.mxu0 0.0
      %1140 = vmatpush1.msra.mxu0 0.0
      %1141 = vmatprep.subr.mxu0 0.0
      %1142 = vmatpush1.msra.mxu0 0.0
      %1143 = vmatprep.subr.mxu0 0.0
      %1144 = vmatpush1.msra.mxu0 0.0
      %1145 = vmatprep.subr.mxu0 0.0
      %1146 = vmatpush1.msra.mxu0 0.0
      %1147 = vmatprep.subr.mxu0 0.0
      %1148 = vmatpush1.msra.mxu0 0.0
      %1149 = vmatprep.mubr.f32.mxu0 0.0
      %1150 = vmatmul.mubr.f32.gmra.mrb[0].mxu0 %v1079
      %v1151 = vpop.f32.mrb[0].mxu0
      %v1152 = vadd.f32 0.0, %v1151
      %v1153 = vpop.f32.mrb[0].mxu0
      %v1154 = vadd.f32 0.0, %v1153
      %1155 = vdwg.mxu0
      %v1156 = vadd.f32 %v1056, %v1152
      %v1157 = vadd.f32 %v1057, %v1154
      %1158 = vrot.lane.b32.xlu0 %v631, 127
      %v1159 = vpop.permute.xlu0 %1158
      %1160 = vrot.lane.b32.xlu0 %v634, 127
      %v1161 = vpop.permute.xlu0 %1160
      %vm1162 = vcmp.lt.s32.totalorder %v641, 127
      %v1163 = vsel %vm1162, %v1159, %v1161
      %v1164 = vsel %vm1162, %v1161, %v1159
      %s1165 = scalar_lea.vmem %s14, 5
      %v1166 = vld [vmem:[%s1165] ss:$8 sm:$0x3]
      %v1168 = vlaneseq
      %v1169 = vshrl.u32 %v1168, 7
      %v1170 = vsub.s32 0, %v1169
      %v1171 = vrot.slane %v1166, %v1170
      %v1172 = vlaneseq
      %v1173 = vshrl.u32 %v1172, 7
      %v1174 = vsub.s32 1, %v1173
      %v1175 = vrot.slane %v1166, %v1174
      %v1178 = vmul.f32 %v1163, %v1171
      %v1179 = vmul.f32 %v1164, %v1175
      %s1180 = scalar_lea.vmem %s2, 20
      %v1181 = vld [vmem:[%s1180] sm:$0xf]
      %v1183 = vsel %vm684, %v1181, 0
      %v1186 = vsel %vm688, %v1178, 0
      %v1189 = vsel %vm688, %v1179, 0
      %1191 = vmatprep.subr.mxu0 %v1189
      %1192 = vmatpush1.msra.mxu0 %v1186
      %1193 = vmatprep.subr.mxu0 0.0
      %1194 = vmatpush1.msra.mxu0 0.0
      %1195 = vmatprep.subr.mxu0 0.0
      %1196 = vmatpush1.msra.mxu0 0.0
      %1197 = vmatprep.subr.mxu0 0.0
      %1198 = vmatpush1.msra.mxu0 0.0
      %1199 = vmatprep.subr.mxu0 0.0
      %1200 = vmatpush1.msra.mxu0 0.0
      %1201 = vmatprep.subr.mxu0 0.0
      %1202 = vmatpush1.msra.mxu0 0.0
      %1203 = vmatprep.subr.mxu0 0.0
      %1204 = vmatpush1.msra.mxu0 0.0
      %1205 = vmatprep.subr.mxu0 0.0
      %1206 = vmatpush1.msra.mxu0 0.0
      %1207 = vmatprep.subr.mxu0 0.0
      %1208 = vmatpush1.msra.mxu0 0.0
      %1209 = vmatprep.subr.mxu0 0.0
      %1210 = vmatpush1.msra.mxu0 0.0
      %1211 = vmatprep.subr.mxu0 0.0
      %1212 = vmatpush1.msra.mxu0 0.0
      %1213 = vmatprep.subr.mxu0 0.0
      %1214 = vmatpush1.msra.mxu0 0.0
      %1215 = vmatprep.subr.mxu0 0.0
      %1216 = vmatpush1.msra.mxu0 0.0
      %1217 = vmatprep.subr.mxu0 0.0
      %1218 = vmatpush1.msra.mxu0 0.0
      %1219 = vmatprep.subr.mxu0 0.0
      %1220 = vmatpush1.msra.mxu0 0.0
      %1221 = vmatprep.subr.mxu0 0.0
      %1222 = vmatpush1.msra.mxu0 0.0
      %1223 = vmatprep.subr.mxu0 0.0
      %1224 = vmatpush1.msra.mxu0 0.0
      %1225 = vmatprep.subr.mxu0 0.0
      %1226 = vmatpush1.msra.mxu0 0.0
      %1227 = vmatprep.subr.mxu0 0.0
      %1228 = vmatpush1.msra.mxu0 0.0
      %1229 = vmatprep.subr.mxu0 0.0
      %1230 = vmatpush1.msra.mxu0 0.0
      %1231 = vmatprep.subr.mxu0 0.0
      %1232 = vmatpush1.msra.mxu0 0.0
      %1233 = vmatprep.subr.mxu0 0.0
      %1234 = vmatpush1.msra.mxu0 0.0
      %1235 = vmatprep.subr.mxu0 0.0
      %1236 = vmatpush1.msra.mxu0 0.0
      %1237 = vmatprep.subr.mxu0 0.0
      %1238 = vmatpush1.msra.mxu0 0.0
      %1239 = vmatprep.subr.mxu0 0.0
      %1240 = vmatpush1.msra.mxu0 0.0
      %1241 = vmatprep.subr.mxu0 0.0
      %1242 = vmatpush1.msra.mxu0 0.0
      %1243 = vmatprep.subr.mxu0 0.0
      %1244 = vmatpush1.msra.mxu0 0.0
      %1245 = vmatprep.subr.mxu0 0.0
      %1246 = vmatpush1.msra.mxu0 0.0
      %1247 = vmatprep.subr.mxu0 0.0
      %1248 = vmatpush1.msra.mxu0 0.0
      %1249 = vmatprep.subr.mxu0 0.0
      %1250 = vmatpush1.msra.mxu0 0.0
      %1251 = vmatprep.subr.mxu0 0.0
      %1252 = vmatpush1.msra.mxu0 0.0
      %1253 = vmatprep.subr.mxu0 0.0
      %1254 = vmatpush1.msra.mxu0 0.0
      %1255 = vmatprep.mubr.f32.mxu0 0.0
      %1256 = vmatmul.mubr.f32.gmra.mrb[0].mxu0 %v1183
      %v1257 = vpop.f32.mrb[0].mxu0
      %v1258 = vadd.f32 0.0, %v1257
      %v1259 = vpop.f32.mrb[0].mxu0
      %v1260 = vadd.f32 0.0, %v1259
      %1261 = vdwg.mxu0
      %v1262 = vadd.f32 %v1156, %v1258
      %v1263 = vadd.f32 %v1157, %v1260
      %1264 = vrot.lane.b32.xlu0 %v631, 113
      %v1265 = vpop.permute.xlu0 %1264
      %1266 = vrot.lane.b32.xlu0 %v634, 113
      %v1267 = vpop.permute.xlu0 %1266
      %vm1268 = vcmp.lt.s32.totalorder %v641, 113
      %v1269 = vsel %vm1268, %v1265, %v1267
      %v1270 = vsel %vm1268, %v1267, %v1265
      %s1271 = scalar_lea.vmem %s14, 6
      %v1272 = vld [vmem:[%s1271] ss:$8 sm:$0x3]
      %v1274 = vlaneseq
      %v1275 = vshrl.u32 %v1274, 7
      %v1276 = vsub.s32 0, %v1275
      %v1277 = vrot.slane %v1272, %v1276
      %v1278 = vlaneseq
      %v1279 = vshrl.u32 %v1278, 7
      %v1280 = vsub.s32 1, %v1279
      %v1281 = vrot.slane %v1272, %v1280
      %v1284 = vmul.f32 %v1269, %v1277
      %v1285 = vmul.f32 %v1270, %v1281
      %s1286 = scalar_lea.vmem %s2, 24
      %v1287 = vld [vmem:[%s1286] sm:$0xf]
      %v1289 = vsel %vm684, %v1287, 0
      %v1292 = vsel %vm688, %v1284, 0
      %v1295 = vsel %vm688, %v1285, 0
      %1297 = vmatprep.subr.mxu0 %v1295
      %1298 = vmatpush1.msra.mxu0 %v1292
      %1299 = vmatprep.subr.mxu0 0.0
      %1300 = vmatpush1.msra.mxu0 0.0
      %1301 = vmatprep.subr.mxu0 0.0
      %1302 = vmatpush1.msra.mxu0 0.0
      %1303 = vmatprep.subr.mxu0 0.0
      %1304 = vmatpush1.msra.mxu0 0.0
      %1305 = vmatprep.subr.mxu0 0.0
      %1306 = vmatpush1.msra.mxu0 0.0
      %1307 = vmatprep.subr.mxu0 0.0
      %1308 = vmatpush1.msra.mxu0 0.0
      %1309 = vmatprep.subr.mxu0 0.0
      %1310 = vmatpush1.msra.mxu0 0.0
      %1311 = vmatprep.subr.mxu0 0.0
      %1312 = vmatpush1.msra.mxu0 0.0
      %1313 = vmatprep.subr.mxu0 0.0
      %1314 = vmatpush1.msra.mxu0 0.0
      %1315 = vmatprep.subr.mxu0 0.0
      %1316 = vmatpush1.msra.mxu0 0.0
      %1317 = vmatprep.subr.mxu0 0.0
      %1318 = vmatpush1.msra.mxu0 0.0
      %1319 = vmatprep.subr.mxu0 0.0
      %1320 = vmatpush1.msra.mxu0 0.0
      %1321 = vmatprep.subr.mxu0 0.0
      %1322 = vmatpush1.msra.mxu0 0.0
      %1323 = vmatprep.subr.mxu0 0.0
      %1324 = vmatpush1.msra.mxu0 0.0
      %1325 = vmatprep.subr.mxu0 0.0
      %1326 = vmatpush1.msra.mxu0 0.0
      %1327 = vmatprep.subr.mxu0 0.0
      %1328 = vmatpush1.msra.mxu0 0.0
      %1329 = vmatprep.subr.mxu0 0.0
      %1330 = vmatpush1.msra.mxu0 0.0
      %1331 = vmatprep.subr.mxu0 0.0
      %1332 = vmatpush1.msra.mxu0 0.0
      %1333 = vmatprep.subr.mxu0 0.0
      %1334 = vmatpush1.msra.mxu0 0.0
      %1335 = vmatprep.subr.mxu0 0.0
      %1336 = vmatpush1.msra.mxu0 0.0
      %1337 = vmatprep.subr.mxu0 0.0
      %1338 = vmatpush1.msra.mxu0 0.0
      %1339 = vmatprep.subr.mxu0 0.0
      %1340 = vmatpush1.msra.mxu0 0.0
      %1341 = vmatprep.subr.mxu0 0.0
      %1342 = vmatpush1.msra.mxu0 0.0
      %1343 = vmatprep.subr.mxu0 0.0
      %1344 = vmatpush1.msra.mxu0 0.0
      %1345 = vmatprep.subr.mxu0 0.0
      %1346 = vmatpush1.msra.mxu0 0.0
      %1347 = vmatprep.subr.mxu0 0.0
      %1348 = vmatpush1.msra.mxu0 0.0
      %1349 = vmatprep.subr.mxu0 0.0
      %1350 = vmatpush1.msra.mxu0 0.0
      %1351 = vmatprep.subr.mxu0 0.0
      %1352 = vmatpush1.msra.mxu0 0.0
      %1353 = vmatprep.subr.mxu0 0.0
      %1354 = vmatpush1.msra.mxu0 0.0
      %1355 = vmatprep.subr.mxu0 0.0
      %1356 = vmatpush1.msra.mxu0 0.0
      %1357 = vmatprep.subr.mxu0 0.0
      %1358 = vmatpush1.msra.mxu0 0.0
      %1359 = vmatprep.subr.mxu0 0.0
      %1360 = vmatpush1.msra.mxu0 0.0
      %1361 = vmatprep.mubr.f32.mxu0 0.0
      %1362 = vmatmul.mubr.f32.gmra.mrb[0].mxu0 %v1289
      %v1363 = vpop.f32.mrb[0].mxu0
      %v1364 = vadd.f32 0.0, %v1363
      %v1365 = vpop.f32.mrb[0].mxu0
      %v1366 = vadd.f32 0.0, %v1365
      %1367 = vdwg.mxu0
      %v1368 = vadd.f32 %v1262, %v1364
      %v1369 = vadd.f32 %v1263, %v1366
      %1370 = vrot.lane.b32.xlu0 %v631, 112
      %v1371 = vpop.permute.xlu0 %1370
      %1372 = vrot.lane.b32.xlu0 %v634, 112
      %v1373 = vpop.permute.xlu0 %1372
      %vm1374 = vcmp.lt.s32.totalorder %v641, 112
      %v1375 = vsel %vm1374, %v1371, %v1373
      %v1376 = vsel %vm1374, %v1373, %v1371
      %s1377 = scalar_lea.vmem %s14, 7
      %v1378 = vld [vmem:[%s1377] ss:$8 sm:$0x3]
      %v1380 = vlaneseq
      %v1381 = vshrl.u32 %v1380, 7
      %v1382 = vsub.s32 0, %v1381
      %v1383 = vrot.slane %v1378, %v1382
      %v1384 = vlaneseq
      %v1385 = vshrl.u32 %v1384, 7
      %v1386 = vsub.s32 1, %v1385
      %v1387 = vrot.slane %v1378, %v1386
      %v1390 = vmul.f32 %v1375, %v1383
      %v1391 = vmul.f32 %v1376, %v1387
      %s1392 = scalar_lea.vmem %s2, 28
      %v1393 = vld [vmem:[%s1392] sm:$0xf]
      %v1395 = vsel %vm684, %v1393, 0
      %v1398 = vsel %vm688, %v1390, 0
      %v1401 = vsel %vm688, %v1391, 0
      %1403 = vmatprep.subr.mxu0 %v1401
      %1404 = vmatpush1.msra.mxu0 %v1398
      %1405 = vmatprep.subr.mxu0 0.0
      %1406 = vmatpush1.msra.mxu0 0.0
      %1407 = vmatprep.subr.mxu0 0.0
      %1408 = vmatpush1.msra.mxu0 0.0
      %1409 = vmatprep.subr.mxu0 0.0
      %1410 = vmatpush1.msra.mxu0 0.0
      %1411 = vmatprep.subr.mxu0 0.0
      %1412 = vmatpush1.msra.mxu0 0.0
      %1413 = vmatprep.subr.mxu0 0.0
      %1414 = vmatpush1.msra.mxu0 0.0
      %1415 = vmatprep.subr.mxu0 0.0
      %1416 = vmatpush1.msra.mxu0 0.0
      %1417 = vmatprep.subr.mxu0 0.0
      %1418 = vmatpush1.msra.mxu0 0.0
      %1419 = vmatprep.subr.mxu0 0.0
      %1420 = vmatpush1.msra.mxu0 0.0
      %1421 = vmatprep.subr.mxu0 0.0
      %1422 = vmatpush1.msra.mxu0 0.0
      %1423 = vmatprep.subr.mxu0 0.0
      %1424 = vmatpush1.msra.mxu0 0.0
      %1425 = vmatprep.subr.mxu0 0.0
      %1426 = vmatpush1.msra.mxu0 0.0
      %1427 = vmatprep.subr.mxu0 0.0
      %1428 = vmatpush1.msra.mxu0 0.0
      %1429 = vmatprep.subr.mxu0 0.0
      %1430 = vmatpush1.msra.mxu0 0.0
      %1431 = vmatprep.subr.mxu0 0.0
      %1432 = vmatpush1.msra.mxu0 0.0
      %1433 = vmatprep.subr.mxu0 0.0
      %1434 = vmatpush1.msra.mxu0 0.0
      %1435 = vmatprep.subr.mxu0 0.0
      %1436 = vmatpush1.msra.mxu0 0.0
      %1437 = vmatprep.subr.mxu0 0.0
      %1438 = vmatpush1.msra.mxu0 0.0
      %1439 = vmatprep.subr.mxu0 0.0
      %1440 = vmatpush1.msra.mxu0 0.0
      %1441 = vmatprep.subr.mxu0 0.0
      %1442 = vmatpush1.msra.mxu0 0.0
      %1443 = vmatprep.subr.mxu0 0.0
      %1444 = vmatpush1.msra.mxu0 0.0
      %1445 = vmatprep.subr.mxu0 0.0
      %1446 = vmatpush1.msra.mxu0 0.0
      %1447 = vmatprep.subr.mxu0 0.0
      %1448 = vmatpush1.msra.mxu0 0.0
      %1449 = vmatprep.subr.mxu0 0.0
      %1450 = vmatpush1.msra.mxu0 0.0
      %1451 = vmatprep.subr.mxu0 0.0
      %1452 = vmatpush1.msra.mxu0 0.0
      %1453 = vmatprep.subr.mxu0 0.0
      %1454 = vmatpush1.msra.mxu0 0.0
      %1455 = vmatprep.subr.mxu0 0.0
      %1456 = vmatpush1.msra.mxu0 0.0
      %1457 = vmatprep.subr.mxu0 0.0
      %1458 = vmatpush1.msra.mxu0 0.0
      %1459 = vmatprep.subr.mxu0 0.0
      %1460 = vmatpush1.msra.mxu0 0.0
      %1461 = vmatprep.subr.mxu0 0.0
      %1462 = vmatpush1.msra.mxu0 0.0
      %1463 = vmatprep.subr.mxu0 0.0
      %1464 = vmatpush1.msra.mxu0 0.0
      %1465 = vmatprep.subr.mxu0 0.0
      %1466 = vmatpush1.msra.mxu0 0.0
      %1467 = vmatprep.mubr.f32.mxu0 0.0
      %1468 = vmatmul.mubr.f32.gmra.mrb[0].mxu0 %v1395
      %v1469 = vpop.f32.mrb[0].mxu0
      %v1470 = vadd.f32 0.0, %v1469
      %v1471 = vpop.f32.mrb[0].mxu0
      %v1472 = vadd.f32 0.0, %v1471
      %1473 = vdwg.mxu0
      %v1474 = vadd.f32 %v1368, %v1470
      %v1475 = vadd.f32 %v1369, %v1472
      %1476 = vrot.lane.b32.xlu0 %v631, 111
      %v1477 = vpop.permute.xlu0 %1476
      %1478 = vrot.lane.b32.xlu0 %v634, 111
      %v1479 = vpop.permute.xlu0 %1478
      %vm1480 = vcmp.lt.s32.totalorder %v641, 111
      %v1481 = vsel %vm1480, %v1477, %v1479
      %v1482 = vsel %vm1480, %v1479, %v1477
      %s1483 = scalar_lea.vmem %s14, 16
      %v1484 = vld [vmem:[%s1483] ss:$8 sm:$0x3]
      %v1486 = vlaneseq
      %v1487 = vshrl.u32 %v1486, 7
      %v1488 = vsub.s32 0, %v1487
      %v1489 = vrot.slane %v1484, %v1488
      %v1490 = vlaneseq
      %v1491 = vshrl.u32 %v1490, 7
      %v1492 = vsub.s32 1, %v1491
      %v1493 = vrot.slane %v1484, %v1492
      %v1496 = vmul.f32 %v1481, %v1489
      %v1497 = vmul.f32 %v1482, %v1493
      %s1498 = scalar_lea.vmem %s2, 32
      %v1499 = vld [vmem:[%s1498] sm:$0xf]
      %v1501 = vsel %vm684, %v1499, 0
      %v1504 = vsel %vm688, %v1496, 0
      %v1507 = vsel %vm688, %v1497, 0
      %1509 = vmatprep.subr.mxu0 %v1507
      %1510 = vmatpush1.msra.mxu0 %v1504
      %1511 = vmatprep.subr.mxu0 0.0
      %1512 = vmatpush1.msra.mxu0 0.0
      %1513 = vmatprep.subr.mxu0 0.0
      %1514 = vmatpush1.msra.mxu0 0.0
      %1515 = vmatprep.subr.mxu0 0.0
      %1516 = vmatpush1.msra.mxu0 0.0
      %1517 = vmatprep.subr.mxu0 0.0
      %1518 = vmatpush1.msra.mxu0 0.0
      %1519 = vmatprep.subr.mxu0 0.0
      %1520 = vmatpush1.msra.mxu0 0.0
      %1521 = vmatprep.subr.mxu0 0.0
      %1522 = vmatpush1.msra.mxu0 0.0
      %1523 = vmatprep.subr.mxu0 0.0
      %1524 = vmatpush1.msra.mxu0 0.0
      %1525 = vmatprep.subr.mxu0 0.0
      %1526 = vmatpush1.msra.mxu0 0.0
      %1527 = vmatprep.subr.mxu0 0.0
      %1528 = vmatpush1.msra.mxu0 0.0
      %1529 = vmatprep.subr.mxu0 0.0
      %1530 = vmatpush1.msra.mxu0 0.0
      %1531 = vmatprep.subr.mxu0 0.0
      %1532 = vmatpush1.msra.mxu0 0.0
      %1533 = vmatprep.subr.mxu0 0.0
      %1534 = vmatpush1.msra.mxu0 0.0
      %1535 = vmatprep.subr.mxu0 0.0
      %1536 = vmatpush1.msra.mxu0 0.0
      %1537 = vmatprep.subr.mxu0 0.0
      %1538 = vmatpush1.msra.mxu0 0.0
      %1539 = vmatprep.subr.mxu0 0.0
      %1540 = vmatpush1.msra.mxu0 0.0
      %1541 = vmatprep.subr.mxu0 0.0
      %1542 = vmatpush1.msra.mxu0 0.0
      %1543 = vmatprep.subr.mxu0 0.0
      %1544 = vmatpush1.msra.mxu0 0.0
      %1545 = vmatprep.subr.mxu0 0.0
      %1546 = vmatpush1.msra.mxu0 0.0
      %1547 = vmatprep.subr.mxu0 0.0
      %1548 = vmatpush1.msra.mxu0 0.0
      %1549 = vmatprep.subr.mxu0 0.0
      %1550 = vmatpush1.msra.mxu0 0.0
      %1551 = vmatprep.subr.mxu0 0.0
      %1552 = vmatpush1.msra.mxu0 0.0
      %1553 = vmatprep.subr.mxu0 0.0
      %1554 = vmatpush1.msra.mxu0 0.0
      %1555 = vmatprep.subr.mxu0 0.0
      %1556 = vmatpush1.msra.mxu0 0.0
      %1557 = vmatprep.subr.mxu0 0.0
      %1558 = vmatpush1.msra.mxu0 0.0
      %1559 = vmatprep.subr.mxu0 0.0
      %1560 = vmatpush1.msra.mxu0 0.0
      %1561 = vmatprep.subr.mxu0 0.0
      %1562 = vmatpush1.msra.mxu0 0.0
      %1563 = vmatprep.subr.mxu0 0.0
      %1564 = vmatpush1.msra.mxu0 0.0
      %1565 = vmatprep.subr.mxu0 0.0
      %1566 = vmatpush1.msra.mxu0 0.0
      %1567 = vmatprep.subr.mxu0 0.0
      %1568 = vmatpush1.msra.mxu0 0.0
      %1569 = vmatprep.subr.mxu0 0.0
      %1570 = vmatpush1.msra.mxu0 0.0
      %1571 = vmatprep.subr.mxu0 0.0
      %1572 = vmatpush1.msra.mxu0 0.0
      %1573 = vmatprep.mubr.f32.mxu0 0.0
      %1574 = vmatmul.mubr.f32.gmra.mrb[0].mxu0 %v1501
      %v1575 = vpop.f32.mrb[0].mxu0
      %v1576 = vadd.f32 0.0, %v1575
      %v1577 = vpop.f32.mrb[0].mxu0
      %v1578 = vadd.f32 0.0, %v1577
      %1579 = vdwg.mxu0
      %v1580 = vadd.f32 %v1474, %v1576
      %v1581 = vadd.f32 %v1475, %v1578
      %v1582 = vld [vmem:[%s3] sm:$0xf]
      %1584 = vset.pattern.permute.xlu0 0
      %1585 = vperm.xlu0 %1584, %v1582
      %v1586 = vpop.permute.xlu0 %1585
      %v1588 = vadd.f32 %v1580, %v1586
      %v1589 = vadd.f32 %v1581, %v1586
      %v1590 = vmax.f32 %v1588, 0.0
      %v1591 = vmax.f32 %v1589, 0.0
      %1592 = vrot.lane.b32.xlu0 %v1590, 17
      %v1593 = vpop.permute.xlu0 %1592
      %1594 = vrot.lane.b32.xlu0 %v1591, 17
      %v1595 = vpop.permute.xlu0 %1594
      %v1596 = vsel %vm642, %v1593, %v1595
      %v1597 = vsel %vm642, %v1595, %v1593
      %v1598 = vmul.f32 %v1597, %v650
      %v1599 = vmul.f32 %v1596, %v654
      %v1600 = vld [vmem:[%s4] sm:$0xf]
      %1601 = vrot.lane.b32.xlu0 %v1590, 16
      %v1602 = vpop.permute.xlu0 %1601
      %1603 = vrot.lane.b32.xlu0 %v1591, 16
      %v1604 = vpop.permute.xlu0 %1603
      %v1605 = vsel %vm664, %v1602, %v1604
      %v1606 = vsel %vm664, %v1604, %v1602
      %v1607 = vmul.f32 %v1606, %v673
      %v1608 = vmul.f32 %v1605, %v677
      %s1609 = scalar_lea.vmem %s4, 4
      %v1610 = vld [vmem:[%s1609] sm:$0xf]
      %v1612 = vsel %vm684, %v1610, 0
      %v1615 = vsel %vm688, %v1607, 0
      %v1618 = vsel %vm688, %v1608, 0
      %1620 = vmatprep.subr.mxu0 %v1618
      %1621 = vmatpush1.msra.mxu0 %v1615
      %1622 = vmatprep.subr.mxu0 0.0
      %1623 = vmatpush1.msra.mxu0 0.0
      %1624 = vmatprep.subr.mxu0 0.0
      %1625 = vmatpush1.msra.mxu0 0.0
      %1626 = vmatprep.subr.mxu0 0.0
      %1627 = vmatpush1.msra.mxu0 0.0
      %1628 = vmatprep.subr.mxu0 0.0
      %1629 = vmatpush1.msra.mxu0 0.0
      %1630 = vmatprep.subr.mxu0 0.0
      %1631 = vmatpush1.msra.mxu0 0.0
      %1632 = vmatprep.subr.mxu0 0.0
      %1633 = vmatpush1.msra.mxu0 0.0
      %1634 = vmatprep.subr.mxu0 0.0
      %1635 = vmatpush1.msra.mxu0 0.0
      %1636 = vmatprep.subr.mxu0 0.0
      %1637 = vmatpush1.msra.mxu0 0.0
      %1638 = vmatprep.subr.mxu0 0.0
      %1639 = vmatpush1.msra.mxu0 0.0
      %1640 = vmatprep.subr.mxu0 0.0
      %1641 = vmatpush1.msra.mxu0 0.0
      %1642 = vmatprep.subr.mxu0 0.0
      %1643 = vmatpush1.msra.mxu0 0.0
      %1644 = vmatprep.subr.mxu0 0.0
      %1645 = vmatpush1.msra.mxu0 0.0
      %1646 = vmatprep.subr.mxu0 0.0
      %1647 = vmatpush1.msra.mxu0 0.0
      %1648 = vmatprep.subr.mxu0 0.0
      %1649 = vmatpush1.msra.mxu0 0.0
      %1650 = vmatprep.subr.mxu0 0.0
      %1651 = vmatpush1.msra.mxu0 0.0
      %1652 = vmatprep.subr.mxu0 0.0
      %1653 = vmatpush1.msra.mxu0 0.0
      %1654 = vmatprep.subr.mxu0 0.0
      %1655 = vmatpush1.msra.mxu0 0.0
      %1656 = vmatprep.subr.mxu0 0.0
      %1657 = vmatpush1.msra.mxu0 0.0
      %1658 = vmatprep.subr.mxu0 0.0
      %1659 = vmatpush1.msra.mxu0 0.0
      %1660 = vmatprep.subr.mxu0 0.0
      %1661 = vmatpush1.msra.mxu0 0.0
      %1662 = vmatprep.subr.mxu0 0.0
      %1663 = vmatpush1.msra.mxu0 0.0
      %1664 = vmatprep.subr.mxu0 0.0
      %1665 = vmatpush1.msra.mxu0 0.0
      %1666 = vmatprep.subr.mxu0 0.0
      %1667 = vmatpush1.msra.mxu0 0.0
      %1668 = vmatprep.subr.mxu0 0.0
      %1669 = vmatpush1.msra.mxu0 0.0
      %1670 = vmatprep.subr.mxu0 0.0
      %1671 = vmatpush1.msra.mxu0 0.0
      %1672 = vmatprep.subr.mxu0 0.0
      %1673 = vmatpush1.msra.mxu0 0.0
      %1674 = vmatprep.subr.mxu0 0.0
      %1675 = vmatpush1.msra.mxu0 0.0
      %1676 = vmatprep.subr.mxu0 0.0
      %1677 = vmatpush1.msra.mxu0 0.0
      %1678 = vmatprep.subr.mxu0 0.0
      %1679 = vmatpush1.msra.mxu0 0.0
      %1680 = vmatprep.subr.mxu0 0.0
      %1681 = vmatpush1.msra.mxu0 0.0
      %1682 = vmatprep.subr.mxu0 0.0
      %1683 = vmatpush1.msra.mxu0 0.0
      %1684 = vmatprep.mubr.f32.mxu0 0.0
      %1685 = vmatmul.mubr.f32.gmra.mrb[0].mxu0 %v1612
      %v1686 = vpop.f32.mrb[0].mxu0
      %v1687 = vadd.f32 0.0, %v1686
      %v1688 = vpop.f32.mrb[0].mxu0
      %v1689 = vadd.f32 0.0, %v1688
      %1690 = vdwg.mxu0
      %v1692 = vsel %vm684, %v1600, 0
      %v1695 = vsel %vm688, %v1598, 0
      %v1698 = vsel %vm688, %v1599, 0
      %1700 = vmatprep.subr.mxu0 %v1698
      %1701 = vmatpush1.msra.mxu0 %v1695
      %1702 = vmatprep.subr.mxu0 0.0
      %1703 = vmatpush1.msra.mxu0 0.0
      %1704 = vmatprep.subr.mxu0 0.0
      %1705 = vmatpush1.msra.mxu0 0.0
      %1706 = vmatprep.subr.mxu0 0.0
      %1707 = vmatpush1.msra.mxu0 0.0
      %1708 = vmatprep.subr.mxu0 0.0
      %1709 = vmatpush1.msra.mxu0 0.0
      %1710 = vmatprep.subr.mxu0 0.0
      %1711 = vmatpush1.msra.mxu0 0.0
      %1712 = vmatprep.subr.mxu0 0.0
      %1713 = vmatpush1.msra.mxu0 0.0
      %1714 = vmatprep.subr.mxu0 0.0
      %1715 = vmatpush1.msra.mxu0 0.0
      %1716 = vmatprep.subr.mxu0 0.0
      %1717 = vmatpush1.msra.mxu0 0.0
      %1718 = vmatprep.subr.mxu0 0.0
      %1719 = vmatpush1.msra.mxu0 0.0
      %1720 = vmatprep.subr.mxu0 0.0
      %1721 = vmatpush1.msra.mxu0 0.0
      %1722 = vmatprep.subr.mxu0 0.0
      %1723 = vmatpush1.msra.mxu0 0.0
      %1724 = vmatprep.subr.mxu0 0.0
      %1725 = vmatpush1.msra.mxu0 0.0
      %1726 = vmatprep.subr.mxu0 0.0
      %1727 = vmatpush1.msra.mxu0 0.0
      %1728 = vmatprep.subr.mxu0 0.0
      %1729 = vmatpush1.msra.mxu0 0.0
      %1730 = vmatprep.subr.mxu0 0.0
      %1731 = vmatpush1.msra.mxu0 0.0
      %1732 = vmatprep.subr.mxu0 0.0
      %1733 = vmatpush1.msra.mxu0 0.0
      %1734 = vmatprep.subr.mxu0 0.0
      %1735 = vmatpush1.msra.mxu0 0.0
      %1736 = vmatprep.subr.mxu0 0.0
      %1737 = vmatpush1.msra.mxu0 0.0
      %1738 = vmatprep.subr.mxu0 0.0
      %1739 = vmatpush1.msra.mxu0 0.0
      %1740 = vmatprep.subr.mxu0 0.0
      %1741 = vmatpush1.msra.mxu0 0.0
      %1742 = vmatprep.subr.mxu0 0.0
      %1743 = vmatpush1.msra.mxu0 0.0
      %1744 = vmatprep.subr.mxu0 0.0
      %1745 = vmatpush1.msra.mxu0 0.0
      %1746 = vmatprep.subr.mxu0 0.0
      %1747 = vmatpush1.msra.mxu0 0.0
      %1748 = vmatprep.subr.mxu0 0.0
      %1749 = vmatpush1.msra.mxu0 0.0
      %1750 = vmatprep.subr.mxu0 0.0
      %1751 = vmatpush1.msra.mxu0 0.0
      %1752 = vmatprep.subr.mxu0 0.0
      %1753 = vmatpush1.msra.mxu0 0.0
      %1754 = vmatprep.subr.mxu0 0.0
      %1755 = vmatpush1.msra.mxu0 0.0
      %1756 = vmatprep.subr.mxu0 0.0
      %1757 = vmatpush1.msra.mxu0 0.0
      %1758 = vmatprep.subr.mxu0 0.0
      %1759 = vmatpush1.msra.mxu0 0.0
      %1760 = vmatprep.subr.mxu0 0.0
      %1761 = vmatpush1.msra.mxu0 0.0
      %1762 = vmatprep.subr.mxu0 0.0
      %1763 = vmatpush1.msra.mxu0 0.0
      %1764 = vmatprep.mubr.f32.mxu0 0.0
      %1765 = vmatmul.mubr.f32.gmra.mrb[0].mxu0 %v1692
      %v1766 = vpop.f32.mrb[0].mxu0
      %v1767 = vadd.f32 %v1687, %v1766
      %v1768 = vpop.f32.mrb[0].mxu0
      %v1769 = vadd.f32 %v1689, %v1768
      %1770 = vdwg.mxu0
      %1771 = vrot.lane.b32.xlu0 %v1590, 15
      %v1772 = vpop.permute.xlu0 %1771
      %1773 = vrot.lane.b32.xlu0 %v1591, 15
      %v1774 = vpop.permute.xlu0 %1773
      %v1775 = vsel %vm850, %v1772, %v1774
      %v1776 = vsel %vm850, %v1774, %v1772
      %v1777 = vmul.f32 %v1776, %v859
      %v1778 = vmul.f32 %v1775, %v863
      %s1779 = scalar_lea.vmem %s4, 8
      %v1780 = vld [vmem:[%s1779] sm:$0xf]
      %v1782 = vsel %vm684, %v1780, 0
      %v1785 = vsel %vm688, %v1777, 0
      %v1788 = vsel %vm688, %v1778, 0
      %1790 = vmatprep.subr.mxu0 %v1788
      %1791 = vmatpush1.msra.mxu0 %v1785
      %1792 = vmatprep.subr.mxu0 0.0
      %1793 = vmatpush1.msra.mxu0 0.0
      %1794 = vmatprep.subr.mxu0 0.0
      %1795 = vmatpush1.msra.mxu0 0.0
      %1796 = vmatprep.subr.mxu0 0.0
      %1797 = vmatpush1.msra.mxu0 0.0
      %1798 = vmatprep.subr.mxu0 0.0
      %1799 = vmatpush1.msra.mxu0 0.0
      %1800 = vmatprep.subr.mxu0 0.0
      %1801 = vmatpush1.msra.mxu0 0.0
      %1802 = vmatprep.subr.mxu0 0.0
      %1803 = vmatpush1.msra.mxu0 0.0
      %1804 = vmatprep.subr.mxu0 0.0
      %1805 = vmatpush1.msra.mxu0 0.0
      %1806 = vmatprep.subr.mxu0 0.0
      %1807 = vmatpush1.msra.mxu0 0.0
      %1808 = vmatprep.subr.mxu0 0.0
      %1809 = vmatpush1.msra.mxu0 0.0
      %1810 = vmatprep.subr.mxu0 0.0
      %1811 = vmatpush1.msra.mxu0 0.0
      %1812 = vmatprep.subr.mxu0 0.0
      %1813 = vmatpush1.msra.mxu0 0.0
      %1814 = vmatprep.subr.mxu0 0.0
      %1815 = vmatpush1.msra.mxu0 0.0
      %1816 = vmatprep.subr.mxu0 0.0
      %1817 = vmatpush1.msra.mxu0 0.0
      %1818 = vmatprep.subr.mxu0 0.0
      %1819 = vmatpush1.msra.mxu0 0.0
      %1820 = vmatprep.subr.mxu0 0.0
      %1821 = vmatpush1.msra.mxu0 0.0
      %1822 = vmatprep.subr.mxu0 0.0
      %1823 = vmatpush1.msra.mxu0 0.0
      %1824 = vmatprep.subr.mxu0 0.0
      %1825 = vmatpush1.msra.mxu0 0.0
      %1826 = vmatprep.subr.mxu0 0.0
      %1827 = vmatpush1.msra.mxu0 0.0
      %1828 = vmatprep.subr.mxu0 0.0
      %1829 = vmatpush1.msra.mxu0 0.0
      %1830 = vmatprep.subr.mxu0 0.0
      %1831 = vmatpush1.msra.mxu0 0.0
      %1832 = vmatprep.subr.mxu0 0.0
      %1833 = vmatpush1.msra.mxu0 0.0
      %1834 = vmatprep.subr.mxu0 0.0
      %1835 = vmatpush1.msra.mxu0 0.0
      %1836 = vmatprep.subr.mxu0 0.0
      %1837 = vmatpush1.msra.mxu0 0.0
      %1838 = vmatprep.subr.mxu0 0.0
      %1839 = vmatpush1.msra.mxu0 0.0
      %1840 = vmatprep.subr.mxu0 0.0
      %1841 = vmatpush1.msra.mxu0 0.0
      %1842 = vmatprep.subr.mxu0 0.0
      %1843 = vmatpush1.msra.mxu0 0.0
      %1844 = vmatprep.subr.mxu0 0.0
      %1845 = vmatpush1.msra.mxu0 0.0
      %1846 = vmatprep.subr.mxu0 0.0
      %1847 = vmatpush1.msra.mxu0 0.0
      %1848 = vmatprep.subr.mxu0 0.0
      %1849 = vmatpush1.msra.mxu0 0.0
      %1850 = vmatprep.subr.mxu0 0.0
      %1851 = vmatpush1.msra.mxu0 0.0
      %1852 = vmatprep.subr.mxu0 0.0
      %1853 = vmatpush1.msra.mxu0 0.0
      %1854 = vmatprep.mubr.f32.mxu0 0.0
      %1855 = vmatmul.mubr.f32.gmra.mrb[0].mxu0 %v1782
      %v1856 = vpop.f32.mrb[0].mxu0
      %v1857 = vadd.f32 0.0, %v1856
      %v1858 = vpop.f32.mrb[0].mxu0
      %v1859 = vadd.f32 0.0, %v1858
      %1860 = vdwg.mxu0
      %v1861 = vadd.f32 %v1767, %v1857
      %v1862 = vadd.f32 %v1769, %v1859
      %1863 = vrot.lane.b32.xlu0 %v1590, 1
      %v1864 = vpop.permute.xlu0 %1863
      %1865 = vrot.lane.b32.xlu0 %v1591, 1
      %v1866 = vpop.permute.xlu0 %1865
      %v1867 = vsel %vm956, %v1864, %v1866
      %v1868 = vsel %vm956, %v1866, %v1864
      %v1869 = vmul.f32 %v1868, %v965
      %v1870 = vmul.f32 %v1867, %v969
      %s1871 = scalar_lea.vmem %s4, 12
      %v1872 = vld [vmem:[%s1871] sm:$0xf]
      %v1874 = vsel %vm684, %v1872, 0
      %v1877 = vsel %vm688, %v1869, 0
      %v1880 = vsel %vm688, %v1870, 0
      %1882 = vmatprep.subr.mxu0 %v1880
      %1883 = vmatpush1.msra.mxu0 %v1877
      %1884 = vmatprep.subr.mxu0 0.0
      %1885 = vmatpush1.msra.mxu0 0.0
      %1886 = vmatprep.subr.mxu0 0.0
      %1887 = vmatpush1.msra.mxu0 0.0
      %1888 = vmatprep.subr.mxu0 0.0
      %1889 = vmatpush1.msra.mxu0 0.0
      %1890 = vmatprep.subr.mxu0 0.0
      %1891 = vmatpush1.msra.mxu0 0.0
      %1892 = vmatprep.subr.mxu0 0.0
      %1893 = vmatpush1.msra.mxu0 0.0
      %1894 = vmatprep.subr.mxu0 0.0
      %1895 = vmatpush1.msra.mxu0 0.0
      %1896 = vmatprep.subr.mxu0 0.0
      %1897 = vmatpush1.msra.mxu0 0.0
      %1898 = vmatprep.subr.mxu0 0.0
      %1899 = vmatpush1.msra.mxu0 0.0
      %1900 = vmatprep.subr.mxu0 0.0
      %1901 = vmatpush1.msra.mxu0 0.0
      %1902 = vmatprep.subr.mxu0 0.0
      %1903 = vmatpush1.msra.mxu0 0.0
      %1904 = vmatprep.subr.mxu0 0.0
      %1905 = vmatpush1.msra.mxu0 0.0
      %1906 = vmatprep.subr.mxu0 0.0
      %1907 = vmatpush1.msra.mxu0 0.0
      %1908 = vmatprep.subr.mxu0 0.0
      %1909 = vmatpush1.msra.mxu0 0.0
      %1910 = vmatprep.subr.mxu0 0.0
      %1911 = vmatpush1.msra.mxu0 0.0
      %1912 = vmatprep.subr.mxu0 0.0
      %1913 = vmatpush1.msra.mxu0 0.0
      %1914 = vmatprep.subr.mxu0 0.0
      %1915 = vmatpush1.msra.mxu0 0.0
      %1916 = vmatprep.subr.mxu0 0.0
      %1917 = vmatpush1.msra.mxu0 0.0
      %1918 = vmatprep.subr.mxu0 0.0
      %1919 = vmatpush1.msra.mxu0 0.0
      %1920 = vmatprep.subr.mxu0 0.0
      %1921 = vmatpush1.msra.mxu0 0.0
      %1922 = vmatprep.subr.mxu0 0.0
      %1923 = vmatpush1.msra.mxu0 0.0
      %1924 = vmatprep.subr.mxu0 0.0
      %1925 = vmatpush1.msra.mxu0 0.0
      %1926 = vmatprep.subr.mxu0 0.0
      %1927 = vmatpush1.msra.mxu0 0.0
      %1928 = vmatprep.subr.mxu0 0.0
      %1929 = vmatpush1.msra.mxu0 0.0
      %1930 = vmatprep.subr.mxu0 0.0
      %1931 = vmatpush1.msra.mxu0 0.0
      %1932 = vmatprep.subr.mxu0 0.0
      %1933 = vmatpush1.msra.mxu0 0.0
      %1934 = vmatprep.subr.mxu0 0.0
      %1935 = vmatpush1.msra.mxu0 0.0
      %1936 = vmatprep.subr.mxu0 0.0
      %1937 = vmatpush1.msra.mxu0 0.0
      %1938 = vmatprep.subr.mxu0 0.0
      %1939 = vmatpush1.msra.mxu0 0.0
      %1940 = vmatprep.subr.mxu0 0.0
      %1941 = vmatpush1.msra.mxu0 0.0
      %1942 = vmatprep.subr.mxu0 0.0
      %1943 = vmatpush1.msra.mxu0 0.0
      %1944 = vmatprep.subr.mxu0 0.0
      %1945 = vmatpush1.msra.mxu0 0.0
      %1946 = vmatprep.mubr.f32.mxu0 0.0
      %1947 = vmatmul.mubr.f32.gmra.mrb[0].mxu0 %v1874
      %v1948 = vpop.f32.mrb[0].mxu0
      %v1949 = vadd.f32 0.0, %v1948
      %v1950 = vpop.f32.mrb[0].mxu0
      %v1951 = vadd.f32 0.0, %v1950
      %1952 = vdwg.mxu0
      %v1953 = vadd.f32 %v1861, %v1949
      %v1954 = vadd.f32 %v1862, %v1951
      %v1955 = vmul.f32 %v1590, %v1064
      %v1956 = vmul.f32 %v1591, %v1068
      %s1957 = scalar_lea.vmem %s4, 16
      %v1958 = vld [vmem:[%s1957] sm:$0xf]
      %v1960 = vsel %vm684, %v1958, 0
      %v1963 = vsel %vm688, %v1955, 0
      %v1966 = vsel %vm688, %v1956, 0
      %1968 = vmatprep.subr.mxu0 %v1966
      %1969 = vmatpush1.msra.mxu0 %v1963
      %1970 = vmatprep.subr.mxu0 0.0
      %1971 = vmatpush1.msra.mxu0 0.0
      %1972 = vmatprep.subr.mxu0 0.0
      %1973 = vmatpush1.msra.mxu0 0.0
      %1974 = vmatprep.subr.mxu0 0.0
      %1975 = vmatpush1.msra.mxu0 0.0
      %1976 = vmatprep.subr.mxu0 0.0
      %1977 = vmatpush1.msra.mxu0 0.0
      %1978 = vmatprep.subr.mxu0 0.0
      %1979 = vmatpush1.msra.mxu0 0.0
      %1980 = vmatprep.subr.mxu0 0.0
      %1981 = vmatpush1.msra.mxu0 0.0
      %1982 = vmatprep.subr.mxu0 0.0
      %1983 = vmatpush1.msra.mxu0 0.0
      %1984 = vmatprep.subr.mxu0 0.0
      %1985 = vmatpush1.msra.mxu0 0.0
      %1986 = vmatprep.subr.mxu0 0.0
      %1987 = vmatpush1.msra.mxu0 0.0
      %1988 = vmatprep.subr.mxu0 0.0
      %1989 = vmatpush1.msra.mxu0 0.0
      %1990 = vmatprep.subr.mxu0 0.0
      %1991 = vmatpush1.msra.mxu0 0.0
      %1992 = vmatprep.subr.mxu0 0.0
      %1993 = vmatpush1.msra.mxu0 0.0
      %1994 = vmatprep.subr.mxu0 0.0
      %1995 = vmatpush1.msra.mxu0 0.0
      %1996 = vmatprep.subr.mxu0 0.0
      %1997 = vmatpush1.msra.mxu0 0.0
      %1998 = vmatprep.subr.mxu0 0.0
      %1999 = vmatpush1.msra.mxu0 0.0
      %2000 = vmatprep.subr.mxu0 0.0
      %2001 = vmatpush1.msra.mxu0 0.0
      %2002 = vmatprep.subr.mxu0 0.0
      %2003 = vmatpush1.msra.mxu0 0.0
      %2004 = vmatprep.subr.mxu0 0.0
      %2005 = vmatpush1.msra.mxu0 0.0
      %2006 = vmatprep.subr.mxu0 0.0
      %2007 = vmatpush1.msra.mxu0 0.0
      %2008 = vmatprep.subr.mxu0 0.0
      %2009 = vmatpush1.msra.mxu0 0.0
      %2010 = vmatprep.subr.mxu0 0.0
      %2011 = vmatpush1.msra.mxu0 0.0
      %2012 = vmatprep.subr.mxu0 0.0
      %2013 = vmatpush1.msra.mxu0 0.0
      %2014 = vmatprep.subr.mxu0 0.0
      %2015 = vmatpush1.msra.mxu0 0.0
      %2016 = vmatprep.subr.mxu0 0.0
      %2017 = vmatpush1.msra.mxu0 0.0
      %2018 = vmatprep.subr.mxu0 0.0
      %2019 = vmatpush1.msra.mxu0 0.0
      %2020 = vmatprep.subr.mxu0 0.0
      %2021 = vmatpush1.msra.mxu0 0.0
      %2022 = vmatprep.subr.mxu0 0.0
      %2023 = vmatpush1.msra.mxu0 0.0
      %2024 = vmatprep.subr.mxu0 0.0
      %2025 = vmatpush1.msra.mxu0 0.0
      %2026 = vmatprep.subr.mxu0 0.0
      %2027 = vmatpush1.msra.mxu0 0.0
      %2028 = vmatprep.subr.mxu0 0.0
      %2029 = vmatpush1.msra.mxu0 0.0
      %2030 = vmatprep.subr.mxu0 0.0
      %2031 = vmatpush1.msra.mxu0 0.0
      %2032 = vmatprep.mubr.f32.mxu0 0.0
      %2033 = vmatmul.mubr.f32.gmra.mrb[0].mxu0 %v1960
      %v2034 = vpop.f32.mrb[0].mxu0
      %v2035 = vadd.f32 0.0, %v2034
      %v2036 = vpop.f32.mrb[0].mxu0
      %v2037 = vadd.f32 0.0, %v2036
      %2038 = vdwg.mxu0
      %v2039 = vadd.f32 %v1953, %v2035
      %v2040 = vadd.f32 %v1954, %v2037
      %2041 = vrot.lane.b32.xlu0 %v1590, 127
      %v2042 = vpop.permute.xlu0 %2041
      %2043 = vrot.lane.b32.xlu0 %v1591, 127
      %v2044 = vpop.permute.xlu0 %2043
      %v2045 = vsel %vm1162, %v2042, %v2044
      %v2046 = vsel %vm1162, %v2044, %v2042
      %v2047 = vmul.f32 %v2045, %v1171
      %v2048 = vmul.f32 %v2046, %v1175
      %s2049 = scalar_lea.vmem %s4, 20
      %v2050 = vld [vmem:[%s2049] sm:$0xf]
      %v2052 = vsel %vm684, %v2050, 0
      %v2055 = vsel %vm688, %v2047, 0
      %v2058 = vsel %vm688, %v2048, 0
      %2060 = vmatprep.subr.mxu0 %v2058
      %2061 = vmatpush1.msra.mxu0 %v2055
      %2062 = vmatprep.subr.mxu0 0.0
      %2063 = vmatpush1.msra.mxu0 0.0
      %2064 = vmatprep.subr.mxu0 0.0
      %2065 = vmatpush1.msra.mxu0 0.0
      %2066 = vmatprep.subr.mxu0 0.0
      %2067 = vmatpush1.msra.mxu0 0.0
      %2068 = vmatprep.subr.mxu0 0.0
      %2069 = vmatpush1.msra.mxu0 0.0
      %2070 = vmatprep.subr.mxu0 0.0
      %2071 = vmatpush1.msra.mxu0 0.0
      %2072 = vmatprep.subr.mxu0 0.0
      %2073 = vmatpush1.msra.mxu0 0.0
      %2074 = vmatprep.subr.mxu0 0.0
      %2075 = vmatpush1.msra.mxu0 0.0
      %2076 = vmatprep.subr.mxu0 0.0
      %2077 = vmatpush1.msra.mxu0 0.0
      %2078 = vmatprep.subr.mxu0 0.0
      %2079 = vmatpush1.msra.mxu0 0.0
      %2080 = vmatprep.subr.mxu0 0.0
      %2081 = vmatpush1.msra.mxu0 0.0
      %2082 = vmatprep.subr.mxu0 0.0
      %2083 = vmatpush1.msra.mxu0 0.0
      %2084 = vmatprep.subr.mxu0 0.0
      %2085 = vmatpush1.msra.mxu0 0.0
      %2086 = vmatprep.subr.mxu0 0.0
      %2087 = vmatpush1.msra.mxu0 0.0
      %2088 = vmatprep.subr.mxu0 0.0
      %2089 = vmatpush1.msra.mxu0 0.0
      %2090 = vmatprep.subr.mxu0 0.0
      %2091 = vmatpush1.msra.mxu0 0.0
      %2092 = vmatprep.subr.mxu0 0.0
      %2093 = vmatpush1.msra.mxu0 0.0
      %2094 = vmatprep.subr.mxu0 0.0
      %2095 = vmatpush1.msra.mxu0 0.0
      %2096 = vmatprep.subr.mxu0 0.0
      %2097 = vmatpush1.msra.mxu0 0.0
      %2098 = vmatprep.subr.mxu0 0.0
      %2099 = vmatpush1.msra.mxu0 0.0
      %2100 = vmatprep.subr.mxu0 0.0
      %2101 = vmatpush1.msra.mxu0 0.0
      %2102 = vmatprep.subr.mxu0 0.0
      %2103 = vmatpush1.msra.mxu0 0.0
      %2104 = vmatprep.subr.mxu0 0.0
      %2105 = vmatpush1.msra.mxu0 0.0
      %2106 = vmatprep.subr.mxu0 0.0
      %2107 = vmatpush1.msra.mxu0 0.0
      %2108 = vmatprep.subr.mxu0 0.0
      %2109 = vmatpush1.msra.mxu0 0.0
      %2110 = vmatprep.subr.mxu0 0.0
      %2111 = vmatpush1.msra.mxu0 0.0
      %2112 = vmatprep.subr.mxu0 0.0
      %2113 = vmatpush1.msra.mxu0 0.0
      %2114 = vmatprep.subr.mxu0 0.0
      %2115 = vmatpush1.msra.mxu0 0.0
      %2116 = vmatprep.subr.mxu0 0.0
      %2117 = vmatpush1.msra.mxu0 0.0
      %2118 = vmatprep.subr.mxu0 0.0
      %2119 = vmatpush1.msra.mxu0 0.0
      %2120 = vmatprep.subr.mxu0 0.0
      %2121 = vmatpush1.msra.mxu0 0.0
      %2122 = vmatprep.subr.mxu0 0.0
      %2123 = vmatpush1.msra.mxu0 0.0
      %2124 = vmatprep.mubr.f32.mxu0 0.0
      %2125 = vmatmul.mubr.f32.gmra.mrb[0].mxu0 %v2052
      %v2126 = vpop.f32.mrb[0].mxu0
      %v2127 = vadd.f32 0.0, %v2126
      %v2128 = vpop.f32.mrb[0].mxu0
      %v2129 = vadd.f32 0.0, %v2128
      %2130 = vdwg.mxu0
      %v2131 = vadd.f32 %v2039, %v2127
      %v2132 = vadd.f32 %v2040, %v2129
      %2133 = vrot.lane.b32.xlu0 %v1590, 113
      %v2134 = vpop.permute.xlu0 %2133
      %2135 = vrot.lane.b32.xlu0 %v1591, 113
      %v2136 = vpop.permute.xlu0 %2135
      %v2137 = vsel %vm1268, %v2134, %v2136
      %v2138 = vsel %vm1268, %v2136, %v2134
      %v2139 = vmul.f32 %v2137, %v1277
      %v2140 = vmul.f32 %v2138, %v1281
      %s2141 = scalar_lea.vmem %s4, 24
      %v2142 = vld [vmem:[%s2141] sm:$0xf]
      %v2144 = vsel %vm684, %v2142, 0
      %v2147 = vsel %vm688, %v2139, 0
      %v2150 = vsel %vm688, %v2140, 0
      %2152 = vmatprep.subr.mxu0 %v2150
      %2153 = vmatpush1.msra.mxu0 %v2147
      %2154 = vmatprep.subr.mxu0 0.0
      %2155 = vmatpush1.msra.mxu0 0.0
      %2156 = vmatprep.subr.mxu0 0.0
      %2157 = vmatpush1.msra.mxu0 0.0
      %2158 = vmatprep.subr.mxu0 0.0
      %2159 = vmatpush1.msra.mxu0 0.0
      %2160 = vmatprep.subr.mxu0 0.0
      %2161 = vmatpush1.msra.mxu0 0.0
      %2162 = vmatprep.subr.mxu0 0.0
      %2163 = vmatpush1.msra.mxu0 0.0
      %2164 = vmatprep.subr.mxu0 0.0
      %2165 = vmatpush1.msra.mxu0 0.0
      %2166 = vmatprep.subr.mxu0 0.0
      %2167 = vmatpush1.msra.mxu0 0.0
      %2168 = vmatprep.subr.mxu0 0.0
      %2169 = vmatpush1.msra.mxu0 0.0
      %2170 = vmatprep.subr.mxu0 0.0
      %2171 = vmatpush1.msra.mxu0 0.0
      %2172 = vmatprep.subr.mxu0 0.0
      %2173 = vmatpush1.msra.mxu0 0.0
      %2174 = vmatprep.subr.mxu0 0.0
      %2175 = vmatpush1.msra.mxu0 0.0
      %2176 = vmatprep.subr.mxu0 0.0
      %2177 = vmatpush1.msra.mxu0 0.0
      %2178 = vmatprep.subr.mxu0 0.0
      %2179 = vmatpush1.msra.mxu0 0.0
      %2180 = vmatprep.subr.mxu0 0.0
      %2181 = vmatpush1.msra.mxu0 0.0
      %2182 = vmatprep.subr.mxu0 0.0
      %2183 = vmatpush1.msra.mxu0 0.0
      %2184 = vmatprep.subr.mxu0 0.0
      %2185 = vmatpush1.msra.mxu0 0.0
      %2186 = vmatprep.subr.mxu0 0.0
      %2187 = vmatpush1.msra.mxu0 0.0
      %2188 = vmatprep.subr.mxu0 0.0
      %2189 = vmatpush1.msra.mxu0 0.0
      %2190 = vmatprep.subr.mxu0 0.0
      %2191 = vmatpush1.msra.mxu0 0.0
      %2192 = vmatprep.subr.mxu0 0.0
      %2193 = vmatpush1.msra.mxu0 0.0
      %2194 = vmatprep.subr.mxu0 0.0
      %2195 = vmatpush1.msra.mxu0 0.0
      %2196 = vmatprep.subr.mxu0 0.0
      %2197 = vmatpush1.msra.mxu0 0.0
      %2198 = vmatprep.subr.mxu0 0.0
      %2199 = vmatpush1.msra.mxu0 0.0
      %2200 = vmatprep.subr.mxu0 0.0
      %2201 = vmatpush1.msra.mxu0 0.0
      %2202 = vmatprep.subr.mxu0 0.0
      %2203 = vmatpush1.msra.mxu0 0.0
      %2204 = vmatprep.subr.mxu0 0.0
      %2205 = vmatpush1.msra.mxu0 0.0
      %2206 = vmatprep.subr.mxu0 0.0
      %2207 = vmatpush1.msra.mxu0 0.0
      %2208 = vmatprep.subr.mxu0 0.0
      %2209 = vmatpush1.msra.mxu0 0.0
      %2210 = vmatprep.subr.mxu0 0.0
      %2211 = vmatpush1.msra.mxu0 0.0
      %2212 = vmatprep.subr.mxu0 0.0
      %2213 = vmatpush1.msra.mxu0 0.0
      %2214 = vmatprep.subr.mxu0 0.0
      %2215 = vmatpush1.msra.mxu0 0.0
      %2216 = vmatprep.mubr.f32.mxu0 0.0
      %2217 = vmatmul.mubr.f32.gmra.mrb[0].mxu0 %v2144
      %v2218 = vpop.f32.mrb[0].mxu0
      %v2219 = vadd.f32 0.0, %v2218
      %v2220 = vpop.f32.mrb[0].mxu0
      %v2221 = vadd.f32 0.0, %v2220
      %2222 = vdwg.mxu0
      %v2223 = vadd.f32 %v2131, %v2219
      %v2224 = vadd.f32 %v2132, %v2221
      %2225 = vrot.lane.b32.xlu0 %v1590, 112
      %v2226 = vpop.permute.xlu0 %2225
      %2227 = vrot.lane.b32.xlu0 %v1591, 112
      %v2228 = vpop.permute.xlu0 %2227
      %v2229 = vsel %vm1374, %v2226, %v2228
      %v2230 = vsel %vm1374, %v2228, %v2226
      %v2231 = vmul.f32 %v2229, %v1383
      %v2232 = vmul.f32 %v2230, %v1387
      %s2233 = scalar_lea.vmem %s4, 28
      %v2234 = vld [vmem:[%s2233] sm:$0xf]
      %v2236 = vsel %vm684, %v2234, 0
      %v2239 = vsel %vm688, %v2231, 0
      %v2242 = vsel %vm688, %v2232, 0
      %2244 = vmatprep.subr.mxu0 %v2242
      %2245 = vmatpush1.msra.mxu0 %v2239
      %2246 = vmatprep.subr.mxu0 0.0
      %2247 = vmatpush1.msra.mxu0 0.0
      %2248 = vmatprep.subr.mxu0 0.0
      %2249 = vmatpush1.msra.mxu0 0.0
      %2250 = vmatprep.subr.mxu0 0.0
      %2251 = vmatpush1.msra.mxu0 0.0
      %2252 = vmatprep.subr.mxu0 0.0
      %2253 = vmatpush1.msra.mxu0 0.0
      %2254 = vmatprep.subr.mxu0 0.0
      %2255 = vmatpush1.msra.mxu0 0.0
      %2256 = vmatprep.subr.mxu0 0.0
      %2257 = vmatpush1.msra.mxu0 0.0
      %2258 = vmatprep.subr.mxu0 0.0
      %2259 = vmatpush1.msra.mxu0 0.0
      %2260 = vmatprep.subr.mxu0 0.0
      %2261 = vmatpush1.msra.mxu0 0.0
      %2262 = vmatprep.subr.mxu0 0.0
      %2263 = vmatpush1.msra.mxu0 0.0
      %2264 = vmatprep.subr.mxu0 0.0
      %2265 = vmatpush1.msra.mxu0 0.0
      %2266 = vmatprep.subr.mxu0 0.0
      %2267 = vmatpush1.msra.mxu0 0.0
      %2268 = vmatprep.subr.mxu0 0.0
      %2269 = vmatpush1.msra.mxu0 0.0
      %2270 = vmatprep.subr.mxu0 0.0
      %2271 = vmatpush1.msra.mxu0 0.0
      %2272 = vmatprep.subr.mxu0 0.0
      %2273 = vmatpush1.msra.mxu0 0.0
      %2274 = vmatprep.subr.mxu0 0.0
      %2275 = vmatpush1.msra.mxu0 0.0
      %2276 = vmatprep.subr.mxu0 0.0
      %2277 = vmatpush1.msra.mxu0 0.0
      %2278 = vmatprep.subr.mxu0 0.0
      %2279 = vmatpush1.msra.mxu0 0.0
      %2280 = vmatprep.subr.mxu0 0.0
      %2281 = vmatpush1.msra.mxu0 0.0
      %2282 = vmatprep.subr.mxu0 0.0
      %2283 = vmatpush1.msra.mxu0 0.0
      %2284 = vmatprep.subr.mxu0 0.0
      %2285 = vmatpush1.msra.mxu0 0.0
      %2286 = vmatprep.subr.mxu0 0.0
      %2287 = vmatpush1.msra.mxu0 0.0
      %2288 = vmatprep.subr.mxu0 0.0
      %2289 = vmatpush1.msra.mxu0 0.0
      %2290 = vmatprep.subr.mxu0 0.0
      %2291 = vmatpush1.msra.mxu0 0.0
      %2292 = vmatprep.subr.mxu0 0.0
      %2293 = vmatpush1.msra.mxu0 0.0
      %2294 = vmatprep.subr.mxu0 0.0
      %2295 = vmatpush1.msra.mxu0 0.0
      %2296 = vmatprep.subr.mxu0 0.0
      %2297 = vmatpush1.msra.mxu0 0.0
      %2298 = vmatprep.subr.mxu0 0.0
      %2299 = vmatpush1.msra.mxu0 0.0
      %2300 = vmatprep.subr.mxu0 0.0
      %2301 = vmatpush1.msra.mxu0 0.0
      %2302 = vmatprep.subr.mxu0 0.0
      %2303 = vmatpush1.msra.mxu0 0.0
      %2304 = vmatprep.subr.mxu0 0.0
      %2305 = vmatpush1.msra.mxu0 0.0
      %2306 = vmatprep.subr.mxu0 0.0
      %2307 = vmatpush1.msra.mxu0 0.0
      %2308 = vmatprep.mubr.f32.mxu0 0.0
      %2309 = vmatmul.mubr.f32.gmra.mrb[0].mxu0 %v2236
      %v2310 = vpop.f32.mrb[0].mxu0
      %v2311 = vadd.f32 0.0, %v2310
      %v2312 = vpop.f32.mrb[0].mxu0
      %v2313 = vadd.f32 0.0, %v2312
      %2314 = vdwg.mxu0
      %v2315 = vadd.f32 %v2223, %v2311
      %v2316 = vadd.f32 %v2224, %v2313
      %2317 = vrot.lane.b32.xlu0 %v1590, 111
      %v2318 = vpop.permute.xlu0 %2317
      %2319 = vrot.lane.b32.xlu0 %v1591, 111
      %v2320 = vpop.permute.xlu0 %2319
      %v2321 = vsel %vm1480, %v2318, %v2320
      %v2322 = vsel %vm1480, %v2320, %v2318
      %v2323 = vmul.f32 %v2321, %v1489
      %v2324 = vmul.f32 %v2322, %v1493
      %s2325 = scalar_lea.vmem %s4, 32
      %v2326 = vld [vmem:[%s2325] sm:$0xf]
      %v2328 = vsel %vm684, %v2326, 0
      %v2331 = vsel %vm688, %v2323, 0
      %v2334 = vsel %vm688, %v2324, 0
      %2336 = vmatprep.subr.mxu0 %v2334
      %2337 = vmatpush1.msra.mxu0 %v2331
      %2338 = vmatprep.subr.mxu0 0.0
      %2339 = vmatpush1.msra.mxu0 0.0
      %2340 = vmatprep.subr.mxu0 0.0
      %2341 = vmatpush1.msra.mxu0 0.0
      %2342 = vmatprep.subr.mxu0 0.0
      %2343 = vmatpush1.msra.mxu0 0.0
      %2344 = vmatprep.subr.mxu0 0.0
      %2345 = vmatpush1.msra.mxu0 0.0
      %2346 = vmatprep.subr.mxu0 0.0
      %2347 = vmatpush1.msra.mxu0 0.0
      %2348 = vmatprep.subr.mxu0 0.0
      %2349 = vmatpush1.msra.mxu0 0.0
      %2350 = vmatprep.subr.mxu0 0.0
      %2351 = vmatpush1.msra.mxu0 0.0
      %2352 = vmatprep.subr.mxu0 0.0
      %2353 = vmatpush1.msra.mxu0 0.0
      %2354 = vmatprep.subr.mxu0 0.0
      %2355 = vmatpush1.msra.mxu0 0.0
      %2356 = vmatprep.subr.mxu0 0.0
      %2357 = vmatpush1.msra.mxu0 0.0
      %2358 = vmatprep.subr.mxu0 0.0
      %2359 = vmatpush1.msra.mxu0 0.0
      %2360 = vmatprep.subr.mxu0 0.0
      %2361 = vmatpush1.msra.mxu0 0.0
      %2362 = vmatprep.subr.mxu0 0.0
      %2363 = vmatpush1.msra.mxu0 0.0
      %2364 = vmatprep.subr.mxu0 0.0
      %2365 = vmatpush1.msra.mxu0 0.0
      %2366 = vmatprep.subr.mxu0 0.0
      %2367 = vmatpush1.msra.mxu0 0.0
      %2368 = vmatprep.subr.mxu0 0.0
      %2369 = vmatpush1.msra.mxu0 0.0
      %2370 = vmatprep.subr.mxu0 0.0
      %2371 = vmatpush1.msra.mxu0 0.0
      %2372 = vmatprep.subr.mxu0 0.0
      %2373 = vmatpush1.msra.mxu0 0.0
      %2374 = vmatprep.subr.mxu0 0.0
      %2375 = vmatpush1.msra.mxu0 0.0
      %2376 = vmatprep.subr.mxu0 0.0
      %2377 = vmatpush1.msra.mxu0 0.0
      %2378 = vmatprep.subr.mxu0 0.0
      %2379 = vmatpush1.msra.mxu0 0.0
      %2380 = vmatprep.subr.mxu0 0.0
      %2381 = vmatpush1.msra.mxu0 0.0
      %2382 = vmatprep.subr.mxu0 0.0
      %2383 = vmatpush1.msra.mxu0 0.0
      %2384 = vmatprep.subr.mxu0 0.0
      %2385 = vmatpush1.msra.mxu0 0.0
      %2386 = vmatprep.subr.mxu0 0.0
      %2387 = vmatpush1.msra.mxu0 0.0
      %2388 = vmatprep.subr.mxu0 0.0
      %2389 = vmatpush1.msra.mxu0 0.0
      %2390 = vmatprep.subr.mxu0 0.0
      %2391 = vmatpush1.msra.mxu0 0.0
      %2392 = vmatprep.subr.mxu0 0.0
      %2393 = vmatpush1.msra.mxu0 0.0
      %2394 = vmatprep.subr.mxu0 0.0
      %2395 = vmatpush1.msra.mxu0 0.0
      %2396 = vmatprep.subr.mxu0 0.0
      %2397 = vmatpush1.msra.mxu0 0.0
      %2398 = vmatprep.subr.mxu0 0.0
      %2399 = vmatpush1.msra.mxu0 0.0
      %2400 = vmatprep.mubr.f32.mxu0 0.0
      %2401 = vmatmul.mubr.f32.gmra.mrb[0].mxu0 %v2328
      %v2402 = vpop.f32.mrb[0].mxu0
      %v2403 = vadd.f32 0.0, %v2402
      %v2404 = vpop.f32.mrb[0].mxu0
      %v2405 = vadd.f32 0.0, %v2404
      %2406 = vdwg.mxu0
      %v2407 = vadd.f32 %v2315, %v2403
      %v2408 = vadd.f32 %v2316, %v2405
      %v2409 = vld [vmem:[%s5] sm:$0xf]
      %2411 = vset.pattern.permute.xlu0 0
      %2412 = vperm.xlu0 %2411, %v2409
      %v2413 = vpop.permute.xlu0 %2412
      %v2415 = vadd.f32 %v2407, %v2413
      %v2416 = vadd.f32 %v2408, %v2413
      %v2417 = vadd.f32 %v2415, %v631
      %v2418 = vadd.f32 %v2416, %v634
      %v2419 = vmax.f32 %v2417, 0.0
      %v2420 = vmax.f32 %v2418, 0.0
      %2421 = vrot.lane.b32.xlu0 %v632, 9
      %v2422 = vpop.permute.xlu0 %2421
      %v2423 = vld [vmem:[%s15] sm:$0x1]
      %v2424 = vlaneseq
      %v2425 = vshrl.u32 %v2424, 7
      %v2426 = vsub.s32 0, %v2425
      %v2427 = vrot.slane %v2423, %v2426
      %v2428 = vmul.f32 %v2422, %v2427
      %v2429 = vld [vmem:[%s6] sm:$0xff]
      %2430 = vrot.lane.b32.xlu0 %v632, 8
      %v2431 = vpop.permute.xlu0 %2430
      %v2432 = vld [vmem:[%s15 + $0x1] sm:$0x1]
      %v2433 = vlaneseq
      %v2434 = vshrl.u32 %v2433, 7
      %v2435 = vsub.s32 0, %v2434
      %v2436 = vrot.slane %v2432, %v2435
      %v2437 = vmul.f32 %v2431, %v2436
      %s2438 = scalar_lea.vmem %s6, 8
      %v2439 = vld [vmem:[%s2438] sm:$0xff]
      %vm2440 = vcmask 64512
      %v2442 = vsel %vm2440, %v2439, 0
      %2444 = vmatprep.subr.mxu0 0.0
      %2445 = vmatpush1.msra.mxu0 %v2437
      %2446 = vmatprep.subr.mxu0 0.0
      %2447 = vmatpush1.msra.mxu0 0.0
      %2448 = vmatprep.subr.mxu0 0.0
      %2449 = vmatpush1.msra.mxu0 0.0
      %2450 = vmatprep.subr.mxu0 0.0
      %2451 = vmatpush1.msra.mxu0 0.0
      %2452 = vmatprep.subr.mxu0 0.0
      %2453 = vmatpush1.msra.mxu0 0.0
      %2454 = vmatprep.subr.mxu0 0.0
      %2455 = vmatpush1.msra.mxu0 0.0
      %2456 = vmatprep.subr.mxu0 0.0
      %2457 = vmatpush1.msra.mxu0 0.0
      %2458 = vmatprep.subr.mxu0 0.0
      %2459 = vmatpush1.msra.mxu0 0.0
      %2460 = vmatprep.subr.mxu0 0.0
      %2461 = vmatpush1.msra.mxu0 0.0
      %2462 = vmatprep.subr.mxu0 0.0
      %2463 = vmatpush1.msra.mxu0 0.0
      %2464 = vmatprep.subr.mxu0 0.0
      %2465 = vmatpush1.msra.mxu0 0.0
      %2466 = vmatprep.subr.mxu0 0.0
      %2467 = vmatpush1.msra.mxu0 0.0
      %2468 = vmatprep.subr.mxu0 0.0
      %2469 = vmatpush1.msra.mxu0 0.0
      %2470 = vmatprep.subr.mxu0 0.0
      %2471 = vmatpush1.msra.mxu0 0.0
      %2472 = vmatprep.subr.mxu0 0.0
      %2473 = vmatpush1.msra.mxu0 0.0
      %2474 = vmatprep.subr.mxu0 0.0
      %2475 = vmatpush1.msra.mxu0 0.0
      %2476 = vmatprep.subr.mxu0 0.0
      %2477 = vmatpush1.msra.mxu0 0.0
      %2478 = vmatprep.subr.mxu0 0.0
      %2479 = vmatpush1.msra.mxu0 0.0
      %2480 = vmatprep.subr.mxu0 0.0
      %2481 = vmatpush1.msra.mxu0 0.0
      %2482 = vmatprep.subr.mxu0 0.0
      %2483 = vmatpush1.msra.mxu0 0.0
      %2484 = vmatprep.subr.mxu0 0.0
      %2485 = vmatpush1.msra.mxu0 0.0
      %2486 = vmatprep.subr.mxu0 0.0
      %2487 = vmatpush1.msra.mxu0 0.0
      %2488 = vmatprep.subr.mxu0 0.0
      %2489 = vmatpush1.msra.mxu0 0.0
      %2490 = vmatprep.subr.mxu0 0.0
      %2491 = vmatpush1.msra.mxu0 0.0
      %2492 = vmatprep.subr.mxu0 0.0
      %2493 = vmatpush1.msra.mxu0 0.0
      %2494 = vmatprep.subr.mxu0 0.0
      %2495 = vmatpush1.msra.mxu0 0.0
      %2496 = vmatprep.subr.mxu0 0.0
      %2497 = vmatpush1.msra.mxu0 0.0
      %2498 = vmatprep.subr.mxu0 0.0
      %2499 = vmatpush1.msra.mxu0 0.0
      %2500 = vmatprep.subr.mxu0 0.0
      %2501 = vmatpush1.msra.mxu0 0.0
      %2502 = vmatprep.subr.mxu0 0.0
      %2503 = vmatpush1.msra.mxu0 0.0
      %2504 = vmatprep.subr.mxu0 0.0
      %2505 = vmatpush1.msra.mxu0 0.0
      %2506 = vmatprep.subr.mxu0 0.0
      %2507 = vmatpush1.msra.mxu0 0.0
      %2508 = vmatprep.mubr.f32.mxu0 0.0
      %2509 = vmatmul.mubr.f32.gmra.mrb[0].mxu0 %v2442
      %v2510 = vpop.f32.mrb[0].mxu0
      %v2511 = vadd.f32 0.0, %v2510
      %v2512 = vpop.f32.mrb[0].mxu0
      %2513 = vdwg.mxu0
      %v2515 = vsel %vm2440, %v2429, 0
      %2517 = vmatprep.subr.mxu0 0.0
      %2518 = vmatpush1.msra.mxu0 %v2428
      %2519 = vmatprep.subr.mxu0 0.0
      %2520 = vmatpush1.msra.mxu0 0.0
      %2521 = vmatprep.subr.mxu0 0.0
      %2522 = vmatpush1.msra.mxu0 0.0
      %2523 = vmatprep.subr.mxu0 0.0
      %2524 = vmatpush1.msra.mxu0 0.0
      %2525 = vmatprep.subr.mxu0 0.0
      %2526 = vmatpush1.msra.mxu0 0.0
      %2527 = vmatprep.subr.mxu0 0.0
      %2528 = vmatpush1.msra.mxu0 0.0
      %2529 = vmatprep.subr.mxu0 0.0
      %2530 = vmatpush1.msra.mxu0 0.0
      %2531 = vmatprep.subr.mxu0 0.0
      %2532 = vmatpush1.msra.mxu0 0.0
      %2533 = vmatprep.subr.mxu0 0.0
      %2534 = vmatpush1.msra.mxu0 0.0
      %2535 = vmatprep.subr.mxu0 0.0
      %2536 = vmatpush1.msra.mxu0 0.0
      %2537 = vmatprep.subr.mxu0 0.0
      %2538 = vmatpush1.msra.mxu0 0.0
      %2539 = vmatprep.subr.mxu0 0.0
      %2540 = vmatpush1.msra.mxu0 0.0
      %2541 = vmatprep.subr.mxu0 0.0
      %2542 = vmatpush1.msra.mxu0 0.0
      %2543 = vmatprep.subr.mxu0 0.0
      %2544 = vmatpush1.msra.mxu0 0.0
      %2545 = vmatprep.subr.mxu0 0.0
      %2546 = vmatpush1.msra.mxu0 0.0
      %2547 = vmatprep.subr.mxu0 0.0
      %2548 = vmatpush1.msra.mxu0 0.0
      %2549 = vmatprep.subr.mxu0 0.0
      %2550 = vmatpush1.msra.mxu0 0.0
      %2551 = vmatprep.subr.mxu0 0.0
      %2552 = vmatpush1.msra.mxu0 0.0
      %2553 = vmatprep.subr.mxu0 0.0
      %2554 = vmatpush1.msra.mxu0 0.0
      %2555 = vmatprep.subr.mxu0 0.0
      %2556 = vmatpush1.msra.mxu0 0.0
      %2557 = vmatprep.subr.mxu0 0.0
      %2558 = vmatpush1.msra.mxu0 0.0
      %2559 = vmatprep.subr.mxu0 0.0
      %2560 = vmatpush1.msra.mxu0 0.0
      %2561 = vmatprep.subr.mxu0 0.0
      %2562 = vmatpush1.msra.mxu0 0.0
      %2563 = vmatprep.subr.mxu0 0.0
      %2564 = vmatpush1.msra.mxu0 0.0
      %2565 = vmatprep.subr.mxu0 0.0
      %2566 = vmatpush1.msra.mxu0 0.0
      %2567 = vmatprep.subr.mxu0 0.0
      %2568 = vmatpush1.msra.mxu0 0.0
      %2569 = vmatprep.subr.mxu0 0.0
      %2570 = vmatpush1.msra.mxu0 0.0
      %2571 = vmatprep.subr.mxu0 0.0
      %2572 = vmatpush1.msra.mxu0 0.0
      %2573 = vmatprep.subr.mxu0 0.0
      %2574 = vmatpush1.msra.mxu0 0.0
      %2575 = vmatprep.subr.mxu0 0.0
      %2576 = vmatpush1.msra.mxu0 0.0
      %2577 = vmatprep.subr.mxu0 0.0
      %2578 = vmatpush1.msra.mxu0 0.0
      %2579 = vmatprep.subr.mxu0 0.0
      %2580 = vmatpush1.msra.mxu0 0.0
      %2581 = vmatprep.mubr.f32.mxu0 0.0
      %2582 = vmatmul.mubr.f32.gmra.mrb[0].mxu0 %v2515
      %v2583 = vpop.f32.mrb[0].mxu0
      %v2584 = vadd.f32 %v2511, %v2583
      %v2585 = vpop.f32.mrb[0].mxu0
      %2586 = vdwg.mxu0
      %2587 = vrot.lane.b32.xlu0 %v632, 7
      %v2588 = vpop.permute.xlu0 %2587
      %v2589 = vld [vmem:[%s15 + $0x2] sm:$0x1]
      %v2590 = vlaneseq
      %v2591 = vshrl.u32 %v2590, 7
      %v2592 = vsub.s32 0, %v2591
      %v2593 = vrot.slane %v2589, %v2592
      %v2594 = vmul.f32 %v2588, %v2593
      %s2595 = scalar_lea.vmem %s6, 16
      %v2596 = vld [vmem:[%s2595] sm:$0xff]
      %v2598 = vsel %vm2440, %v2596, 0
      %2600 = vmatprep.subr.mxu0 0.0
      %2601 = vmatpush1.msra.mxu0 %v2594
      %2602 = vmatprep.subr.mxu0 0.0
      %2603 = vmatpush1.msra.mxu0 0.0
      %2604 = vmatprep.subr.mxu0 0.0
      %2605 = vmatpush1.msra.mxu0 0.0
      %2606 = vmatprep.subr.mxu0 0.0
      %2607 = vmatpush1.msra.mxu0 0.0
      %2608 = vmatprep.subr.mxu0 0.0
      %2609 = vmatpush1.msra.mxu0 0.0
      %2610 = vmatprep.subr.mxu0 0.0
      %2611 = vmatpush1.msra.mxu0 0.0
      %2612 = vmatprep.subr.mxu0 0.0
      %2613 = vmatpush1.msra.mxu0 0.0
      %2614 = vmatprep.subr.mxu0 0.0
      %2615 = vmatpush1.msra.mxu0 0.0
      %2616 = vmatprep.subr.mxu0 0.0
      %2617 = vmatpush1.msra.mxu0 0.0
      %2618 = vmatprep.subr.mxu0 0.0
      %2619 = vmatpush1.msra.mxu0 0.0
      %2620 = vmatprep.subr.mxu0 0.0
      %2621 = vmatpush1.msra.mxu0 0.0
      %2622 = vmatprep.subr.mxu0 0.0
      %2623 = vmatpush1.msra.mxu0 0.0
      %2624 = vmatprep.subr.mxu0 0.0
      %2625 = vmatpush1.msra.mxu0 0.0
      %2626 = vmatprep.subr.mxu0 0.0
      %2627 = vmatpush1.msra.mxu0 0.0
      %2628 = vmatprep.subr.mxu0 0.0
      %2629 = vmatpush1.msra.mxu0 0.0
      %2630 = vmatprep.subr.mxu0 0.0
      %2631 = vmatpush1.msra.mxu0 0.0
      %2632 = vmatprep.subr.mxu0 0.0
      %2633 = vmatpush1.msra.mxu0 0.0
      %2634 = vmatprep.subr.mxu0 0.0
      %2635 = vmatpush1.msra.mxu0 0.0
      %2636 = vmatprep.subr.mxu0 0.0
      %2637 = vmatpush1.msra.mxu0 0.0
      %2638 = vmatprep.subr.mxu0 0.0
      %2639 = vmatpush1.msra.mxu0 0.0
      %2640 = vmatprep.subr.mxu0 0.0
      %2641 = vmatpush1.msra.mxu0 0.0
      %2642 = vmatprep.subr.mxu0 0.0
      %2643 = vmatpush1.msra.mxu0 0.0
      %2644 = vmatprep.subr.mxu0 0.0
      %2645 = vmatpush1.msra.mxu0 0.0
      %2646 = vmatprep.subr.mxu0 0.0
      %2647 = vmatpush1.msra.mxu0 0.0
      %2648 = vmatprep.subr.mxu0 0.0
      %2649 = vmatpush1.msra.mxu0 0.0
      %2650 = vmatprep.subr.mxu0 0.0
      %2651 = vmatpush1.msra.mxu0 0.0
      %2652 = vmatprep.subr.mxu0 0.0
      %2653 = vmatpush1.msra.mxu0 0.0
      %2654 = vmatprep.subr.mxu0 0.0
      %2655 = vmatpush1.msra.mxu0 0.0
      %2656 = vmatprep.subr.mxu0 0.0
      %2657 = vmatpush1.msra.mxu0 0.0
      %2658 = vmatprep.subr.mxu0 0.0
      %2659 = vmatpush1.msra.mxu0 0.0
      %2660 = vmatprep.subr.mxu0 0.0
      %2661 = vmatpush1.msra.mxu0 0.0
      %2662 = vmatprep.subr.mxu0 0.0
      %2663 = vmatpush1.msra.mxu0 0.0
      %2664 = vmatprep.mubr.f32.mxu0 0.0
      %2665 = vmatmul.mubr.f32.gmra.mrb[0].mxu0 %v2598
      %v2666 = vpop.f32.mrb[0].mxu0
      %v2667 = vadd.f32 0.0, %v2666
      %v2668 = vpop.f32.mrb[0].mxu0
      %2669 = vdwg.mxu0
      %v2670 = vadd.f32 %v2584, %v2667
      %2671 = vrot.lane.b32.xlu0 %v632, 1
      %v2672 = vpop.permute.xlu0 %2671
      %v2673 = vld [vmem:[%s15 + $0x3] sm:$0x1]
      %v2674 = vlaneseq
      %v2675 = vshrl.u32 %v2674, 7
      %v2676 = vsub.s32 0, %v2675
      %v2677 = vrot.slane %v2673, %v2676
      %v2678 = vmul.f32 %v2672, %v2677
      %s2679 = scalar_lea.vmem %s6, 24
      %v2680 = vld [vmem:[%s2679] sm:$0xff]
      %v2682 = vsel %vm2440, %v2680, 0
      %2684 = vmatprep.subr.mxu0 0.0
      %2685 = vmatpush1.msra.mxu0 %v2678
      %2686 = vmatprep.subr.mxu0 0.0
      %2687 = vmatpush1.msra.mxu0 0.0
      %2688 = vmatprep.subr.mxu0 0.0
      %2689 = vmatpush1.msra.mxu0 0.0
      %2690 = vmatprep.subr.mxu0 0.0
      %2691 = vmatpush1.msra.mxu0 0.0
      %2692 = vmatprep.subr.mxu0 0.0
      %2693 = vmatpush1.msra.mxu0 0.0
      %2694 = vmatprep.subr.mxu0 0.0
      %2695 = vmatpush1.msra.mxu0 0.0
      %2696 = vmatprep.subr.mxu0 0.0
      %2697 = vmatpush1.msra.mxu0 0.0
      %2698 = vmatprep.subr.mxu0 0.0
      %2699 = vmatpush1.msra.mxu0 0.0
      %2700 = vmatprep.subr.mxu0 0.0
      %2701 = vmatpush1.msra.mxu0 0.0
      %2702 = vmatprep.subr.mxu0 0.0
      %2703 = vmatpush1.msra.mxu0 0.0
      %2704 = vmatprep.subr.mxu0 0.0
      %2705 = vmatpush1.msra.mxu0 0.0
      %2706 = vmatprep.subr.mxu0 0.0
      %2707 = vmatpush1.msra.mxu0 0.0
      %2708 = vmatprep.subr.mxu0 0.0
      %2709 = vmatpush1.msra.mxu0 0.0
      %2710 = vmatprep.subr.mxu0 0.0
      %2711 = vmatpush1.msra.mxu0 0.0
      %2712 = vmatprep.subr.mxu0 0.0
      %2713 = vmatpush1.msra.mxu0 0.0
      %2714 = vmatprep.subr.mxu0 0.0
      %2715 = vmatpush1.msra.mxu0 0.0
      %2716 = vmatprep.subr.mxu0 0.0
      %2717 = vmatpush1.msra.mxu0 0.0
      %2718 = vmatprep.subr.mxu0 0.0
      %2719 = vmatpush1.msra.mxu0 0.0
      %2720 = vmatprep.subr.mxu0 0.0
      %2721 = vmatpush1.msra.mxu0 0.0
      %2722 = vmatprep.subr.mxu0 0.0
      %2723 = vmatpush1.msra.mxu0 0.0
      %2724 = vmatprep.subr.mxu0 0.0
      %2725 = vmatpush1.msra.mxu0 0.0
      %2726 = vmatprep.subr.mxu0 0.0
      %2727 = vmatpush1.msra.mxu0 0.0
      %2728 = vmatprep.subr.mxu0 0.0
      %2729 = vmatpush1.msra.mxu0 0.0
      %2730 = vmatprep.subr.mxu0 0.0
      %2731 = vmatpush1.msra.mxu0 0.0
      %2732 = vmatprep.subr.mxu0 0.0
      %2733 = vmatpush1.msra.mxu0 0.0
      %2734 = vmatprep.subr.mxu0 0.0
      %2735 = vmatpush1.msra.mxu0 0.0
      %2736 = vmatprep.subr.mxu0 0.0
      %2737 = vmatpush1.msra.mxu0 0.0
      %2738 = vmatprep.subr.mxu0 0.0
      %2739 = vmatpush1.msra.mxu0 0.0
      %2740 = vmatprep.subr.mxu0 0.0
      %2741 = vmatpush1.msra.mxu0 0.0
      %2742 = vmatprep.subr.mxu0 0.0
      %2743 = vmatpush1.msra.mxu0 0.0
      %2744 = vmatprep.subr.mxu0 0.0
      %2745 = vmatpush1.msra.mxu0 0.0
      %2746 = vmatprep.subr.mxu0 0.0
      %2747 = vmatpush1.msra.mxu0 0.0
      %2748 = vmatprep.mubr.f32.mxu0 0.0
      %2749 = vmatmul.mubr.f32.gmra.mrb[0].mxu0 %v2682
      %v2750 = vpop.f32.mrb[0].mxu0
      %v2751 = vadd.f32 0.0, %v2750
      %v2752 = vpop.f32.mrb[0].mxu0
      %2753 = vdwg.mxu0
      %v2754 = vadd.f32 %v2670, %v2751
      %v2755 = vld [vmem:[%s15 + $0x4] sm:$0x1]
      %v2756 = vlaneseq
      %v2757 = vshrl.u32 %v2756, 7
      %v2758 = vsub.s32 0, %v2757
      %v2759 = vrot.slane %v2755, %v2758
      %v2760 = vmul.f32 %v632, %v2759
      %s2761 = scalar_lea.vmem %s6, 32
      %v2762 = vld [vmem:[%s2761] sm:$0xff]
      %v2764 = vsel %vm2440, %v2762, 0
      %2766 = vmatprep.subr.mxu0 0.0
      %2767 = vmatpush1.msra.mxu0 %v2760
      %2768 = vmatprep.subr.mxu0 0.0
      %2769 = vmatpush1.msra.mxu0 0.0
      %2770 = vmatprep.subr.mxu0 0.0
      %2771 = vmatpush1.msra.mxu0 0.0
      %2772 = vmatprep.subr.mxu0 0.0
      %2773 = vmatpush1.msra.mxu0 0.0
      %2774 = vmatprep.subr.mxu0 0.0
      %2775 = vmatpush1.msra.mxu0 0.0
      %2776 = vmatprep.subr.mxu0 0.0
      %2777 = vmatpush1.msra.mxu0 0.0
      %2778 = vmatprep.subr.mxu0 0.0
      %2779 = vmatpush1.msra.mxu0 0.0
      %2780 = vmatprep.subr.mxu0 0.0
      %2781 = vmatpush1.msra.mxu0 0.0
      %2782 = vmatprep.subr.mxu0 0.0
      %2783 = vmatpush1.msra.mxu0 0.0
      %2784 = vmatprep.subr.mxu0 0.0
      %2785 = vmatpush1.msra.mxu0 0.0
      %2786 = vmatprep.subr.mxu0 0.0
      %2787 = vmatpush1.msra.mxu0 0.0
      %2788 = vmatprep.subr.mxu0 0.0
      %2789 = vmatpush1.msra.mxu0 0.0
      %2790 = vmatprep.subr.mxu0 0.0
      %2791 = vmatpush1.msra.mxu0 0.0
      %2792 = vmatprep.subr.mxu0 0.0
      %2793 = vmatpush1.msra.mxu0 0.0
      %2794 = vmatprep.subr.mxu0 0.0
      %2795 = vmatpush1.msra.mxu0 0.0
      %2796 = vmatprep.subr.mxu0 0.0
      %2797 = vmatpush1.msra.mxu0 0.0
      %2798 = vmatprep.subr.mxu0 0.0
      %2799 = vmatpush1.msra.mxu0 0.0
      %2800 = vmatprep.subr.mxu0 0.0
      %2801 = vmatpush1.msra.mxu0 0.0
      %2802 = vmatprep.subr.mxu0 0.0
      %2803 = vmatpush1.msra.mxu0 0.0
      %2804 = vmatprep.subr.mxu0 0.0
      %2805 = vmatpush1.msra.mxu0 0.0
      %2806 = vmatprep.subr.mxu0 0.0
      %2807 = vmatpush1.msra.mxu0 0.0
      %2808 = vmatprep.subr.mxu0 0.0
      %2809 = vmatpush1.msra.mxu0 0.0
      %2810 = vmatprep.subr.mxu0 0.0
      %2811 = vmatpush1.msra.mxu0 0.0
      %2812 = vmatprep.subr.mxu0 0.0
      %2813 = vmatpush1.msra.mxu0 0.0
      %2814 = vmatprep.subr.mxu0 0.0
      %2815 = vmatpush1.msra.mxu0 0.0
      %2816 = vmatprep.subr.mxu0 0.0
      %2817 = vmatpush1.msra.mxu0 0.0
      %2818 = vmatprep.subr.mxu0 0.0
      %2819 = vmatpush1.msra.mxu0 0.0
      %2820 = vmatprep.subr.mxu0 0.0
      %2821 = vmatpush1.msra.mxu0 0.0
      %2822 = vmatprep.subr.mxu0 0.0
      %2823 = vmatpush1.msra.mxu0 0.0
      %2824 = vmatprep.subr.mxu0 0.0
      %2825 = vmatpush1.msra.mxu0 0.0
      %2826 = vmatprep.subr.mxu0 0.0
      %2827 = vmatpush1.msra.mxu0 0.0
      %2828 = vmatprep.subr.mxu0 0.0
      %2829 = vmatpush1.msra.mxu0 0.0
      %2830 = vmatprep.mubr.f32.mxu0 0.0
      %2831 = vmatmul.mubr.f32.gmra.mrb[0].mxu0 %v2764
      %v2832 = vpop.f32.mrb[0].mxu0
      %v2833 = vadd.f32 0.0, %v2832
      %v2834 = vpop.f32.mrb[0].mxu0
      %2835 = vdwg.mxu0
      %v2836 = vadd.f32 %v2754, %v2833
      %2837 = vrot.lane.b32.xlu0 %v632, 127
      %v2838 = vpop.permute.xlu0 %2837
      %v2839 = vld [vmem:[%s15 + $0x5] sm:$0x1]
      %v2840 = vlaneseq
      %v2841 = vshrl.u32 %v2840, 7
      %v2842 = vsub.s32 0, %v2841
      %v2843 = vrot.slane %v2839, %v2842
      %v2844 = vmul.f32 %v2838, %v2843
      %s2845 = scalar_lea.vmem %s6, 40
      %v2846 = vld [vmem:[%s2845] sm:$0xff]
      %v2848 = vsel %vm2440, %v2846, 0
      %2850 = vmatprep.subr.mxu0 0.0
      %2851 = vmatpush1.msra.mxu0 %v2844
      %2852 = vmatprep.subr.mxu0 0.0
      %2853 = vmatpush1.msra.mxu0 0.0
      %2854 = vmatprep.subr.mxu0 0.0
      %2855 = vmatpush1.msra.mxu0 0.0
      %2856 = vmatprep.subr.mxu0 0.0
      %2857 = vmatpush1.msra.mxu0 0.0
      %2858 = vmatprep.subr.mxu0 0.0
      %2859 = vmatpush1.msra.mxu0 0.0
      %2860 = vmatprep.subr.mxu0 0.0
      %2861 = vmatpush1.msra.mxu0 0.0
      %2862 = vmatprep.subr.mxu0 0.0
      %2863 = vmatpush1.msra.mxu0 0.0
      %2864 = vmatprep.subr.mxu0 0.0
      %2865 = vmatpush1.msra.mxu0 0.0
      %2866 = vmatprep.subr.mxu0 0.0
      %2867 = vmatpush1.msra.mxu0 0.0
      %2868 = vmatprep.subr.mxu0 0.0
      %2869 = vmatpush1.msra.mxu0 0.0
      %2870 = vmatprep.subr.mxu0 0.0
      %2871 = vmatpush1.msra.mxu0 0.0
      %2872 = vmatprep.subr.mxu0 0.0
      %2873 = vmatpush1.msra.mxu0 0.0
      %2874 = vmatprep.subr.mxu0 0.0
      %2875 = vmatpush1.msra.mxu0 0.0
      %2876 = vmatprep.subr.mxu0 0.0
      %2877 = vmatpush1.msra.mxu0 0.0
      %2878 = vmatprep.subr.mxu0 0.0
      %2879 = vmatpush1.msra.mxu0 0.0
      %2880 = vmatprep.subr.mxu0 0.0
      %2881 = vmatpush1.msra.mxu0 0.0
      %2882 = vmatprep.subr.mxu0 0.0
      %2883 = vmatpush1.msra.mxu0 0.0
      %2884 = vmatprep.subr.mxu0 0.0
      %2885 = vmatpush1.msra.mxu0 0.0
      %2886 = vmatprep.subr.mxu0 0.0
      %2887 = vmatpush1.msra.mxu0 0.0
      %2888 = vmatprep.subr.mxu0 0.0
      %2889 = vmatpush1.msra.mxu0 0.0
      %2890 = vmatprep.subr.mxu0 0.0
      %2891 = vmatpush1.msra.mxu0 0.0
      %2892 = vmatprep.subr.mxu0 0.0
      %2893 = vmatpush1.msra.mxu0 0.0
      %2894 = vmatprep.subr.mxu0 0.0
      %2895 = vmatpush1.msra.mxu0 0.0
      %2896 = vmatprep.subr.mxu0 0.0
      %2897 = vmatpush1.msra.mxu0 0.0
      %2898 = vmatprep.subr.mxu0 0.0
      %2899 = vmatpush1.msra.mxu0 0.0
      %2900 = vmatprep.subr.mxu0 0.0
      %2901 = vmatpush1.msra.mxu0 0.0
      %2902 = vmatprep.subr.mxu0 0.0
      %2903 = vmatpush1.msra.mxu0 0.0
      %2904 = vmatprep.subr.mxu0 0.0
      %2905 = vmatpush1.msra.mxu0 0.0
      %2906 = vmatprep.subr.mxu0 0.0
      %2907 = vmatpush1.msra.mxu0 0.0
      %2908 = vmatprep.subr.mxu0 0.0
      %2909 = vmatpush1.msra.mxu0 0.0
      %2910 = vmatprep.subr.mxu0 0.0
      %2911 = vmatpush1.msra.mxu0 0.0
      %2912 = vmatprep.subr.mxu0 0.0
      %2913 = vmatpush1.msra.mxu0 0.0
      %2914 = vmatprep.mubr.f32.mxu0 0.0
      %2915 = vmatmul.mubr.f32.gmra.mrb[0].mxu0 %v2848
      %v2916 = vpop.f32.mrb[0].mxu0
      %v2917 = vadd.f32 0.0, %v2916
      %v2918 = vpop.f32.mrb[0].mxu0
      %2919 = vdwg.mxu0
      %v2920 = vadd.f32 %v2836, %v2917
      %2921 = vrot.lane.b32.xlu0 %v632, 121
      %v2922 = vpop.permute.xlu0 %2921
      %v2923 = vld [vmem:[%s15 + $0x6] sm:$0x1]
      %v2924 = vlaneseq
      %v2925 = vshrl.u32 %v2924, 7
      %v2926 = vsub.s32 0, %v2925
      %v2927 = vrot.slane %v2923, %v2926
      %v2928 = vmul.f32 %v2922, %v2927
      %s2929 = scalar_lea.vmem %s6, 48
      %v2930 = vld [vmem:[%s2929] sm:$0xff]
      %v2932 = vsel %vm2440, %v2930, 0
      %2934 = vmatprep.subr.mxu0 0.0
      %2935 = vmatpush1.msra.mxu0 %v2928
      %2936 = vmatprep.subr.mxu0 0.0
      %2937 = vmatpush1.msra.mxu0 0.0
      %2938 = vmatprep.subr.mxu0 0.0
      %2939 = vmatpush1.msra.mxu0 0.0
      %2940 = vmatprep.subr.mxu0 0.0
      %2941 = vmatpush1.msra.mxu0 0.0
      %2942 = vmatprep.subr.mxu0 0.0
      %2943 = vmatpush1.msra.mxu0 0.0
      %2944 = vmatprep.subr.mxu0 0.0
      %2945 = vmatpush1.msra.mxu0 0.0
      %2946 = vmatprep.subr.mxu0 0.0
      %2947 = vmatpush1.msra.mxu0 0.0
      %2948 = vmatprep.subr.mxu0 0.0
      %2949 = vmatpush1.msra.mxu0 0.0
      %2950 = vmatprep.subr.mxu0 0.0
      %2951 = vmatpush1.msra.mxu0 0.0
      %2952 = vmatprep.subr.mxu0 0.0
      %2953 = vmatpush1.msra.mxu0 0.0
      %2954 = vmatprep.subr.mxu0 0.0
      %2955 = vmatpush1.msra.mxu0 0.0
      %2956 = vmatprep.subr.mxu0 0.0
      %2957 = vmatpush1.msra.mxu0 0.0
      %2958 = vmatprep.subr.mxu0 0.0
      %2959 = vmatpush1.msra.mxu0 0.0
      %2960 = vmatprep.subr.mxu0 0.0
      %2961 = vmatpush1.msra.mxu0 0.0
      %2962 = vmatprep.subr.mxu0 0.0
      %2963 = vmatpush1.msra.mxu0 0.0
      %2964 = vmatprep.subr.mxu0 0.0
      %2965 = vmatpush1.msra.mxu0 0.0
      %2966 = vmatprep.subr.mxu0 0.0
      %2967 = vmatpush1.msra.mxu0 0.0
      %2968 = vmatprep.subr.mxu0 0.0
      %2969 = vmatpush1.msra.mxu0 0.0
      %2970 = vmatprep.subr.mxu0 0.0
      %2971 = vmatpush1.msra.mxu0 0.0
      %2972 = vmatprep.subr.mxu0 0.0
      %2973 = vmatpush1.msra.mxu0 0.0
      %2974 = vmatprep.subr.mxu0 0.0
      %2975 = vmatpush1.msra.mxu0 0.0
      %2976 = vmatprep.subr.mxu0 0.0
      %2977 = vmatpush1.msra.mxu0 0.0
      %2978 = vmatprep.subr.mxu0 0.0
      %2979 = vmatpush1.msra.mxu0 0.0
      %2980 = vmatprep.subr.mxu0 0.0
      %2981 = vmatpush1.msra.mxu0 0.0
      %2982 = vmatprep.subr.mxu0 0.0
      %2983 = vmatpush1.msra.mxu0 0.0
      %2984 = vmatprep.subr.mxu0 0.0
      %2985 = vmatpush1.msra.mxu0 0.0
      %2986 = vmatprep.subr.mxu0 0.0
      %2987 = vmatpush1.msra.mxu0 0.0
      %2988 = vmatprep.subr.mxu0 0.0
      %2989 = vmatpush1.msra.mxu0 0.0
      %2990 = vmatprep.subr.mxu0 0.0
      %2991 = vmatpush1.msra.mxu0 0.0
      %2992 = vmatprep.subr.mxu0 0.0
      %2993 = vmatpush1.msra.mxu0 0.0
      %2994 = vmatprep.subr.mxu0 0.0
      %2995 = vmatpush1.msra.mxu0 0.0
      %2996 = vmatprep.subr.mxu0 0.0
      %2997 = vmatpush1.msra.mxu0 0.0
      %2998 = vmatprep.mubr.f32.mxu0 0.0
      %2999 = vmatmul.mubr.f32.gmra.mrb[0].mxu0 %v2932
      %v3000 = vpop.f32.mrb[0].mxu0
      %v3001 = vadd.f32 0.0, %v3000
      %v3002 = vpop.f32.mrb[0].mxu0
      %3003 = vdwg.mxu0
      %v3004 = vadd.f32 %v2920, %v3001
      %3005 = vrot.lane.b32.xlu0 %v632, 120
      %v3006 = vpop.permute.xlu0 %3005
      %v3007 = vld [vmem:[%s15 + $0x7] sm:$0x1]
      %v3008 = vlaneseq
      %v3009 = vshrl.u32 %v3008, 7
      %v3010 = vsub.s32 0, %v3009
      %v3011 = vrot.slane %v3007, %v3010
      %v3012 = vmul.f32 %v3006, %v3011
      %s3013 = scalar_lea.vmem %s6, 56
      %v3014 = vld [vmem:[%s3013] sm:$0xff]
      %v3016 = vsel %vm2440, %v3014, 0
      %3018 = vmatprep.subr.mxu0 0.0
      %3019 = vmatpush1.msra.mxu0 %v3012
      %3020 = vmatprep.subr.mxu0 0.0
      %3021 = vmatpush1.msra.mxu0 0.0
      %3022 = vmatprep.subr.mxu0 0.0
      %3023 = vmatpush1.msra.mxu0 0.0
      %3024 = vmatprep.subr.mxu0 0.0
      %3025 = vmatpush1.msra.mxu0 0.0
      %3026 = vmatprep.subr.mxu0 0.0
      %3027 = vmatpush1.msra.mxu0 0.0
      %3028 = vmatprep.subr.mxu0 0.0
      %3029 = vmatpush1.msra.mxu0 0.0
      %3030 = vmatprep.subr.mxu0 0.0
      %3031 = vmatpush1.msra.mxu0 0.0
      %3032 = vmatprep.subr.mxu0 0.0
      %3033 = vmatpush1.msra.mxu0 0.0
      %3034 = vmatprep.subr.mxu0 0.0
      %3035 = vmatpush1.msra.mxu0 0.0
      %3036 = vmatprep.subr.mxu0 0.0
      %3037 = vmatpush1.msra.mxu0 0.0
      %3038 = vmatprep.subr.mxu0 0.0
      %3039 = vmatpush1.msra.mxu0 0.0
      %3040 = vmatprep.subr.mxu0 0.0
      %3041 = vmatpush1.msra.mxu0 0.0
      %3042 = vmatprep.subr.mxu0 0.0
      %3043 = vmatpush1.msra.mxu0 0.0
      %3044 = vmatprep.subr.mxu0 0.0
      %3045 = vmatpush1.msra.mxu0 0.0
      %3046 = vmatprep.subr.mxu0 0.0
      %3047 = vmatpush1.msra.mxu0 0.0
      %3048 = vmatprep.subr.mxu0 0.0
      %3049 = vmatpush1.msra.mxu0 0.0
      %3050 = vmatprep.subr.mxu0 0.0
      %3051 = vmatpush1.msra.mxu0 0.0
      %3052 = vmatprep.subr.mxu0 0.0
      %3053 = vmatpush1.msra.mxu0 0.0
      %3054 = vmatprep.subr.mxu0 0.0
      %3055 = vmatpush1.msra.mxu0 0.0
      %3056 = vmatprep.subr.mxu0 0.0
      %3057 = vmatpush1.msra.mxu0 0.0
      %3058 = vmatprep.subr.mxu0 0.0
      %3059 = vmatpush1.msra.mxu0 0.0
      %3060 = vmatprep.subr.mxu0 0.0
      %3061 = vmatpush1.msra.mxu0 0.0
      %3062 = vmatprep.subr.mxu0 0.0
      %3063 = vmatpush1.msra.mxu0 0.0
      %3064 = vmatprep.subr.mxu0 0.0
      %3065 = vmatpush1.msra.mxu0 0.0
      %3066 = vmatprep.subr.mxu0 0.0
      %3067 = vmatpush1.msra.mxu0 0.0
      %3068 = vmatprep.subr.mxu0 0.0
      %3069 = vmatpush1.msra.mxu0 0.0
      %3070 = vmatprep.subr.mxu0 0.0
      %3071 = vmatpush1.msra.mxu0 0.0
      %3072 = vmatprep.subr.mxu0 0.0
      %3073 = vmatpush1.msra.mxu0 0.0
      %3074 = vmatprep.subr.mxu0 0.0
      %3075 = vmatpush1.msra.mxu0 0.0
      %3076 = vmatprep.subr.mxu0 0.0
      %3077 = vmatpush1.msra.mxu0 0.0
      %3078 = vmatprep.subr.mxu0 0.0
      %3079 = vmatpush1.msra.mxu0 0.0
      %3080 = vmatprep.subr.mxu0 0.0
      %3081 = vmatpush1.msra.mxu0 0.0
      %3082 = vmatprep.mubr.f32.mxu0 0.0
      %3083 = vmatmul.mubr.f32.gmra.mrb[0].mxu0 %v3016
      %v3084 = vpop.f32.mrb[0].mxu0
      %v3085 = vadd.f32 0.0, %v3084
      %v3086 = vpop.f32.mrb[0].mxu0
      %3087 = vdwg.mxu0
      %v3088 = vadd.f32 %v3004, %v3085
      %3089 = vrot.lane.b32.xlu0 %v632, 119
      %v3090 = vpop.permute.xlu0 %3089
      %v3091 = vld [vmem:[%s15 + $0x8] sm:$0x1]
      %v3092 = vlaneseq
      %v3093 = vshrl.u32 %v3092, 7
      %v3094 = vsub.s32 0, %v3093
      %v3095 = vrot.slane %v3091, %v3094
      %v3096 = vmul.f32 %v3090, %v3095
      %s3097 = scalar_lea.vmem %s6, 64
      %v3098 = vld [vmem:[%s3097] sm:$0xff]
      %v3100 = vsel %vm2440, %v3098, 0
      %3102 = vmatprep.subr.mxu0 0.0
      %3103 = vmatpush1.msra.mxu0 %v3096
      %3104 = vmatprep.subr.mxu0 0.0
      %3105 = vmatpush1.msra.mxu0 0.0
      %3106 = vmatprep.subr.mxu0 0.0
      %3107 = vmatpush1.msra.mxu0 0.0
      %3108 = vmatprep.subr.mxu0 0.0
      %3109 = vmatpush1.msra.mxu0 0.0
      %3110 = vmatprep.subr.mxu0 0.0
      %3111 = vmatpush1.msra.mxu0 0.0
      %3112 = vmatprep.subr.mxu0 0.0
      %3113 = vmatpush1.msra.mxu0 0.0
      %3114 = vmatprep.subr.mxu0 0.0
      %3115 = vmatpush1.msra.mxu0 0.0
      %3116 = vmatprep.subr.mxu0 0.0
      %3117 = vmatpush1.msra.mxu0 0.0
      %3118 = vmatprep.subr.mxu0 0.0
      %3119 = vmatpush1.msra.mxu0 0.0
      %3120 = vmatprep.subr.mxu0 0.0
      %3121 = vmatpush1.msra.mxu0 0.0
      %3122 = vmatprep.subr.mxu0 0.0
      %3123 = vmatpush1.msra.mxu0 0.0
      %3124 = vmatprep.subr.mxu0 0.0
      %3125 = vmatpush1.msra.mxu0 0.0
      %3126 = vmatprep.subr.mxu0 0.0
      %3127 = vmatpush1.msra.mxu0 0.0
      %3128 = vmatprep.subr.mxu0 0.0
      %3129 = vmatpush1.msra.mxu0 0.0
      %3130 = vmatprep.subr.mxu0 0.0
      %3131 = vmatpush1.msra.mxu0 0.0
      %3132 = vmatprep.subr.mxu0 0.0
      %3133 = vmatpush1.msra.mxu0 0.0
      %3134 = vmatprep.subr.mxu0 0.0
      %3135 = vmatpush1.msra.mxu0 0.0
      %3136 = vmatprep.subr.mxu0 0.0
      %3137 = vmatpush1.msra.mxu0 0.0
      %3138 = vmatprep.subr.mxu0 0.0
      %3139 = vmatpush1.msra.mxu0 0.0
      %3140 = vmatprep.subr.mxu0 0.0
      %3141 = vmatpush1.msra.mxu0 0.0
      %3142 = vmatprep.subr.mxu0 0.0
      %3143 = vmatpush1.msra.mxu0 0.0
      %3144 = vmatprep.subr.mxu0 0.0
      %3145 = vmatpush1.msra.mxu0 0.0
      %3146 = vmatprep.subr.mxu0 0.0
      %3147 = vmatpush1.msra.mxu0 0.0
      %3148 = vmatprep.subr.mxu0 0.0
      %3149 = vmatpush1.msra.mxu0 0.0
      %3150 = vmatprep.subr.mxu0 0.0
      %3151 = vmatpush1.msra.mxu0 0.0
      %3152 = vmatprep.subr.mxu0 0.0
      %3153 = vmatpush1.msra.mxu0 0.0
      %3154 = vmatprep.subr.mxu0 0.0
      %3155 = vmatpush1.msra.mxu0 0.0
      %3156 = vmatprep.subr.mxu0 0.0
      %3157 = vmatpush1.msra.mxu0 0.0
      %3158 = vmatprep.subr.mxu0 0.0
      %3159 = vmatpush1.msra.mxu0 0.0
      %3160 = vmatprep.subr.mxu0 0.0
      %3161 = vmatpush1.msra.mxu0 0.0
      %3162 = vmatprep.subr.mxu0 0.0
      %3163 = vmatpush1.msra.mxu0 0.0
      %3164 = vmatprep.subr.mxu0 0.0
      %3165 = vmatpush1.msra.mxu0 0.0
      %3166 = vmatprep.mubr.f32.mxu0 0.0
      %3167 = vmatmul.mubr.f32.gmra.mrb[0].mxu0 %v3100
      %v3168 = vpop.f32.mrb[0].mxu0
      %v3169 = vadd.f32 0.0, %v3168
      %v3170 = vpop.f32.mrb[0].mxu0
      %3171 = vdwg.mxu0
      %v3172 = vadd.f32 %v3088, %v3169
      %v3173 = vld [vmem:[%s7] sm:$0xff]
      %3175 = vset.pattern.permute.xlu0 0
      %3176 = vperm.xlu0 %3175, %v3173
      %v3177 = vpop.permute.xlu0 %3176
      %v3179 = vadd.f32 %v3172, %v3177
      %v3180 = vmax.f32 %v3179, 0.0
      %3181 = vrot.lane.b32.xlu0 %v3180, 9
      %v3182 = vpop.permute.xlu0 %3181
      %v3183 = vmul.f32 %v3182, %v2427
      %v3184 = vld [vmem:[%s8] sm:$0xff]
      %3185 = vrot.lane.b32.xlu0 %v3180, 8
      %v3186 = vpop.permute.xlu0 %3185
      %v3187 = vmul.f32 %v3186, %v2436
      %s3188 = scalar_lea.vmem %s8, 8
      %v3189 = vld [vmem:[%s3188] sm:$0xff]
      %v3191 = vsel %vm2440, %v3189, 0
      %3193 = vmatprep.subr.mxu0 0.0
      %3194 = vmatpush1.msra.mxu0 %v3187
      %3195 = vmatprep.subr.mxu0 0.0
      %3196 = vmatpush1.msra.mxu0 0.0
      %3197 = vmatprep.subr.mxu0 0.0
      %3198 = vmatpush1.msra.mxu0 0.0
      %3199 = vmatprep.subr.mxu0 0.0
      %3200 = vmatpush1.msra.mxu0 0.0
      %3201 = vmatprep.subr.mxu0 0.0
      %3202 = vmatpush1.msra.mxu0 0.0
      %3203 = vmatprep.subr.mxu0 0.0
      %3204 = vmatpush1.msra.mxu0 0.0
      %3205 = vmatprep.subr.mxu0 0.0
      %3206 = vmatpush1.msra.mxu0 0.0
      %3207 = vmatprep.subr.mxu0 0.0
      %3208 = vmatpush1.msra.mxu0 0.0
      %3209 = vmatprep.subr.mxu0 0.0
      %3210 = vmatpush1.msra.mxu0 0.0
      %3211 = vmatprep.subr.mxu0 0.0
      %3212 = vmatpush1.msra.mxu0 0.0
      %3213 = vmatprep.subr.mxu0 0.0
      %3214 = vmatpush1.msra.mxu0 0.0
      %3215 = vmatprep.subr.mxu0 0.0
      %3216 = vmatpush1.msra.mxu0 0.0
      %3217 = vmatprep.subr.mxu0 0.0
      %3218 = vmatpush1.msra.mxu0 0.0
      %3219 = vmatprep.subr.mxu0 0.0
      %3220 = vmatpush1.msra.mxu0 0.0
      %3221 = vmatprep.subr.mxu0 0.0
      %3222 = vmatpush1.msra.mxu0 0.0
      %3223 = vmatprep.subr.mxu0 0.0
      %3224 = vmatpush1.msra.mxu0 0.0
      %3225 = vmatprep.subr.mxu0 0.0
      %3226 = vmatpush1.msra.mxu0 0.0
      %3227 = vmatprep.subr.mxu0 0.0
      %3228 = vmatpush1.msra.mxu0 0.0
      %3229 = vmatprep.subr.mxu0 0.0
      %3230 = vmatpush1.msra.mxu0 0.0
      %3231 = vmatprep.subr.mxu0 0.0
      %3232 = vmatpush1.msra.mxu0 0.0
      %3233 = vmatprep.subr.mxu0 0.0
      %3234 = vmatpush1.msra.mxu0 0.0
      %3235 = vmatprep.subr.mxu0 0.0
      %3236 = vmatpush1.msra.mxu0 0.0
      %3237 = vmatprep.subr.mxu0 0.0
      %3238 = vmatpush1.msra.mxu0 0.0
      %3239 = vmatprep.subr.mxu0 0.0
      %3240 = vmatpush1.msra.mxu0 0.0
      %3241 = vmatprep.subr.mxu0 0.0
      %3242 = vmatpush1.msra.mxu0 0.0
      %3243 = vmatprep.subr.mxu0 0.0
      %3244 = vmatpush1.msra.mxu0 0.0
      %3245 = vmatprep.subr.mxu0 0.0
      %3246 = vmatpush1.msra.mxu0 0.0
      %3247 = vmatprep.subr.mxu0 0.0
      %3248 = vmatpush1.msra.mxu0 0.0
      %3249 = vmatprep.subr.mxu0 0.0
      %3250 = vmatpush1.msra.mxu0 0.0
      %3251 = vmatprep.subr.mxu0 0.0
      %3252 = vmatpush1.msra.mxu0 0.0
      %3253 = vmatprep.subr.mxu0 0.0
      %3254 = vmatpush1.msra.mxu0 0.0
      %3255 = vmatprep.subr.mxu0 0.0
      %3256 = vmatpush1.msra.mxu0 0.0
      %3257 = vmatprep.mubr.f32.mxu0 0.0
      %3258 = vmatmul.mubr.f32.gmra.mrb[0].mxu0 %v3191
      %v3259 = vpop.f32.mrb[0].mxu0
      %v3260 = vadd.f32 0.0, %v3259
      %v3261 = vpop.f32.mrb[0].mxu0
      %3262 = vdwg.mxu0
      %v3264 = vsel %vm2440, %v3184, 0
      %3266 = vmatprep.subr.mxu0 0.0
      %3267 = vmatpush1.msra.mxu0 %v3183
      %3268 = vmatprep.subr.mxu0 0.0
      %3269 = vmatpush1.msra.mxu0 0.0
      %3270 = vmatprep.subr.mxu0 0.0
      %3271 = vmatpush1.msra.mxu0 0.0
      %3272 = vmatprep.subr.mxu0 0.0
      %3273 = vmatpush1.msra.mxu0 0.0
      %3274 = vmatprep.subr.mxu0 0.0
      %3275 = vmatpush1.msra.mxu0 0.0
      %3276 = vmatprep.subr.mxu0 0.0
      %3277 = vmatpush1.msra.mxu0 0.0
      %3278 = vmatprep.subr.mxu0 0.0
      %3279 = vmatpush1.msra.mxu0 0.0
      %3280 = vmatprep.subr.mxu0 0.0
      %3281 = vmatpush1.msra.mxu0 0.0
      %3282 = vmatprep.subr.mxu0 0.0
      %3283 = vmatpush1.msra.mxu0 0.0
      %3284 = vmatprep.subr.mxu0 0.0
      %3285 = vmatpush1.msra.mxu0 0.0
      %3286 = vmatprep.subr.mxu0 0.0
      %3287 = vmatpush1.msra.mxu0 0.0
      %3288 = vmatprep.subr.mxu0 0.0
      %3289 = vmatpush1.msra.mxu0 0.0
      %3290 = vmatprep.subr.mxu0 0.0
      %3291 = vmatpush1.msra.mxu0 0.0
      %3292 = vmatprep.subr.mxu0 0.0
      %3293 = vmatpush1.msra.mxu0 0.0
      %3294 = vmatprep.subr.mxu0 0.0
      %3295 = vmatpush1.msra.mxu0 0.0
      %3296 = vmatprep.subr.mxu0 0.0
      %3297 = vmatpush1.msra.mxu0 0.0
      %3298 = vmatprep.subr.mxu0 0.0
      %3299 = vmatpush1.msra.mxu0 0.0
      %3300 = vmatprep.subr.mxu0 0.0
      %3301 = vmatpush1.msra.mxu0 0.0
      %3302 = vmatprep.subr.mxu0 0.0
      %3303 = vmatpush1.msra.mxu0 0.0
      %3304 = vmatprep.subr.mxu0 0.0
      %3305 = vmatpush1.msra.mxu0 0.0
      %3306 = vmatprep.subr.mxu0 0.0
      %3307 = vmatpush1.msra.mxu0 0.0
      %3308 = vmatprep.subr.mxu0 0.0
      %3309 = vmatpush1.msra.mxu0 0.0
      %3310 = vmatprep.subr.mxu0 0.0
      %3311 = vmatpush1.msra.mxu0 0.0
      %3312 = vmatprep.subr.mxu0 0.0
      %3313 = vmatpush1.msra.mxu0 0.0
      %3314 = vmatprep.subr.mxu0 0.0
      %3315 = vmatpush1.msra.mxu0 0.0
      %3316 = vmatprep.subr.mxu0 0.0
      %3317 = vmatpush1.msra.mxu0 0.0
      %3318 = vmatprep.subr.mxu0 0.0
      %3319 = vmatpush1.msra.mxu0 0.0
      %3320 = vmatprep.subr.mxu0 0.0
      %3321 = vmatpush1.msra.mxu0 0.0
      %3322 = vmatprep.subr.mxu0 0.0
      %3323 = vmatpush1.msra.mxu0 0.0
      %3324 = vmatprep.subr.mxu0 0.0
      %3325 = vmatpush1.msra.mxu0 0.0
      %3326 = vmatprep.subr.mxu0 0.0
      %3327 = vmatpush1.msra.mxu0 0.0
      %3328 = vmatprep.subr.mxu0 0.0
      %3329 = vmatpush1.msra.mxu0 0.0
      %3330 = vmatprep.mubr.f32.mxu0 0.0
      %3331 = vmatmul.mubr.f32.gmra.mrb[0].mxu0 %v3264
      %v3332 = vpop.f32.mrb[0].mxu0
      %v3333 = vadd.f32 %v3260, %v3332
      %v3334 = vpop.f32.mrb[0].mxu0
      %3335 = vdwg.mxu0
      %3336 = vrot.lane.b32.xlu0 %v3180, 7
      %v3337 = vpop.permute.xlu0 %3336
      %v3338 = vmul.f32 %v3337, %v2593
      %s3339 = scalar_lea.vmem %s8, 16
      %v3340 = vld [vmem:[%s3339] sm:$0xff]
      %v3342 = vsel %vm2440, %v3340, 0
      %3344 = vmatprep.subr.mxu0 0.0
      %3345 = vmatpush1.msra.mxu0 %v3338
      %3346 = vmatprep.subr.mxu0 0.0
      %3347 = vmatpush1.msra.mxu0 0.0
      %3348 = vmatprep.subr.mxu0 0.0
      %3349 = vmatpush1.msra.mxu0 0.0
      %3350 = vmatprep.subr.mxu0 0.0
      %3351 = vmatpush1.msra.mxu0 0.0
      %3352 = vmatprep.subr.mxu0 0.0
      %3353 = vmatpush1.msra.mxu0 0.0
      %3354 = vmatprep.subr.mxu0 0.0
      %3355 = vmatpush1.msra.mxu0 0.0
      %3356 = vmatprep.subr.mxu0 0.0
      %3357 = vmatpush1.msra.mxu0 0.0
      %3358 = vmatprep.subr.mxu0 0.0
      %3359 = vmatpush1.msra.mxu0 0.0
      %3360 = vmatprep.subr.mxu0 0.0
      %3361 = vmatpush1.msra.mxu0 0.0
      %3362 = vmatprep.subr.mxu0 0.0
      %3363 = vmatpush1.msra.mxu0 0.0
      %3364 = vmatprep.subr.mxu0 0.0
      %3365 = vmatpush1.msra.mxu0 0.0
      %3366 = vmatprep.subr.mxu0 0.0
      %3367 = vmatpush1.msra.mxu0 0.0
      %3368 = vmatprep.subr.mxu0 0.0
      %3369 = vmatpush1.msra.mxu0 0.0
      %3370 = vmatprep.subr.mxu0 0.0
      %3371 = vmatpush1.msra.mxu0 0.0
      %3372 = vmatprep.subr.mxu0 0.0
      %3373 = vmatpush1.msra.mxu0 0.0
      %3374 = vmatprep.subr.mxu0 0.0
      %3375 = vmatpush1.msra.mxu0 0.0
      %3376 = vmatprep.subr.mxu0 0.0
      %3377 = vmatpush1.msra.mxu0 0.0
      %3378 = vmatprep.subr.mxu0 0.0
      %3379 = vmatpush1.msra.mxu0 0.0
      %3380 = vmatprep.subr.mxu0 0.0
      %3381 = vmatpush1.msra.mxu0 0.0
      %3382 = vmatprep.subr.mxu0 0.0
      %3383 = vmatpush1.msra.mxu0 0.0
      %3384 = vmatprep.subr.mxu0 0.0
      %3385 = vmatpush1.msra.mxu0 0.0
      %3386 = vmatprep.subr.mxu0 0.0
      %3387 = vmatpush1.msra.mxu0 0.0
      %3388 = vmatprep.subr.mxu0 0.0
      %3389 = vmatpush1.msra.mxu0 0.0
      %3390 = vmatprep.subr.mxu0 0.0
      %3391 = vmatpush1.msra.mxu0 0.0
      %3392 = vmatprep.subr.mxu0 0.0
      %3393 = vmatpush1.msra.mxu0 0.0
      %3394 = vmatprep.subr.mxu0 0.0
      %3395 = vmatpush1.msra.mxu0 0.0
      %3396 = vmatprep.subr.mxu0 0.0
      %3397 = vmatpush1.msra.mxu0 0.0
      %3398 = vmatprep.subr.mxu0 0.0
      %3399 = vmatpush1.msra.mxu0 0.0
      %3400 = vmatprep.subr.mxu0 0.0
      %3401 = vmatpush1.msra.mxu0 0.0
      %3402 = vmatprep.subr.mxu0 0.0
      %3403 = vmatpush1.msra.mxu0 0.0
      %3404 = vmatprep.subr.mxu0 0.0
      %3405 = vmatpush1.msra.mxu0 0.0
      %3406 = vmatprep.subr.mxu0 0.0
      %3407 = vmatpush1.msra.mxu0 0.0
      %3408 = vmatprep.mubr.f32.mxu0 0.0
      %3409 = vmatmul.mubr.f32.gmra.mrb[0].mxu0 %v3342
      %v3410 = vpop.f32.mrb[0].mxu0
      %v3411 = vadd.f32 0.0, %v3410
      %v3412 = vpop.f32.mrb[0].mxu0
      %3413 = vdwg.mxu0
      %v3414 = vadd.f32 %v3333, %v3411
      %3415 = vrot.lane.b32.xlu0 %v3180, 1
      %v3416 = vpop.permute.xlu0 %3415
      %v3417 = vmul.f32 %v3416, %v2677
      %s3418 = scalar_lea.vmem %s8, 24
      %v3419 = vld [vmem:[%s3418] sm:$0xff]
      %v3421 = vsel %vm2440, %v3419, 0
      %3423 = vmatprep.subr.mxu0 0.0
      %3424 = vmatpush1.msra.mxu0 %v3417
      %3425 = vmatprep.subr.mxu0 0.0
      %3426 = vmatpush1.msra.mxu0 0.0
      %3427 = vmatprep.subr.mxu0 0.0
      %3428 = vmatpush1.msra.mxu0 0.0
      %3429 = vmatprep.subr.mxu0 0.0
      %3430 = vmatpush1.msra.mxu0 0.0
      %3431 = vmatprep.subr.mxu0 0.0
      %3432 = vmatpush1.msra.mxu0 0.0
      %3433 = vmatprep.subr.mxu0 0.0
      %3434 = vmatpush1.msra.mxu0 0.0
      %3435 = vmatprep.subr.mxu0 0.0
      %3436 = vmatpush1.msra.mxu0 0.0
      %3437 = vmatprep.subr.mxu0 0.0
      %3438 = vmatpush1.msra.mxu0 0.0
      %3439 = vmatprep.subr.mxu0 0.0
      %3440 = vmatpush1.msra.mxu0 0.0
      %3441 = vmatprep.subr.mxu0 0.0
      %3442 = vmatpush1.msra.mxu0 0.0
      %3443 = vmatprep.subr.mxu0 0.0
      %3444 = vmatpush1.msra.mxu0 0.0
      %3445 = vmatprep.subr.mxu0 0.0
      %3446 = vmatpush1.msra.mxu0 0.0
      %3447 = vmatprep.subr.mxu0 0.0
      %3448 = vmatpush1.msra.mxu0 0.0
      %3449 = vmatprep.subr.mxu0 0.0
      %3450 = vmatpush1.msra.mxu0 0.0
      %3451 = vmatprep.subr.mxu0 0.0
      %3452 = vmatpush1.msra.mxu0 0.0
      %3453 = vmatprep.subr.mxu0 0.0
      %3454 = vmatpush1.msra.mxu0 0.0
      %3455 = vmatprep.subr.mxu0 0.0
      %3456 = vmatpush1.msra.mxu0 0.0
      %3457 = vmatprep.subr.mxu0 0.0
      %3458 = vmatpush1.msra.mxu0 0.0
      %3459 = vmatprep.subr.mxu0 0.0
      %3460 = vmatpush1.msra.mxu0 0.0
      %3461 = vmatprep.subr.mxu0 0.0
      %3462 = vmatpush1.msra.mxu0 0.0
      %3463 = vmatprep.subr.mxu0 0.0
      %3464 = vmatpush1.msra.mxu0 0.0
      %3465 = vmatprep.subr.mxu0 0.0
      %3466 = vmatpush1.msra.mxu0 0.0
      %3467 = vmatprep.subr.mxu0 0.0
      %3468 = vmatpush1.msra.mxu0 0.0
      %3469 = vmatprep.subr.mxu0 0.0
      %3470 = vmatpush1.msra.mxu0 0.0
      %3471 = vmatprep.subr.mxu0 0.0
      %3472 = vmatpush1.msra.mxu0 0.0
      %3473 = vmatprep.subr.mxu0 0.0
      %3474 = vmatpush1.msra.mxu0 0.0
      %3475 = vmatprep.subr.mxu0 0.0
      %3476 = vmatpush1.msra.mxu0 0.0
      %3477 = vmatprep.subr.mxu0 0.0
      %3478 = vmatpush1.msra.mxu0 0.0
      %3479 = vmatprep.subr.mxu0 0.0
      %3480 = vmatpush1.msra.mxu0 0.0
      %3481 = vmatprep.subr.mxu0 0.0
      %3482 = vmatpush1.msra.mxu0 0.0
      %3483 = vmatprep.subr.mxu0 0.0
      %3484 = vmatpush1.msra.mxu0 0.0
      %3485 = vmatprep.subr.mxu0 0.0
      %3486 = vmatpush1.msra.mxu0 0.0
      %3487 = vmatprep.mubr.f32.mxu0 0.0
      %3488 = vmatmul.mubr.f32.gmra.mrb[0].mxu0 %v3421
      %v3489 = vpop.f32.mrb[0].mxu0
      %v3490 = vadd.f32 0.0, %v3489
      %v3491 = vpop.f32.mrb[0].mxu0
      %3492 = vdwg.mxu0
      %v3493 = vadd.f32 %v3414, %v3490
      %v3494 = vmul.f32 %v3180, %v2759
      %s3495 = scalar_lea.vmem %s8, 32
      %v3496 = vld [vmem:[%s3495] sm:$0xff]
      %v3498 = vsel %vm2440, %v3496, 0
      %3500 = vmatprep.subr.mxu0 0.0
      %3501 = vmatpush1.msra.mxu0 %v3494
      %3502 = vmatprep.subr.mxu0 0.0
      %3503 = vmatpush1.msra.mxu0 0.0
      %3504 = vmatprep.subr.mxu0 0.0
      %3505 = vmatpush1.msra.mxu0 0.0
      %3506 = vmatprep.subr.mxu0 0.0
      %3507 = vmatpush1.msra.mxu0 0.0
      %3508 = vmatprep.subr.mxu0 0.0
      %3509 = vmatpush1.msra.mxu0 0.0
      %3510 = vmatprep.subr.mxu0 0.0
      %3511 = vmatpush1.msra.mxu0 0.0
      %3512 = vmatprep.subr.mxu0 0.0
      %3513 = vmatpush1.msra.mxu0 0.0
      %3514 = vmatprep.subr.mxu0 0.0
      %3515 = vmatpush1.msra.mxu0 0.0
      %3516 = vmatprep.subr.mxu0 0.0
      %3517 = vmatpush1.msra.mxu0 0.0
      %3518 = vmatprep.subr.mxu0 0.0
      %3519 = vmatpush1.msra.mxu0 0.0
      %3520 = vmatprep.subr.mxu0 0.0
      %3521 = vmatpush1.msra.mxu0 0.0
      %3522 = vmatprep.subr.mxu0 0.0
      %3523 = vmatpush1.msra.mxu0 0.0
      %3524 = vmatprep.subr.mxu0 0.0
      %3525 = vmatpush1.msra.mxu0 0.0
      %3526 = vmatprep.subr.mxu0 0.0
      %3527 = vmatpush1.msra.mxu0 0.0
      %3528 = vmatprep.subr.mxu0 0.0
      %3529 = vmatpush1.msra.mxu0 0.0
      %3530 = vmatprep.subr.mxu0 0.0
      %3531 = vmatpush1.msra.mxu0 0.0
      %3532 = vmatprep.subr.mxu0 0.0
      %3533 = vmatpush1.msra.mxu0 0.0
      %3534 = vmatprep.subr.mxu0 0.0
      %3535 = vmatpush1.msra.mxu0 0.0
      %3536 = vmatprep.subr.mxu0 0.0
      %3537 = vmatpush1.msra.mxu0 0.0
      %3538 = vmatprep.subr.mxu0 0.0
      %3539 = vmatpush1.msra.mxu0 0.0
      %3540 = vmatprep.subr.mxu0 0.0
      %3541 = vmatpush1.msra.mxu0 0.0
      %3542 = vmatprep.subr.mxu0 0.0
      %3543 = vmatpush1.msra.mxu0 0.0
      %3544 = vmatprep.subr.mxu0 0.0
      %3545 = vmatpush1.msra.mxu0 0.0
      %3546 = vmatprep.subr.mxu0 0.0
      %3547 = vmatpush1.msra.mxu0 0.0
      %3548 = vmatprep.subr.mxu0 0.0
      %3549 = vmatpush1.msra.mxu0 0.0
      %3550 = vmatprep.subr.mxu0 0.0
      %3551 = vmatpush1.msra.mxu0 0.0
      %3552 = vmatprep.subr.mxu0 0.0
      %3553 = vmatpush1.msra.mxu0 0.0
      %3554 = vmatprep.subr.mxu0 0.0
      %3555 = vmatpush1.msra.mxu0 0.0
      %3556 = vmatprep.subr.mxu0 0.0
      %3557 = vmatpush1.msra.mxu0 0.0
      %3558 = vmatprep.subr.mxu0 0.0
      %3559 = vmatpush1.msra.mxu0 0.0
      %3560 = vmatprep.subr.mxu0 0.0
      %3561 = vmatpush1.msra.mxu0 0.0
      %3562 = vmatprep.subr.mxu0 0.0
      %3563 = vmatpush1.msra.mxu0 0.0
      %3564 = vmatprep.mubr.f32.mxu0 0.0
      %3565 = vmatmul.mubr.f32.gmra.mrb[0].mxu0 %v3498
      %v3566 = vpop.f32.mrb[0].mxu0
      %v3567 = vadd.f32 0.0, %v3566
      %v3568 = vpop.f32.mrb[0].mxu0
      %3569 = vdwg.mxu0
      %v3570 = vadd.f32 %v3493, %v3567
      %3571 = vrot.lane.b32.xlu0 %v3180, 127
      %v3572 = vpop.permute.xlu0 %3571
      %v3573 = vmul.f32 %v3572, %v2843
      %s3574 = scalar_lea.vmem %s8, 40
      %v3575 = vld [vmem:[%s3574] sm:$0xff]
      %v3577 = vsel %vm2440, %v3575, 0
      %3579 = vmatprep.subr.mxu0 0.0
      %3580 = vmatpush1.msra.mxu0 %v3573
      %3581 = vmatprep.subr.mxu0 0.0
      %3582 = vmatpush1.msra.mxu0 0.0
      %3583 = vmatprep.subr.mxu0 0.0
      %3584 = vmatpush1.msra.mxu0 0.0
      %3585 = vmatprep.subr.mxu0 0.0
      %3586 = vmatpush1.msra.mxu0 0.0
      %3587 = vmatprep.subr.mxu0 0.0
      %3588 = vmatpush1.msra.mxu0 0.0
      %3589 = vmatprep.subr.mxu0 0.0
      %3590 = vmatpush1.msra.mxu0 0.0
      %3591 = vmatprep.subr.mxu0 0.0
      %3592 = vmatpush1.msra.mxu0 0.0
      %3593 = vmatprep.subr.mxu0 0.0
      %3594 = vmatpush1.msra.mxu0 0.0
      %3595 = vmatprep.subr.mxu0 0.0
      %3596 = vmatpush1.msra.mxu0 0.0
      %3597 = vmatprep.subr.mxu0 0.0
      %3598 = vmatpush1.msra.mxu0 0.0
      %3599 = vmatprep.subr.mxu0 0.0
      %3600 = vmatpush1.msra.mxu0 0.0
      %3601 = vmatprep.subr.mxu0 0.0
      %3602 = vmatpush1.msra.mxu0 0.0
      %3603 = vmatprep.subr.mxu0 0.0
      %3604 = vmatpush1.msra.mxu0 0.0
      %3605 = vmatprep.subr.mxu0 0.0
      %3606 = vmatpush1.msra.mxu0 0.0
      %3607 = vmatprep.subr.mxu0 0.0
      %3608 = vmatpush1.msra.mxu0 0.0
      %3609 = vmatprep.subr.mxu0 0.0
      %3610 = vmatpush1.msra.mxu0 0.0
      %3611 = vmatprep.subr.mxu0 0.0
      %3612 = vmatpush1.msra.mxu0 0.0
      %3613 = vmatprep.subr.mxu0 0.0
      %3614 = vmatpush1.msra.mxu0 0.0
      %3615 = vmatprep.subr.mxu0 0.0
      %3616 = vmatpush1.msra.mxu0 0.0
      %3617 = vmatprep.subr.mxu0 0.0
      %3618 = vmatpush1.msra.mxu0 0.0
      %3619 = vmatprep.subr.mxu0 0.0
      %3620 = vmatpush1.msra.mxu0 0.0
      %3621 = vmatprep.subr.mxu0 0.0
      %3622 = vmatpush1.msra.mxu0 0.0
      %3623 = vmatprep.subr.mxu0 0.0
      %3624 = vmatpush1.msra.mxu0 0.0
      %3625 = vmatprep.subr.mxu0 0.0
      %3626 = vmatpush1.msra.mxu0 0.0
      %3627 = vmatprep.subr.mxu0 0.0
      %3628 = vmatpush1.msra.mxu0 0.0
      %3629 = vmatprep.subr.mxu0 0.0
      %3630 = vmatpush1.msra.mxu0 0.0
      %3631 = vmatprep.subr.mxu0 0.0
      %3632 = vmatpush1.msra.mxu0 0.0
      %3633 = vmatprep.subr.mxu0 0.0
      %3634 = vmatpush1.msra.mxu0 0.0
      %3635 = vmatprep.subr.mxu0 0.0
      %3636 = vmatpush1.msra.mxu0 0.0
      %3637 = vmatprep.subr.mxu0 0.0
      %3638 = vmatpush1.msra.mxu0 0.0
      %3639 = vmatprep.subr.mxu0 0.0
      %3640 = vmatpush1.msra.mxu0 0.0
      %3641 = vmatprep.subr.mxu0 0.0
      %3642 = vmatpush1.msra.mxu0 0.0
      %3643 = vmatprep.mubr.f32.mxu0 0.0
      %3644 = vmatmul.mubr.f32.gmra.mrb[0].mxu0 %v3577
      %v3645 = vpop.f32.mrb[0].mxu0
      %v3646 = vadd.f32 0.0, %v3645
      %v3647 = vpop.f32.mrb[0].mxu0
      %3648 = vdwg.mxu0
      %v3649 = vadd.f32 %v3570, %v3646
      %3650 = vrot.lane.b32.xlu0 %v3180, 121
      %v3651 = vpop.permute.xlu0 %3650
      %v3652 = vmul.f32 %v3651, %v2927
      %s3653 = scalar_lea.vmem %s8, 48
      %v3654 = vld [vmem:[%s3653] sm:$0xff]
      %v3656 = vsel %vm2440, %v3654, 0
      %3658 = vmatprep.subr.mxu0 0.0
      %3659 = vmatpush1.msra.mxu0 %v3652
      %3660 = vmatprep.subr.mxu0 0.0
      %3661 = vmatpush1.msra.mxu0 0.0
      %3662 = vmatprep.subr.mxu0 0.0
      %3663 = vmatpush1.msra.mxu0 0.0
      %3664 = vmatprep.subr.mxu0 0.0
      %3665 = vmatpush1.msra.mxu0 0.0
      %3666 = vmatprep.subr.mxu0 0.0
      %3667 = vmatpush1.msra.mxu0 0.0
      %3668 = vmatprep.subr.mxu0 0.0
      %3669 = vmatpush1.msra.mxu0 0.0
      %3670 = vmatprep.subr.mxu0 0.0
      %3671 = vmatpush1.msra.mxu0 0.0
      %3672 = vmatprep.subr.mxu0 0.0
      %3673 = vmatpush1.msra.mxu0 0.0
      %3674 = vmatprep.subr.mxu0 0.0
      %3675 = vmatpush1.msra.mxu0 0.0
      %3676 = vmatprep.subr.mxu0 0.0
      %3677 = vmatpush1.msra.mxu0 0.0
      %3678 = vmatprep.subr.mxu0 0.0
      %3679 = vmatpush1.msra.mxu0 0.0
      %3680 = vmatprep.subr.mxu0 0.0
      %3681 = vmatpush1.msra.mxu0 0.0
      %3682 = vmatprep.subr.mxu0 0.0
      %3683 = vmatpush1.msra.mxu0 0.0
      %3684 = vmatprep.subr.mxu0 0.0
      %3685 = vmatpush1.msra.mxu0 0.0
      %3686 = vmatprep.subr.mxu0 0.0
      %3687 = vmatpush1.msra.mxu0 0.0
      %3688 = vmatprep.subr.mxu0 0.0
      %3689 = vmatpush1.msra.mxu0 0.0
      %3690 = vmatprep.subr.mxu0 0.0
      %3691 = vmatpush1.msra.mxu0 0.0
      %3692 = vmatprep.subr.mxu0 0.0
      %3693 = vmatpush1.msra.mxu0 0.0
      %3694 = vmatprep.subr.mxu0 0.0
      %3695 = vmatpush1.msra.mxu0 0.0
      %3696 = vmatprep.subr.mxu0 0.0
      %3697 = vmatpush1.msra.mxu0 0.0
      %3698 = vmatprep.subr.mxu0 0.0
      %3699 = vmatpush1.msra.mxu0 0.0
      %3700 = vmatprep.subr.mxu0 0.0
      %3701 = vmatpush1.msra.mxu0 0.0
      %3702 = vmatprep.subr.mxu0 0.0
      %3703 = vmatpush1.msra.mxu0 0.0
      %3704 = vmatprep.subr.mxu0 0.0
      %3705 = vmatpush1.msra.mxu0 0.0
      %3706 = vmatprep.subr.mxu0 0.0
      %3707 = vmatpush1.msra.mxu0 0.0
      %3708 = vmatprep.subr.mxu0 0.0
      %3709 = vmatpush1.msra.mxu0 0.0
      %3710 = vmatprep.subr.mxu0 0.0
      %3711 = vmatpush1.msra.mxu0 0.0
      %3712 = vmatprep.subr.mxu0 0.0
      %3713 = vmatpush1.msra.mxu0 0.0
      %3714 = vmatprep.subr.mxu0 0.0
      %3715 = vmatpush1.msra.mxu0 0.0
      %3716 = vmatprep.subr.mxu0 0.0
      %3717 = vmatpush1.msra.mxu0 0.0
      %3718 = vmatprep.subr.mxu0 0.0
      %3719 = vmatpush1.msra.mxu0 0.0
      %3720 = vmatprep.subr.mxu0 0.0
      %3721 = vmatpush1.msra.mxu0 0.0
      %3722 = vmatprep.mubr.f32.mxu0 0.0
      %3723 = vmatmul.mubr.f32.gmra.mrb[0].mxu0 %v3656
      %v3724 = vpop.f32.mrb[0].mxu0
      %v3725 = vadd.f32 0.0, %v3724
      %v3726 = vpop.f32.mrb[0].mxu0
      %3727 = vdwg.mxu0
      %v3728 = vadd.f32 %v3649, %v3725
      %3729 = vrot.lane.b32.xlu0 %v3180, 120
      %v3730 = vpop.permute.xlu0 %3729
      %v3731 = vmul.f32 %v3730, %v3011
      %s3732 = scalar_lea.vmem %s8, 56
      %v3733 = vld [vmem:[%s3732] sm:$0xff]
      %v3735 = vsel %vm2440, %v3733, 0
      %3737 = vmatprep.subr.mxu0 0.0
      %3738 = vmatpush1.msra.mxu0 %v3731
      %3739 = vmatprep.subr.mxu0 0.0
      %3740 = vmatpush1.msra.mxu0 0.0
      %3741 = vmatprep.subr.mxu0 0.0
      %3742 = vmatpush1.msra.mxu0 0.0
      %3743 = vmatprep.subr.mxu0 0.0
      %3744 = vmatpush1.msra.mxu0 0.0
      %3745 = vmatprep.subr.mxu0 0.0
      %3746 = vmatpush1.msra.mxu0 0.0
      %3747 = vmatprep.subr.mxu0 0.0
      %3748 = vmatpush1.msra.mxu0 0.0
      %3749 = vmatprep.subr.mxu0 0.0
      %3750 = vmatpush1.msra.mxu0 0.0
      %3751 = vmatprep.subr.mxu0 0.0
      %3752 = vmatpush1.msra.mxu0 0.0
      %3753 = vmatprep.subr.mxu0 0.0
      %3754 = vmatpush1.msra.mxu0 0.0
      %3755 = vmatprep.subr.mxu0 0.0
      %3756 = vmatpush1.msra.mxu0 0.0
      %3757 = vmatprep.subr.mxu0 0.0
      %3758 = vmatpush1.msra.mxu0 0.0
      %3759 = vmatprep.subr.mxu0 0.0
      %3760 = vmatpush1.msra.mxu0 0.0
      %3761 = vmatprep.subr.mxu0 0.0
      %3762 = vmatpush1.msra.mxu0 0.0
      %3763 = vmatprep.subr.mxu0 0.0
      %3764 = vmatpush1.msra.mxu0 0.0
      %3765 = vmatprep.subr.mxu0 0.0
      %3766 = vmatpush1.msra.mxu0 0.0
      %3767 = vmatprep.subr.mxu0 0.0
      %3768 = vmatpush1.msra.mxu0 0.0
      %3769 = vmatprep.subr.mxu0 0.0
      %3770 = vmatpush1.msra.mxu0 0.0
      %3771 = vmatprep.subr.mxu0 0.0
      %3772 = vmatpush1.msra.mxu0 0.0
      %3773 = vmatprep.subr.mxu0 0.0
      %3774 = vmatpush1.msra.mxu0 0.0
      %3775 = vmatprep.subr.mxu0 0.0
      %3776 = vmatpush1.msra.mxu0 0.0
      %3777 = vmatprep.subr.mxu0 0.0
      %3778 = vmatpush1.msra.mxu0 0.0
      %3779 = vmatprep.subr.mxu0 0.0
      %3780 = vmatpush1.msra.mxu0 0.0
      %3781 = vmatprep.subr.mxu0 0.0
      %3782 = vmatpush1.msra.mxu0 0.0
      %3783 = vmatprep.subr.mxu0 0.0
      %3784 = vmatpush1.msra.mxu0 0.0
      %3785 = vmatprep.subr.mxu0 0.0
      %3786 = vmatpush1.msra.mxu0 0.0
      %3787 = vmatprep.subr.mxu0 0.0
      %3788 = vmatpush1.msra.mxu0 0.0
      %3789 = vmatprep.subr.mxu0 0.0
      %3790 = vmatpush1.msra.mxu0 0.0
      %3791 = vmatprep.subr.mxu0 0.0
      %3792 = vmatpush1.msra.mxu0 0.0
      %3793 = vmatprep.subr.mxu0 0.0
      %3794 = vmatpush1.msra.mxu0 0.0
      %3795 = vmatprep.subr.mxu0 0.0
      %3796 = vmatpush1.msra.mxu0 0.0
      %3797 = vmatprep.subr.mxu0 0.0
      %3798 = vmatpush1.msra.mxu0 0.0
      %3799 = vmatprep.subr.mxu0 0.0
      %3800 = vmatpush1.msra.mxu0 0.0
      %3801 = vmatprep.mubr.f32.mxu0 0.0
      %3802 = vmatmul.mubr.f32.gmra.mrb[0].mxu0 %v3735
      %v3803 = vpop.f32.mrb[0].mxu0
      %v3804 = vadd.f32 0.0, %v3803
      %v3805 = vpop.f32.mrb[0].mxu0
      %3806 = vdwg.mxu0
      %v3807 = vadd.f32 %v3728, %v3804
      %3808 = vrot.lane.b32.xlu0 %v3180, 119
      %v3809 = vpop.permute.xlu0 %3808
      %v3810 = vmul.f32 %v3809, %v3095
      %s3811 = scalar_lea.vmem %s8, 64
      %v3812 = vld [vmem:[%s3811] sm:$0xff]
      %v3814 = vsel %vm2440, %v3812, 0
      %3816 = vmatprep.subr.mxu0 0.0
      %3817 = vmatpush1.msra.mxu0 %v3810
      %3818 = vmatprep.subr.mxu0 0.0
      %3819 = vmatpush1.msra.mxu0 0.0
      %3820 = vmatprep.subr.mxu0 0.0
      %3821 = vmatpush1.msra.mxu0 0.0
      %3822 = vmatprep.subr.mxu0 0.0
      %3823 = vmatpush1.msra.mxu0 0.0
      %3824 = vmatprep.subr.mxu0 0.0
      %3825 = vmatpush1.msra.mxu0 0.0
      %3826 = vmatprep.subr.mxu0 0.0
      %3827 = vmatpush1.msra.mxu0 0.0
      %3828 = vmatprep.subr.mxu0 0.0
      %3829 = vmatpush1.msra.mxu0 0.0
      %3830 = vmatprep.subr.mxu0 0.0
      %3831 = vmatpush1.msra.mxu0 0.0
      %3832 = vmatprep.subr.mxu0 0.0
      %3833 = vmatpush1.msra.mxu0 0.0
      %3834 = vmatprep.subr.mxu0 0.0
      %3835 = vmatpush1.msra.mxu0 0.0
      %3836 = vmatprep.subr.mxu0 0.0
      %3837 = vmatpush1.msra.mxu0 0.0
      %3838 = vmatprep.subr.mxu0 0.0
      %3839 = vmatpush1.msra.mxu0 0.0
      %3840 = vmatprep.subr.mxu0 0.0
      %3841 = vmatpush1.msra.mxu0 0.0
      %3842 = vmatprep.subr.mxu0 0.0
      %3843 = vmatpush1.msra.mxu0 0.0
      %3844 = vmatprep.subr.mxu0 0.0
      %3845 = vmatpush1.msra.mxu0 0.0
      %3846 = vmatprep.subr.mxu0 0.0
      %3847 = vmatpush1.msra.mxu0 0.0
      %3848 = vmatprep.subr.mxu0 0.0
      %3849 = vmatpush1.msra.mxu0 0.0
      %3850 = vmatprep.subr.mxu0 0.0
      %3851 = vmatpush1.msra.mxu0 0.0
      %3852 = vmatprep.subr.mxu0 0.0
      %3853 = vmatpush1.msra.mxu0 0.0
      %3854 = vmatprep.subr.mxu0 0.0
      %3855 = vmatpush1.msra.mxu0 0.0
      %3856 = vmatprep.subr.mxu0 0.0
      %3857 = vmatpush1.msra.mxu0 0.0
      %3858 = vmatprep.subr.mxu0 0.0
      %3859 = vmatpush1.msra.mxu0 0.0
      %3860 = vmatprep.subr.mxu0 0.0
      %3861 = vmatpush1.msra.mxu0 0.0
      %3862 = vmatprep.subr.mxu0 0.0
      %3863 = vmatpush1.msra.mxu0 0.0
      %3864 = vmatprep.subr.mxu0 0.0
      %3865 = vmatpush1.msra.mxu0 0.0
      %3866 = vmatprep.subr.mxu0 0.0
      %3867 = vmatpush1.msra.mxu0 0.0
      %3868 = vmatprep.subr.mxu0 0.0
      %3869 = vmatpush1.msra.mxu0 0.0
      %3870 = vmatprep.subr.mxu0 0.0
      %3871 = vmatpush1.msra.mxu0 0.0
      %3872 = vmatprep.subr.mxu0 0.0
      %3873 = vmatpush1.msra.mxu0 0.0
      %3874 = vmatprep.subr.mxu0 0.0
      %3875 = vmatpush1.msra.mxu0 0.0
      %3876 = vmatprep.subr.mxu0 0.0
      %3877 = vmatpush1.msra.mxu0 0.0
      %3878 = vmatprep.subr.mxu0 0.0
      %3879 = vmatpush1.msra.mxu0 0.0
      %3880 = vmatprep.mubr.f32.mxu0 0.0
      %3881 = vmatmul.mubr.f32.gmra.mrb[0].mxu0 %v3814
      %v3882 = vpop.f32.mrb[0].mxu0
      %v3883 = vadd.f32 0.0, %v3882
      %v3884 = vpop.f32.mrb[0].mxu0
      %3885 = vdwg.mxu0
      %v3886 = vadd.f32 %v3807, %v3883
      %v3887 = vld [vmem:[%s9] sm:$0xff]
      %3889 = vset.pattern.permute.xlu0 0
      %3890 = vperm.xlu0 %3889, %v3887
      %v3891 = vpop.permute.xlu0 %3890
      %v3893 = vadd.f32 %v3886, %v3891
      %v3894 = vadd.f32 %v3893, %v632
      %v3895 = vmax.f32 %v3894, 0.0
      %v3896 = vld [vmem:[%s10] sm:$0xf]
      %v3897 = vld [vmem:[%s11] sm:$0xf]
      %3899 = vset.pattern.permute.xlu0 0
      %3900 = vperm.xlu0 %3899, %v3897
      %v3901 = vpop.permute.xlu0 %3900
      %v3904 = vsel %vm2440, %v3896, 0
      %3906 = vmatprep.subr.mxu0 0.0
      %3907 = vmatpush1.msra.mxu0 %v3895
      %3908 = vmatprep.subr.mxu0 0.0
      %3909 = vmatpush1.msra.mxu0 0.0
      %3910 = vmatprep.subr.mxu0 0.0
      %3911 = vmatpush1.msra.mxu0 0.0
      %3912 = vmatprep.subr.mxu0 0.0
      %3913 = vmatpush1.msra.mxu0 0.0
      %3914 = vmatprep.subr.mxu0 0.0
      %3915 = vmatpush1.msra.mxu0 0.0
      %3916 = vmatprep.subr.mxu0 0.0
      %3917 = vmatpush1.msra.mxu0 0.0
      %3918 = vmatprep.subr.mxu0 0.0
      %3919 = vmatpush1.msra.mxu0 0.0
      %3920 = vmatprep.subr.mxu0 0.0
      %3921 = vmatpush1.msra.mxu0 0.0
      %3922 = vmatprep.subr.mxu0 0.0
      %3923 = vmatpush1.msra.mxu0 0.0
      %3924 = vmatprep.subr.mxu0 0.0
      %3925 = vmatpush1.msra.mxu0 0.0
      %3926 = vmatprep.subr.mxu0 0.0
      %3927 = vmatpush1.msra.mxu0 0.0
      %3928 = vmatprep.subr.mxu0 0.0
      %3929 = vmatpush1.msra.mxu0 0.0
      %3930 = vmatprep.subr.mxu0 0.0
      %3931 = vmatpush1.msra.mxu0 0.0
      %3932 = vmatprep.subr.mxu0 0.0
      %3933 = vmatpush1.msra.mxu0 0.0
      %3934 = vmatprep.subr.mxu0 0.0
      %3935 = vmatpush1.msra.mxu0 0.0
      %3936 = vmatprep.subr.mxu0 0.0
      %3937 = vmatpush1.msra.mxu0 0.0
      %3938 = vmatprep.subr.mxu0 0.0
      %3939 = vmatpush1.msra.mxu0 0.0
      %3940 = vmatprep.subr.mxu0 0.0
      %3941 = vmatpush1.msra.mxu0 0.0
      %3942 = vmatprep.subr.mxu0 0.0
      %3943 = vmatpush1.msra.mxu0 0.0
      %3944 = vmatprep.subr.mxu0 0.0
      %3945 = vmatpush1.msra.mxu0 0.0
      %3946 = vmatprep.subr.mxu0 0.0
      %3947 = vmatpush1.msra.mxu0 0.0
      %3948 = vmatprep.subr.mxu0 0.0
      %3949 = vmatpush1.msra.mxu0 0.0
      %3950 = vmatprep.subr.mxu0 0.0
      %3951 = vmatpush1.msra.mxu0 0.0
      %3952 = vmatprep.subr.mxu0 0.0
      %3953 = vmatpush1.msra.mxu0 0.0
      %3954 = vmatprep.subr.mxu0 0.0
      %3955 = vmatpush1.msra.mxu0 0.0
      %3956 = vmatprep.subr.mxu0 0.0
      %3957 = vmatpush1.msra.mxu0 0.0
      %3958 = vmatprep.subr.mxu0 0.0
      %3959 = vmatpush1.msra.mxu0 0.0
      %3960 = vmatprep.subr.mxu0 0.0
      %3961 = vmatpush1.msra.mxu0 0.0
      %3962 = vmatprep.subr.mxu0 0.0
      %3963 = vmatpush1.msra.mxu0 0.0
      %3964 = vmatprep.subr.mxu0 0.0
      %3965 = vmatpush1.msra.mxu0 0.0
      %3966 = vmatprep.subr.mxu0 0.0
      %3967 = vmatpush1.msra.mxu0 0.0
      %3968 = vmatprep.subr.mxu0 0.0
      %3969 = vmatpush1.msra.mxu0 0.0
      %3970 = vmatprep.mubr.f32.mxu0 0.0
      %3971 = vmatmul.mubr.f32.gmra.mrb[0].mxu0 %v3904
      %v3972 = vpop.f32.mrb[0].mxu0
      %v3973 = vadd.f32 %v3901, %v3972
      %v3974 = vpop.f32.mrb[0].mxu0
      %3975 = vdwg.mxu0
      %v3976 = vld [vmem:[%s16] sm:$0xff]
      %v3977 = vld [vmem:[%s16 + $0x8] sm:$0xff]
      %v3978 = vld [vmem:[%s16 + $0x10] sm:$0xff]
      %v3979 = vld [vmem:[%s16 + $0x18] sm:$0xff]
      %v3980 = vld [vmem:[%s16 + $0x20] sm:$0xff]
      %v3981 = vld [vmem:[%s16 + $0x28] sm:$0xff]
      %v3982 = vld [vmem:[%s16 + $0x30] sm:$0xff]
      %v3983 = vld [vmem:[%s16 + $0x38] sm:$0xff]
      %v3984 = vld [vmem:[%s16 + $0x40] sm:$0xff]
      %v3985 = vld [vmem:[%s16 + $0x48] sm:$0xff]
      %v3986 = vld [vmem:[%s16 + $0x50] sm:$0xff]
      %v3987 = vld [vmem:[%s16 + $0x58] sm:$0xff]
      %v3988 = vld [vmem:[%s16 + $0x60] sm:$0xff]
      %v3989 = vld [vmem:[%s16 + $0x68] sm:$0xff]
      %v3990 = vld [vmem:[%s16 + $0x70] sm:$0xff]
      %v3991 = vld [vmem:[%s16 + $0x78] sm:$0xff]
      %v3992 = vld [vmem:[%s16 + $0x80] sm:$0xff]
      %v3993 = vld [vmem:[%s16 + $0x88] sm:$0xff]
      %v3994 = vld [vmem:[%s16 + $0x90] sm:$0xff]
      %v3995 = vld [vmem:[%s16 + $0x98] sm:$0xff]
      %v3996 = vld [vmem:[%s16 + $0xa0] sm:$0xff]
      %v3997 = vld [vmem:[%s16 + $0xa8] sm:$0xff]
      %v3998 = vld [vmem:[%s16 + $0xb0] sm:$0xff]
      %v3999 = vld [vmem:[%s16 + $0xb8] sm:$0xff]
      %v4000 = vld [vmem:[%s16 + $0xc0] sm:$0xff]
      %v4001 = vld [vmem:[%s16 + $0xc8] sm:$0xff]
      %v4002 = vld [vmem:[%s16 + $0xd0] sm:$0xff]
      %v4003 = vld [vmem:[%s16 + $0xd8] sm:$0xff]
      %v4004 = vld [vmem:[%s16 + $0xe0] sm:$0xff]
      %v4005 = vld [vmem:[%s16 + $0xe8] sm:$0xff]
      %v4006 = vld [vmem:[%s16 + $0xf0] sm:$0xff]
      %v4007 = vld [vmem:[%s16 + $0xf8] sm:$0xff]
      %4008 = vmatprep.subr.mxu0 %v3977
      %4009 = vmatpush1.msra.mxu0 %v3976
      %4010 = vmatprep.subr.mxu0 %v3979
      %4011 = vmatpush1.msra.mxu0 %v3978
      %4012 = vmatprep.subr.mxu0 %v3981
      %4013 = vmatpush1.msra.mxu0 %v3980
      %4014 = vmatprep.subr.mxu0 %v3983
      %4015 = vmatpush1.msra.mxu0 %v3982
      %4016 = vmatprep.subr.mxu0 %v3985
      %4017 = vmatpush1.msra.mxu0 %v3984
      %4018 = vmatprep.subr.mxu0 %v3987
      %4019 = vmatpush1.msra.mxu0 %v3986
      %4020 = vmatprep.subr.mxu0 %v3989
      %4021 = vmatpush1.msra.mxu0 %v3988
      %4022 = vmatprep.subr.mxu0 %v3991
      %4023 = vmatpush1.msra.mxu0 %v3990
      %4024 = vmatprep.subr.mxu0 %v3993
      %4025 = vmatpush1.msra.mxu0 %v3992
      %4026 = vmatprep.subr.mxu0 %v3995
      %4027 = vmatpush1.msra.mxu0 %v3994
      %4028 = vmatprep.subr.mxu0 %v3997
      %4029 = vmatpush1.msra.mxu0 %v3996
      %4030 = vmatprep.subr.mxu0 %v3999
      %4031 = vmatpush1.msra.mxu0 %v3998
      %4032 = vmatprep.subr.mxu0 %v4001
      %4033 = vmatpush1.msra.mxu0 %v4000
      %4034 = vmatprep.subr.mxu0 %v4003
      %4035 = vmatpush1.msra.mxu0 %v4002
      %4036 = vmatprep.subr.mxu0 %v4005
      %4037 = vmatpush1.msra.mxu0 %v4004
      %4038 = vmatprep.subr.mxu0 %v4007
      %4039 = vmatpush1.msra.mxu0 %v4006
      %4040 = vmatprep.subr.mxu0 0.0
      %4041 = vmatpush1.msra.mxu0 0.0
      %4042 = vmatprep.subr.mxu0 0.0
      %4043 = vmatpush1.msra.mxu0 0.0
      %4044 = vmatprep.subr.mxu0 0.0
      %4045 = vmatpush1.msra.mxu0 0.0
      %4046 = vmatprep.subr.mxu0 0.0
      %4047 = vmatpush1.msra.mxu0 0.0
      %4048 = vmatprep.subr.mxu0 0.0
      %4049 = vmatpush1.msra.mxu0 0.0
      %4050 = vmatprep.subr.mxu0 0.0
      %4051 = vmatpush1.msra.mxu0 0.0
      %4052 = vmatprep.subr.mxu0 0.0
      %4053 = vmatpush1.msra.mxu0 0.0
      %4054 = vmatprep.subr.mxu0 0.0
      %4055 = vmatpush1.msra.mxu0 0.0
      %4056 = vmatprep.subr.mxu0 0.0
      %4057 = vmatpush1.msra.mxu0 0.0
      %4058 = vmatprep.subr.mxu0 0.0
      %4059 = vmatpush1.msra.mxu0 0.0
      %4060 = vmatprep.subr.mxu0 0.0
      %4061 = vmatpush1.msra.mxu0 0.0
      %4062 = vmatprep.subr.mxu0 0.0
      %4063 = vmatpush1.msra.mxu0 0.0
      %4064 = vmatprep.subr.mxu0 0.0
      %4065 = vmatpush1.msra.mxu0 0.0
      %4066 = vmatprep.subr.mxu0 0.0
      %4067 = vmatpush1.msra.mxu0 0.0
      %4068 = vmatprep.subr.mxu0 0.0
      %4069 = vmatpush1.msra.mxu0 0.0
      %4070 = vmatprep.subr.mxu0 0.0
      %4071 = vmatpush1.msra.mxu0 0.0
      %4072 = vmatprep.mubr.f32.mxu0 0.0
      %4073 = vmatmul.mubr.f32.gmra.mrb[0].mxu0 %v3973
      %v4074 = vpop.f32.mrb[0].mxu0
      %v4075 = vadd.f32 0.0, %v4074
      %v4076 = vpop.f32.mrb[0].mxu0
      %v4077 = vadd.f32 0.0, %v4076
      %4078 = vdwg.mxu0
      %v4079 = vadd.f32 %v2419, %v4075
      %v4080 = vadd.f32 %v2420, %v4077
      %v4081 = vmax.f32 %v4079, 0.0
      %v4082 = vmax.f32 %v4080, 0.0
      %v4085 = vcombine.low %v4081, %v4082
      %4087 = vst [vmem:[%s626] sm:$0xff] %v4085
      %4088 = vrot.lane.b32.xlu0 %v2419, 17
      %v4089 = vpop.permute.xlu0 %4088
      %4090 = vrot.lane.b32.xlu0 %v2420, 17
      %v4091 = vpop.permute.xlu0 %4090
      %v4092 = vsel %vm642, %v4089, %v4091
      %v4093 = vsel %vm642, %v4091, %v4089
      %v4094 = vld [vmem:[%s14] ss:$8 sm:$0x3]
      %v4096 = vlaneseq
      %v4097 = vshrl.u32 %v4096, 7
      %v4098 = vsub.s32 0, %v4097
      %v4099 = vrot.slane %v4094, %v4098
      %v4100 = vlaneseq
      %v4101 = vshrl.u32 %v4100, 7
      %v4102 = vsub.s32 1, %v4101
      %v4103 = vrot.slane %v4094, %v4102
      %v4106 = vmul.f32 %v4093, %v4099
      %v4107 = vmul.f32 %v4092, %v4103
      %v4108 = vld [vmem:[%s12] sm:$0xff]
      %4109 = vrot.lane.b32.xlu0 %v2419, 16
      %v4110 = vpop.permute.xlu0 %4109
      %4111 = vrot.lane.b32.xlu0 %v2420, 16
      %v4112 = vpop.permute.xlu0 %4111
      %v4113 = vsel %vm664, %v4110, %v4112
      %v4114 = vsel %vm664, %v4112, %v4110
      %v4115 = vld [vmem:[%s667] ss:$8 sm:$0x3]
      %v4117 = vlaneseq
      %v4118 = vshrl.u32 %v4117, 7
      %v4119 = vsub.s32 0, %v4118
      %v4120 = vrot.slane %v4115, %v4119
      %v4121 = vlaneseq
      %v4122 = vshrl.u32 %v4121, 7
      %v4123 = vsub.s32 1, %v4122
      %v4124 = vrot.slane %v4115, %v4123
      %v4127 = vmul.f32 %v4114, %v4120
      %v4128 = vmul.f32 %v4113, %v4124
      %s4129 = scalar_lea.vmem %s12, 8
      %v4130 = vld [vmem:[%s4129] sm:$0xff]
      %v4132 = vsel %vm684, %v4130, 0
      %v4135 = vsel %vm688, %v4127, 0
      %v4138 = vsel %vm688, %v4128, 0
      %4140 = vmatprep.subr.mxu0 %v4138
      %4141 = vmatpush1.msra.mxu0 %v4135
      %4142 = vmatprep.subr.mxu0 0.0
      %4143 = vmatpush1.msra.mxu0 0.0
      %4144 = vmatprep.subr.mxu0 0.0
      %4145 = vmatpush1.msra.mxu0 0.0
      %4146 = vmatprep.subr.mxu0 0.0
      %4147 = vmatpush1.msra.mxu0 0.0
      %4148 = vmatprep.subr.mxu0 0.0
      %4149 = vmatpush1.msra.mxu0 0.0
      %4150 = vmatprep.subr.mxu0 0.0
      %4151 = vmatpush1.msra.mxu0 0.0
      %4152 = vmatprep.subr.mxu0 0.0
      %4153 = vmatpush1.msra.mxu0 0.0
      %4154 = vmatprep.subr.mxu0 0.0
      %4155 = vmatpush1.msra.mxu0 0.0
      %4156 = vmatprep.subr.mxu0 0.0
      %4157 = vmatpush1.msra.mxu0 0.0
      %4158 = vmatprep.subr.mxu0 0.0
      %4159 = vmatpush1.msra.mxu0 0.0
      %4160 = vmatprep.subr.mxu0 0.0
      %4161 = vmatpush1.msra.mxu0 0.0
      %4162 = vmatprep.subr.mxu0 0.0
      %4163 = vmatpush1.msra.mxu0 0.0
      %4164 = vmatprep.subr.mxu0 0.0
      %4165 = vmatpush1.msra.mxu0 0.0
      %4166 = vmatprep.subr.mxu0 0.0
      %4167 = vmatpush1.msra.mxu0 0.0
      %4168 = vmatprep.subr.mxu0 0.0
      %4169 = vmatpush1.msra.mxu0 0.0
      %4170 = vmatprep.subr.mxu0 0.0
      %4171 = vmatpush1.msra.mxu0 0.0
      %4172 = vmatprep.subr.mxu0 0.0
      %4173 = vmatpush1.msra.mxu0 0.0
      %4174 = vmatprep.subr.mxu0 0.0
      %4175 = vmatpush1.msra.mxu0 0.0
      %4176 = vmatprep.subr.mxu0 0.0
      %4177 = vmatpush1.msra.mxu0 0.0
      %4178 = vmatprep.subr.mxu0 0.0
      %4179 = vmatpush1.msra.mxu0 0.0
      %4180 = vmatprep.subr.mxu0 0.0
      %4181 = vmatpush1.msra.mxu0 0.0
      %4182 = vmatprep.subr.mxu0 0.0
      %4183 = vmatpush1.msra.mxu0 0.0
      %4184 = vmatprep.subr.mxu0 0.0
      %4185 = vmatpush1.msra.mxu0 0.0
      %4186 = vmatprep.subr.mxu0 0.0
      %4187 = vmatpush1.msra.mxu0 0.0
      %4188 = vmatprep.subr.mxu0 0.0
      %4189 = vmatpush1.msra.mxu0 0.0
      %4190 = vmatprep.subr.mxu0 0.0
      %4191 = vmatpush1.msra.mxu0 0.0
      %4192 = vmatprep.subr.mxu0 0.0
      %4193 = vmatpush1.msra.mxu0 0.0
      %4194 = vmatprep.subr.mxu0 0.0
      %4195 = vmatpush1.msra.mxu0 0.0
      %4196 = vmatprep.subr.mxu0 0.0
      %4197 = vmatpush1.msra.mxu0 0.0
      %4198 = vmatprep.subr.mxu0 0.0
      %4199 = vmatpush1.msra.mxu0 0.0
      %4200 = vmatprep.subr.mxu0 0.0
      %4201 = vmatpush1.msra.mxu0 0.0
      %4202 = vmatprep.subr.mxu0 0.0
      %4203 = vmatpush1.msra.mxu0 0.0
      %4204 = vmatprep.mubr.f32.mxu0 0.0
      %4205 = vmatmul.mubr.f32.gmra.mrb[0].mxu0 %v4132
      %v4206 = vpop.f32.mrb[0].mxu0
      %v4207 = vadd.f32 0.0, %v4206
      %v4208 = vpop.f32.mrb[0].mxu0
      %v4209 = vadd.f32 0.0, %v4208
      %4210 = vdwg.mxu0
      %v4212 = vsel %vm684, %v4108, 0
      %v4215 = vsel %vm688, %v4106, 0
      %v4218 = vsel %vm688, %v4107, 0
      %4220 = vmatprep.subr.mxu0 %v4218
      %4221 = vmatpush1.msra.mxu0 %v4215
      %4222 = vmatprep.subr.mxu0 0.0
      %4223 = vmatpush1.msra.mxu0 0.0
      %4224 = vmatprep.subr.mxu0 0.0
      %4225 = vmatpush1.msra.mxu0 0.0
      %4226 = vmatprep.subr.mxu0 0.0
      %4227 = vmatpush1.msra.mxu0 0.0
      %4228 = vmatprep.subr.mxu0 0.0
      %4229 = vmatpush1.msra.mxu0 0.0
      %4230 = vmatprep.subr.mxu0 0.0
      %4231 = vmatpush1.msra.mxu0 0.0
      %4232 = vmatprep.subr.mxu0 0.0
      %4233 = vmatpush1.msra.mxu0 0.0
      %4234 = vmatprep.subr.mxu0 0.0
      %4235 = vmatpush1.msra.mxu0 0.0
      %4236 = vmatprep.subr.mxu0 0.0
      %4237 = vmatpush1.msra.mxu0 0.0
      %4238 = vmatprep.subr.mxu0 0.0
      %4239 = vmatpush1.msra.mxu0 0.0
      %4240 = vmatprep.subr.mxu0 0.0
      %4241 = vmatpush1.msra.mxu0 0.0
      %4242 = vmatprep.subr.mxu0 0.0
      %4243 = vmatpush1.msra.mxu0 0.0
      %4244 = vmatprep.subr.mxu0 0.0
      %4245 = vmatpush1.msra.mxu0 0.0
      %4246 = vmatprep.subr.mxu0 0.0
      %4247 = vmatpush1.msra.mxu0 0.0
      %4248 = vmatprep.subr.mxu0 0.0
      %4249 = vmatpush1.msra.mxu0 0.0
      %4250 = vmatprep.subr.mxu0 0.0
      %4251 = vmatpush1.msra.mxu0 0.0
      %4252 = vmatprep.subr.mxu0 0.0
      %4253 = vmatpush1.msra.mxu0 0.0
      %4254 = vmatprep.subr.mxu0 0.0
      %4255 = vmatpush1.msra.mxu0 0.0
      %4256 = vmatprep.subr.mxu0 0.0
      %4257 = vmatpush1.msra.mxu0 0.0
      %4258 = vmatprep.subr.mxu0 0.0
      %4259 = vmatpush1.msra.mxu0 0.0
      %4260 = vmatprep.subr.mxu0 0.0
      %4261 = vmatpush1.msra.mxu0 0.0
      %4262 = vmatprep.subr.mxu0 0.0
      %4263 = vmatpush1.msra.mxu0 0.0
      %4264 = vmatprep.subr.mxu0 0.0
      %4265 = vmatpush1.msra.mxu0 0.0
      %4266 = vmatprep.subr.mxu0 0.0
      %4267 = vmatpush1.msra.mxu0 0.0
      %4268 = vmatprep.subr.mxu0 0.0
      %4269 = vmatpush1.msra.mxu0 0.0
      %4270 = vmatprep.subr.mxu0 0.0
      %4271 = vmatpush1.msra.mxu0 0.0
      %4272 = vmatprep.subr.mxu0 0.0
      %4273 = vmatpush1.msra.mxu0 0.0
      %4274 = vmatprep.subr.mxu0 0.0
      %4275 = vmatpush1.msra.mxu0 0.0
      %4276 = vmatprep.subr.mxu0 0.0
      %4277 = vmatpush1.msra.mxu0 0.0
      %4278 = vmatprep.subr.mxu0 0.0
      %4279 = vmatpush1.msra.mxu0 0.0
      %4280 = vmatprep.subr.mxu0 0.0
      %4281 = vmatpush1.msra.mxu0 0.0
      %4282 = vmatprep.subr.mxu0 0.0
      %4283 = vmatpush1.msra.mxu0 0.0
      %4284 = vmatprep.mubr.f32.mxu0 0.0
      %4285 = vmatmul.mubr.f32.gmra.mrb[0].mxu0 %v4212
      %v4286 = vpop.f32.mrb[0].mxu0
      %v4287 = vadd.f32 %v4207, %v4286
      %v4288 = vpop.f32.mrb[0].mxu0
      %v4289 = vadd.f32 %v4209, %v4288
      %4290 = vdwg.mxu0
      %4291 = vrot.lane.b32.xlu0 %v2419, 15
      %v4292 = vpop.permute.xlu0 %4291
      %4293 = vrot.lane.b32.xlu0 %v2420, 15
      %v4294 = vpop.permute.xlu0 %4293
      %v4295 = vsel %vm850, %v4292, %v4294
      %v4296 = vsel %vm850, %v4294, %v4292
      %v4297 = vld [vmem:[%s853] ss:$8 sm:$0x3]
      %v4299 = vlaneseq
      %v4300 = vshrl.u32 %v4299, 7
      %v4301 = vsub.s32 0, %v4300
      %v4302 = vrot.slane %v4297, %v4301
      %v4303 = vlaneseq
      %v4304 = vshrl.u32 %v4303, 7
      %v4305 = vsub.s32 1, %v4304
      %v4306 = vrot.slane %v4297, %v4305
      %v4309 = vmul.f32 %v4296, %v4302
      %v4310 = vmul.f32 %v4295, %v4306
      %s4311 = scalar_lea.vmem %s12, 16
      %v4312 = vld [vmem:[%s4311] sm:$0xff]
      %v4314 = vsel %vm684, %v4312, 0
      %v4317 = vsel %vm688, %v4309, 0
      %v4320 = vsel %vm688, %v4310, 0
      %4322 = vmatprep.subr.mxu0 %v4320
      %4323 = vmatpush1.msra.mxu0 %v4317
      %4324 = vmatprep.subr.mxu0 0.0
      %4325 = vmatpush1.msra.mxu0 0.0
      %4326 = vmatprep.subr.mxu0 0.0
      %4327 = vmatpush1.msra.mxu0 0.0
      %4328 = vmatprep.subr.mxu0 0.0
      %4329 = vmatpush1.msra.mxu0 0.0
      %4330 = vmatprep.subr.mxu0 0.0
      %4331 = vmatpush1.msra.mxu0 0.0
      %4332 = vmatprep.subr.mxu0 0.0
      %4333 = vmatpush1.msra.mxu0 0.0
      %4334 = vmatprep.subr.mxu0 0.0
      %4335 = vmatpush1.msra.mxu0 0.0
      %4336 = vmatprep.subr.mxu0 0.0
      %4337 = vmatpush1.msra.mxu0 0.0
      %4338 = vmatprep.subr.mxu0 0.0
      %4339 = vmatpush1.msra.mxu0 0.0
      %4340 = vmatprep.subr.mxu0 0.0
      %4341 = vmatpush1.msra.mxu0 0.0
      %4342 = vmatprep.subr.mxu0 0.0
      %4343 = vmatpush1.msra.mxu0 0.0
      %4344 = vmatprep.subr.mxu0 0.0
      %4345 = vmatpush1.msra.mxu0 0.0
      %4346 = vmatprep.subr.mxu0 0.0
      %4347 = vmatpush1.msra.mxu0 0.0
      %4348 = vmatprep.subr.mxu0 0.0
      %4349 = vmatpush1.msra.mxu0 0.0
      %4350 = vmatprep.subr.mxu0 0.0
      %4351 = vmatpush1.msra.mxu0 0.0
      %4352 = vmatprep.subr.mxu0 0.0
      %4353 = vmatpush1.msra.mxu0 0.0
      %4354 = vmatprep.subr.mxu0 0.0
      %4355 = vmatpush1.msra.mxu0 0.0
      %4356 = vmatprep.subr.mxu0 0.0
      %4357 = vmatpush1.msra.mxu0 0.0
      %4358 = vmatprep.subr.mxu0 0.0
      %4359 = vmatpush1.msra.mxu0 0.0
      %4360 = vmatprep.subr.mxu0 0.0
      %4361 = vmatpush1.msra.mxu0 0.0
      %4362 = vmatprep.subr.mxu0 0.0
      %4363 = vmatpush1.msra.mxu0 0.0
      %4364 = vmatprep.subr.mxu0 0.0
      %4365 = vmatpush1.msra.mxu0 0.0
      %4366 = vmatprep.subr.mxu0 0.0
      %4367 = vmatpush1.msra.mxu0 0.0
      %4368 = vmatprep.subr.mxu0 0.0
      %4369 = vmatpush1.msra.mxu0 0.0
      %4370 = vmatprep.subr.mxu0 0.0
      %4371 = vmatpush1.msra.mxu0 0.0
      %4372 = vmatprep.subr.mxu0 0.0
      %4373 = vmatpush1.msra.mxu0 0.0
      %4374 = vmatprep.subr.mxu0 0.0
      %4375 = vmatpush1.msra.mxu0 0.0
      %4376 = vmatprep.subr.mxu0 0.0
      %4377 = vmatpush1.msra.mxu0 0.0
      %4378 = vmatprep.subr.mxu0 0.0
      %4379 = vmatpush1.msra.mxu0 0.0
      %4380 = vmatprep.subr.mxu0 0.0
      %4381 = vmatpush1.msra.mxu0 0.0
      %4382 = vmatprep.subr.mxu0 0.0
      %4383 = vmatpush1.msra.mxu0 0.0
      %4384 = vmatprep.subr.mxu0 0.0
      %4385 = vmatpush1.msra.mxu0 0.0
      %4386 = vmatprep.mubr.f32.mxu0 0.0
      %4387 = vmatmul.mubr.f32.gmra.mrb[0].mxu0 %v4314
      %v4388 = vpop.f32.mrb[0].mxu0
      %v4389 = vadd.f32 0.0, %v4388
      %v4390 = vpop.f32.mrb[0].mxu0
      %v4391 = vadd.f32 0.0, %v4390
      %4392 = vdwg.mxu0
      %v4393 = vadd.f32 %v4287, %v4389
      %v4394 = vadd.f32 %v4289, %v4391
      %4395 = vrot.lane.b32.xlu0 %v2419, 1
      %v4396 = vpop.permute.xlu0 %4395
      %4397 = vrot.lane.b32.xlu0 %v2420, 1
      %v4398 = vpop.permute.xlu0 %4397
      %v4399 = vsel %vm956, %v4396, %v4398
      %v4400 = vsel %vm956, %v4398, %v4396
      %v4401 = vld [vmem:[%s959] ss:$8 sm:$0x3]
      %v4403 = vlaneseq
      %v4404 = vshrl.u32 %v4403, 7
      %v4405 = vsub.s32 0, %v4404
      %v4406 = vrot.slane %v4401, %v4405
      %v4407 = vlaneseq
      %v4408 = vshrl.u32 %v4407, 7
      %v4409 = vsub.s32 1, %v4408
      %v4410 = vrot.slane %v4401, %v4409
      %v4413 = vmul.f32 %v4400, %v4406
      %v4414 = vmul.f32 %v4399, %v4410
      %s4415 = scalar_lea.vmem %s12, 24
      %v4416 = vld [vmem:[%s4415] sm:$0xff]
      %v4418 = vsel %vm684, %v4416, 0
      %v4421 = vsel %vm688, %v4413, 0
      %v4424 = vsel %vm688, %v4414, 0
      %4426 = vmatprep.subr.mxu0 %v4424
      %4427 = vmatpush1.msra.mxu0 %v4421
      %4428 = vmatprep.subr.mxu0 0.0
      %4429 = vmatpush1.msra.mxu0 0.0
      %4430 = vmatprep.subr.mxu0 0.0
      %4431 = vmatpush1.msra.mxu0 0.0
      %4432 = vmatprep.subr.mxu0 0.0
      %4433 = vmatpush1.msra.mxu0 0.0
      %4434 = vmatprep.subr.mxu0 0.0
      %4435 = vmatpush1.msra.mxu0 0.0
      %4436 = vmatprep.subr.mxu0 0.0
      %4437 = vmatpush1.msra.mxu0 0.0
      %4438 = vmatprep.subr.mxu0 0.0
      %4439 = vmatpush1.msra.mxu0 0.0
      %4440 = vmatprep.subr.mxu0 0.0
      %4441 = vmatpush1.msra.mxu0 0.0
      %4442 = vmatprep.subr.mxu0 0.0
      %4443 = vmatpush1.msra.mxu0 0.0
      %4444 = vmatprep.subr.mxu0 0.0
      %4445 = vmatpush1.msra.mxu0 0.0
      %4446 = vmatprep.subr.mxu0 0.0
      %4447 = vmatpush1.msra.mxu0 0.0
      %4448 = vmatprep.subr.mxu0 0.0
      %4449 = vmatpush1.msra.mxu0 0.0
      %4450 = vmatprep.subr.mxu0 0.0
      %4451 = vmatpush1.msra.mxu0 0.0
      %4452 = vmatprep.subr.mxu0 0.0
      %4453 = vmatpush1.msra.mxu0 0.0
      %4454 = vmatprep.subr.mxu0 0.0
      %4455 = vmatpush1.msra.mxu0 0.0
      %4456 = vmatprep.subr.mxu0 0.0
      %4457 = vmatpush1.msra.mxu0 0.0
      %4458 = vmatprep.subr.mxu0 0.0
      %4459 = vmatpush1.msra.mxu0 0.0
      %4460 = vmatprep.subr.mxu0 0.0
      %4461 = vmatpush1.msra.mxu0 0.0
      %4462 = vmatprep.subr.mxu0 0.0
      %4463 = vmatpush1.msra.mxu0 0.0
      %4464 = vmatprep.subr.mxu0 0.0
      %4465 = vmatpush1.msra.mxu0 0.0
      %4466 = vmatprep.subr.mxu0 0.0
      %4467 = vmatpush1.msra.mxu0 0.0
      %4468 = vmatprep.subr.mxu0 0.0
      %4469 = vmatpush1.msra.mxu0 0.0
      %4470 = vmatprep.subr.mxu0 0.0
      %4471 = vmatpush1.msra.mxu0 0.0
      %4472 = vmatprep.subr.mxu0 0.0
      %4473 = vmatpush1.msra.mxu0 0.0
      %4474 = vmatprep.subr.mxu0 0.0
      %4475 = vmatpush1.msra.mxu0 0.0
      %4476 = vmatprep.subr.mxu0 0.0
      %4477 = vmatpush1.msra.mxu0 0.0
      %4478 = vmatprep.subr.mxu0 0.0
      %4479 = vmatpush1.msra.mxu0 0.0
      %4480 = vmatprep.subr.mxu0 0.0
      %4481 = vmatpush1.msra.mxu0 0.0
      %4482 = vmatprep.subr.mxu0 0.0
      %4483 = vmatpush1.msra.mxu0 0.0
      %4484 = vmatprep.subr.mxu0 0.0
      %4485 = vmatpush1.msra.mxu0 0.0
      %4486 = vmatprep.subr.mxu0 0.0
      %4487 = vmatpush1.msra.mxu0 0.0
      %4488 = vmatprep.subr.mxu0 0.0
      %4489 = vmatpush1.msra.mxu0 0.0
      %4490 = vmatprep.mubr.f32.mxu0 0.0
      %4491 = vmatmul.mubr.f32.gmra.mrb[0].mxu0 %v4418
      %v4492 = vpop.f32.mrb[0].mxu0
      %v4493 = vadd.f32 0.0, %v4492
      %v4494 = vpop.f32.mrb[0].mxu0
      %v4495 = vadd.f32 0.0, %v4494
      %4496 = vdwg.mxu0
      %v4497 = vadd.f32 %v4393, %v4493
      %v4498 = vadd.f32 %v4394, %v4495
      %v4499 = vld [vmem:[%s1058] ss:$8 sm:$0x3]
      %v4501 = vlaneseq
      %v4502 = vshrl.u32 %v4501, 7
      %v4503 = vsub.s32 0, %v4502
      %v4504 = vrot.slane %v4499, %v4503
      %v4505 = vlaneseq
      %v4506 = vshrl.u32 %v4505, 7
      %v4507 = vsub.s32 1, %v4506
      %v4508 = vrot.slane %v4499, %v4507
      %v4511 = vmul.f32 %v2419, %v4504
      %v4512 = vmul.f32 %v2420, %v4508
      %s4513 = scalar_lea.vmem %s12, 32
      %v4514 = vld [vmem:[%s4513] sm:$0xff]
      %v4516 = vsel %vm684, %v4514, 0
      %v4519 = vsel %vm688, %v4511, 0
      %v4522 = vsel %vm688, %v4512, 0
      %4524 = vmatprep.subr.mxu0 %v4522
      %4525 = vmatpush1.msra.mxu0 %v4519
      %4526 = vmatprep.subr.mxu0 0.0
      %4527 = vmatpush1.msra.mxu0 0.0
      %4528 = vmatprep.subr.mxu0 0.0
      %4529 = vmatpush1.msra.mxu0 0.0
      %4530 = vmatprep.subr.mxu0 0.0
      %4531 = vmatpush1.msra.mxu0 0.0
      %4532 = vmatprep.subr.mxu0 0.0
      %4533 = vmatpush1.msra.mxu0 0.0
      %4534 = vmatprep.subr.mxu0 0.0
      %4535 = vmatpush1.msra.mxu0 0.0
      %4536 = vmatprep.subr.mxu0 0.0
      %4537 = vmatpush1.msra.mxu0 0.0
      %4538 = vmatprep.subr.mxu0 0.0
      %4539 = vmatpush1.msra.mxu0 0.0
      %4540 = vmatprep.subr.mxu0 0.0
      %4541 = vmatpush1.msra.mxu0 0.0
      %4542 = vmatprep.subr.mxu0 0.0
      %4543 = vmatpush1.msra.mxu0 0.0
      %4544 = vmatprep.subr.mxu0 0.0
      %4545 = vmatpush1.msra.mxu0 0.0
      %4546 = vmatprep.subr.mxu0 0.0
      %4547 = vmatpush1.msra.mxu0 0.0
      %4548 = vmatprep.subr.mxu0 0.0
      %4549 = vmatpush1.msra.mxu0 0.0
      %4550 = vmatprep.subr.mxu0 0.0
      %4551 = vmatpush1.msra.mxu0 0.0
      %4552 = vmatprep.subr.mxu0 0.0
      %4553 = vmatpush1.msra.mxu0 0.0
      %4554 = vmatprep.subr.mxu0 0.0
      %4555 = vmatpush1.msra.mxu0 0.0
      %4556 = vmatprep.subr.mxu0 0.0
      %4557 = vmatpush1.msra.mxu0 0.0
      %4558 = vmatprep.subr.mxu0 0.0
      %4559 = vmatpush1.msra.mxu0 0.0
      %4560 = vmatprep.subr.mxu0 0.0
      %4561 = vmatpush1.msra.mxu0 0.0
      %4562 = vmatprep.subr.mxu0 0.0
      %4563 = vmatpush1.msra.mxu0 0.0
      %4564 = vmatprep.subr.mxu0 0.0
      %4565 = vmatpush1.msra.mxu0 0.0
      %4566 = vmatprep.subr.mxu0 0.0
      %4567 = vmatpush1.msra.mxu0 0.0
      %4568 = vmatprep.subr.mxu0 0.0
      %4569 = vmatpush1.msra.mxu0 0.0
      %4570 = vmatprep.subr.mxu0 0.0
      %4571 = vmatpush1.msra.mxu0 0.0
      %4572 = vmatprep.subr.mxu0 0.0
      %4573 = vmatpush1.msra.mxu0 0.0
      %4574 = vmatprep.subr.mxu0 0.0
      %4575 = vmatpush1.msra.mxu0 0.0
      %4576 = vmatprep.subr.mxu0 0.0
      %4577 = vmatpush1.msra.mxu0 0.0
      %4578 = vmatprep.subr.mxu0 0.0
      %4579 = vmatpush1.msra.mxu0 0.0
      %4580 = vmatprep.subr.mxu0 0.0
      %4581 = vmatpush1.msra.mxu0 0.0
      %4582 = vmatprep.subr.mxu0 0.0
      %4583 = vmatpush1.msra.mxu0 0.0
      %4584 = vmatprep.subr.mxu0 0.0
      %4585 = vmatpush1.msra.mxu0 0.0
      %4586 = vmatprep.subr.mxu0 0.0
      %4587 = vmatpush1.msra.mxu0 0.0
      %4588 = vmatprep.mubr.f32.mxu0 0.0
      %4589 = vmatmul.mubr.f32.gmra.mrb[0].mxu0 %v4516
      %v4590 = vpop.f32.mrb[0].mxu0
      %v4591 = vadd.f32 0.0, %v4590
      %v4592 = vpop.f32.mrb[0].mxu0
      %v4593 = vadd.f32 0.0, %v4592
      %4594 = vdwg.mxu0
      %v4595 = vadd.f32 %v4497, %v4591
      %v4596 = vadd.f32 %v4498, %v4593
      %4597 = vrot.lane.b32.xlu0 %v2419, 127
      %v4598 = vpop.permute.xlu0 %4597
      %4599 = vrot.lane.b32.xlu0 %v2420, 127
      %v4600 = vpop.permute.xlu0 %4599
      %v4601 = vsel %vm1162, %v4598, %v4600
      %v4602 = vsel %vm1162, %v4600, %v4598
      %v4603 = vld [vmem:[%s1165] ss:$8 sm:$0x3]
      %v4605 = vlaneseq
      %v4606 = vshrl.u32 %v4605, 7
      %v4607 = vsub.s32 0, %v4606
      %v4608 = vrot.slane %v4603, %v4607
      %v4609 = vlaneseq
      %v4610 = vshrl.u32 %v4609, 7
      %v4611 = vsub.s32 1, %v4610
      %v4612 = vrot.slane %v4603, %v4611
      %v4615 = vmul.f32 %v4601, %v4608
      %v4616 = vmul.f32 %v4602, %v4612
      %s4617 = scalar_lea.vmem %s12, 40
      %v4618 = vld [vmem:[%s4617] sm:$0xff]
      %v4620 = vsel %vm684, %v4618, 0
      %v4623 = vsel %vm688, %v4615, 0
      %v4626 = vsel %vm688, %v4616, 0
      %4628 = vmatprep.subr.mxu0 %v4626
      %4629 = vmatpush1.msra.mxu0 %v4623
      %4630 = vmatprep.subr.mxu0 0.0
      %4631 = vmatpush1.msra.mxu0 0.0
      %4632 = vmatprep.subr.mxu0 0.0
      %4633 = vmatpush1.msra.mxu0 0.0
      %4634 = vmatprep.subr.mxu0 0.0
      %4635 = vmatpush1.msra.mxu0 0.0
      %4636 = vmatprep.subr.mxu0 0.0
      %4637 = vmatpush1.msra.mxu0 0.0
      %4638 = vmatprep.subr.mxu0 0.0
      %4639 = vmatpush1.msra.mxu0 0.0
      %4640 = vmatprep.subr.mxu0 0.0
      %4641 = vmatpush1.msra.mxu0 0.0
      %4642 = vmatprep.subr.mxu0 0.0
      %4643 = vmatpush1.msra.mxu0 0.0
      %4644 = vmatprep.subr.mxu0 0.0
      %4645 = vmatpush1.msra.mxu0 0.0
      %4646 = vmatprep.subr.mxu0 0.0
      %4647 = vmatpush1.msra.mxu0 0.0
      %4648 = vmatprep.subr.mxu0 0.0
      %4649 = vmatpush1.msra.mxu0 0.0
      %4650 = vmatprep.subr.mxu0 0.0
      %4651 = vmatpush1.msra.mxu0 0.0
      %4652 = vmatprep.subr.mxu0 0.0
      %4653 = vmatpush1.msra.mxu0 0.0
      %4654 = vmatprep.subr.mxu0 0.0
      %4655 = vmatpush1.msra.mxu0 0.0
      %4656 = vmatprep.subr.mxu0 0.0
      %4657 = vmatpush1.msra.mxu0 0.0
      %4658 = vmatprep.subr.mxu0 0.0
      %4659 = vmatpush1.msra.mxu0 0.0
      %4660 = vmatprep.subr.mxu0 0.0
      %4661 = vmatpush1.msra.mxu0 0.0
      %4662 = vmatprep.subr.mxu0 0.0
      %4663 = vmatpush1.msra.mxu0 0.0
      %4664 = vmatprep.subr.mxu0 0.0
      %4665 = vmatpush1.msra.mxu0 0.0
      %4666 = vmatprep.subr.mxu0 0.0
      %4667 = vmatpush1.msra.mxu0 0.0
      %4668 = vmatprep.subr.mxu0 0.0
      %4669 = vmatpush1.msra.mxu0 0.0
      %4670 = vmatprep.subr.mxu0 0.0
      %4671 = vmatpush1.msra.mxu0 0.0
      %4672 = vmatprep.subr.mxu0 0.0
      %4673 = vmatpush1.msra.mxu0 0.0
      %4674 = vmatprep.subr.mxu0 0.0
      %4675 = vmatpush1.msra.mxu0 0.0
      %4676 = vmatprep.subr.mxu0 0.0
      %4677 = vmatpush1.msra.mxu0 0.0
      %4678 = vmatprep.subr.mxu0 0.0
      %4679 = vmatpush1.msra.mxu0 0.0
      %4680 = vmatprep.subr.mxu0 0.0
      %4681 = vmatpush1.msra.mxu0 0.0
      %4682 = vmatprep.subr.mxu0 0.0
      %4683 = vmatpush1.msra.mxu0 0.0
      %4684 = vmatprep.subr.mxu0 0.0
      %4685 = vmatpush1.msra.mxu0 0.0
      %4686 = vmatprep.subr.mxu0 0.0
      %4687 = vmatpush1.msra.mxu0 0.0
      %4688 = vmatprep.subr.mxu0 0.0
      %4689 = vmatpush1.msra.mxu0 0.0
      %4690 = vmatprep.subr.mxu0 0.0
      %4691 = vmatpush1.msra.mxu0 0.0
      %4692 = vmatprep.mubr.f32.mxu0 0.0
      %4693 = vmatmul.mubr.f32.gmra.mrb[0].mxu0 %v4620
      %v4694 = vpop.f32.mrb[0].mxu0
      %v4695 = vadd.f32 0.0, %v4694
      %v4696 = vpop.f32.mrb[0].mxu0
      %v4697 = vadd.f32 0.0, %v4696
      %4698 = vdwg.mxu0
      %v4699 = vadd.f32 %v4595, %v4695
      %v4700 = vadd.f32 %v4596, %v4697
      %4701 = vrot.lane.b32.xlu0 %v2419, 113
      %v4702 = vpop.permute.xlu0 %4701
      %4703 = vrot.lane.b32.xlu0 %v2420, 113
      %v4704 = vpop.permute.xlu0 %4703
      %v4705 = vsel %vm1268, %v4702, %v4704
      %v4706 = vsel %vm1268, %v4704, %v4702
      %v4707 = vld [vmem:[%s1271] ss:$8 sm:$0x3]
      %v4709 = vlaneseq
      %v4710 = vshrl.u32 %v4709, 7
      %v4711 = vsub.s32 0, %v4710
      %v4712 = vrot.slane %v4707, %v4711
      %v4713 = vlaneseq
      %v4714 = vshrl.u32 %v4713, 7
      %v4715 = vsub.s32 1, %v4714
      %v4716 = vrot.slane %v4707, %v4715
      %v4719 = vmul.f32 %v4705, %v4712
      %v4720 = vmul.f32 %v4706, %v4716
      %s4721 = scalar_lea.vmem %s12, 48
      %v4722 = vld [vmem:[%s4721] sm:$0xff]
      %v4724 = vsel %vm684, %v4722, 0
      %v4727 = vsel %vm688, %v4719, 0
      %v4730 = vsel %vm688, %v4720, 0
      %4732 = vmatprep.subr.mxu0 %v4730
      %4733 = vmatpush1.msra.mxu0 %v4727
      %4734 = vmatprep.subr.mxu0 0.0
      %4735 = vmatpush1.msra.mxu0 0.0
      %4736 = vmatprep.subr.mxu0 0.0
      %4737 = vmatpush1.msra.mxu0 0.0
      %4738 = vmatprep.subr.mxu0 0.0
      %4739 = vmatpush1.msra.mxu0 0.0
      %4740 = vmatprep.subr.mxu0 0.0
      %4741 = vmatpush1.msra.mxu0 0.0
      %4742 = vmatprep.subr.mxu0 0.0
      %4743 = vmatpush1.msra.mxu0 0.0
      %4744 = vmatprep.subr.mxu0 0.0
      %4745 = vmatpush1.msra.mxu0 0.0
      %4746 = vmatprep.subr.mxu0 0.0
      %4747 = vmatpush1.msra.mxu0 0.0
      %4748 = vmatprep.subr.mxu0 0.0
      %4749 = vmatpush1.msra.mxu0 0.0
      %4750 = vmatprep.subr.mxu0 0.0
      %4751 = vmatpush1.msra.mxu0 0.0
      %4752 = vmatprep.subr.mxu0 0.0
      %4753 = vmatpush1.msra.mxu0 0.0
      %4754 = vmatprep.subr.mxu0 0.0
      %4755 = vmatpush1.msra.mxu0 0.0
      %4756 = vmatprep.subr.mxu0 0.0
      %4757 = vmatpush1.msra.mxu0 0.0
      %4758 = vmatprep.subr.mxu0 0.0
      %4759 = vmatpush1.msra.mxu0 0.0
      %4760 = vmatprep.subr.mxu0 0.0
      %4761 = vmatpush1.msra.mxu0 0.0
      %4762 = vmatprep.subr.mxu0 0.0
      %4763 = vmatpush1.msra.mxu0 0.0
      %4764 = vmatprep.subr.mxu0 0.0
      %4765 = vmatpush1.msra.mxu0 0.0
      %4766 = vmatprep.subr.mxu0 0.0
      %4767 = vmatpush1.msra.mxu0 0.0
      %4768 = vmatprep.subr.mxu0 0.0
      %4769 = vmatpush1.msra.mxu0 0.0
      %4770 = vmatprep.subr.mxu0 0.0
      %4771 = vmatpush1.msra.mxu0 0.0
      %4772 = vmatprep.subr.mxu0 0.0
      %4773 = vmatpush1.msra.mxu0 0.0
      %4774 = vmatprep.subr.mxu0 0.0
      %4775 = vmatpush1.msra.mxu0 0.0
      %4776 = vmatprep.subr.mxu0 0.0
      %4777 = vmatpush1.msra.mxu0 0.0
      %4778 = vmatprep.subr.mxu0 0.0
      %4779 = vmatpush1.msra.mxu0 0.0
      %4780 = vmatprep.subr.mxu0 0.0
      %4781 = vmatpush1.msra.mxu0 0.0
      %4782 = vmatprep.subr.mxu0 0.0
      %4783 = vmatpush1.msra.mxu0 0.0
      %4784 = vmatprep.subr.mxu0 0.0
      %4785 = vmatpush1.msra.mxu0 0.0
      %4786 = vmatprep.subr.mxu0 0.0
      %4787 = vmatpush1.msra.mxu0 0.0
      %4788 = vmatprep.subr.mxu0 0.0
      %4789 = vmatpush1.msra.mxu0 0.0
      %4790 = vmatprep.subr.mxu0 0.0
      %4791 = vmatpush1.msra.mxu0 0.0
      %4792 = vmatprep.subr.mxu0 0.0
      %4793 = vmatpush1.msra.mxu0 0.0
      %4794 = vmatprep.subr.mxu0 0.0
      %4795 = vmatpush1.msra.mxu0 0.0
      %4796 = vmatprep.mubr.f32.mxu0 0.0
      %4797 = vmatmul.mubr.f32.gmra.mrb[0].mxu0 %v4724
      %v4798 = vpop.f32.mrb[0].mxu0
      %v4799 = vadd.f32 0.0, %v4798
      %v4800 = vpop.f32.mrb[0].mxu0
      %v4801 = vadd.f32 0.0, %v4800
      %4802 = vdwg.mxu0
      %v4803 = vadd.f32 %v4699, %v4799
      %v4804 = vadd.f32 %v4700, %v4801
      %4805 = vrot.lane.b32.xlu0 %v2419, 112
      %v4806 = vpop.permute.xlu0 %4805
      %4807 = vrot.lane.b32.xlu0 %v2420, 112
      %v4808 = vpop.permute.xlu0 %4807
      %v4809 = vsel %vm1374, %v4806, %v4808
      %v4810 = vsel %vm1374, %v4808, %v4806
      %v4811 = vld [vmem:[%s1377] ss:$8 sm:$0x3]
      %v4813 = vlaneseq
      %v4814 = vshrl.u32 %v4813, 7
      %v4815 = vsub.s32 0, %v4814
      %v4816 = vrot.slane %v4811, %v4815
      %v4817 = vlaneseq
      %v4818 = vshrl.u32 %v4817, 7
      %v4819 = vsub.s32 1, %v4818
      %v4820 = vrot.slane %v4811, %v4819
      %v4823 = vmul.f32 %v4809, %v4816
      %v4824 = vmul.f32 %v4810, %v4820
      %s4825 = scalar_lea.vmem %s12, 56
      %v4826 = vld [vmem:[%s4825] sm:$0xff]
      %v4828 = vsel %vm684, %v4826, 0
      %v4831 = vsel %vm688, %v4823, 0
      %v4834 = vsel %vm688, %v4824, 0
      %4836 = vmatprep.subr.mxu0 %v4834
      %4837 = vmatpush1.msra.mxu0 %v4831
      %4838 = vmatprep.subr.mxu0 0.0
      %4839 = vmatpush1.msra.mxu0 0.0
      %4840 = vmatprep.subr.mxu0 0.0
      %4841 = vmatpush1.msra.mxu0 0.0
      %4842 = vmatprep.subr.mxu0 0.0
      %4843 = vmatpush1.msra.mxu0 0.0
      %4844 = vmatprep.subr.mxu0 0.0
      %4845 = vmatpush1.msra.mxu0 0.0
      %4846 = vmatprep.subr.mxu0 0.0
      %4847 = vmatpush1.msra.mxu0 0.0
      %4848 = vmatprep.subr.mxu0 0.0
      %4849 = vmatpush1.msra.mxu0 0.0
      %4850 = vmatprep.subr.mxu0 0.0
      %4851 = vmatpush1.msra.mxu0 0.0
      %4852 = vmatprep.subr.mxu0 0.0
      %4853 = vmatpush1.msra.mxu0 0.0
      %4854 = vmatprep.subr.mxu0 0.0
      %4855 = vmatpush1.msra.mxu0 0.0
      %4856 = vmatprep.subr.mxu0 0.0
      %4857 = vmatpush1.msra.mxu0 0.0
      %4858 = vmatprep.subr.mxu0 0.0
      %4859 = vmatpush1.msra.mxu0 0.0
      %4860 = vmatprep.subr.mxu0 0.0
      %4861 = vmatpush1.msra.mxu0 0.0
      %4862 = vmatprep.subr.mxu0 0.0
      %4863 = vmatpush1.msra.mxu0 0.0
      %4864 = vmatprep.subr.mxu0 0.0
      %4865 = vmatpush1.msra.mxu0 0.0
      %4866 = vmatprep.subr.mxu0 0.0
      %4867 = vmatpush1.msra.mxu0 0.0
      %4868 = vmatprep.subr.mxu0 0.0
      %4869 = vmatpush1.msra.mxu0 0.0
      %4870 = vmatprep.subr.mxu0 0.0
      %4871 = vmatpush1.msra.mxu0 0.0
      %4872 = vmatprep.subr.mxu0 0.0
      %4873 = vmatpush1.msra.mxu0 0.0
      %4874 = vmatprep.subr.mxu0 0.0
      %4875 = vmatpush1.msra.mxu0 0.0
      %4876 = vmatprep.subr.mxu0 0.0
      %4877 = vmatpush1.msra.mxu0 0.0
      %4878 = vmatprep.subr.mxu0 0.0
      %4879 = vmatpush1.msra.mxu0 0.0
      %4880 = vmatprep.subr.mxu0 0.0
      %4881 = vmatpush1.msra.mxu0 0.0
      %4882 = vmatprep.subr.mxu0 0.0
      %4883 = vmatpush1.msra.mxu0 0.0
      %4884 = vmatprep.subr.mxu0 0.0
      %4885 = vmatpush1.msra.mxu0 0.0
      %4886 = vmatprep.subr.mxu0 0.0
      %4887 = vmatpush1.msra.mxu0 0.0
      %4888 = vmatprep.subr.mxu0 0.0
      %4889 = vmatpush1.msra.mxu0 0.0
      %4890 = vmatprep.subr.mxu0 0.0
      %4891 = vmatpush1.msra.mxu0 0.0
      %4892 = vmatprep.subr.mxu0 0.0
      %4893 = vmatpush1.msra.mxu0 0.0
      %4894 = vmatprep.subr.mxu0 0.0
      %4895 = vmatpush1.msra.mxu0 0.0
      %4896 = vmatprep.subr.mxu0 0.0
      %4897 = vmatpush1.msra.mxu0 0.0
      %4898 = vmatprep.subr.mxu0 0.0
      %4899 = vmatpush1.msra.mxu0 0.0
      %4900 = vmatprep.mubr.f32.mxu0 0.0
      %4901 = vmatmul.mubr.f32.gmra.mrb[0].mxu0 %v4828
      %v4902 = vpop.f32.mrb[0].mxu0
      %v4903 = vadd.f32 0.0, %v4902
      %v4904 = vpop.f32.mrb[0].mxu0
      %v4905 = vadd.f32 0.0, %v4904
      %4906 = vdwg.mxu0
      %v4907 = vadd.f32 %v4803, %v4903
      %v4908 = vadd.f32 %v4804, %v4905
      %4909 = vrot.lane.b32.xlu0 %v2419, 111
      %v4910 = vpop.permute.xlu0 %4909
      %4911 = vrot.lane.b32.xlu0 %v2420, 111
      %v4912 = vpop.permute.xlu0 %4911
      %v4913 = vsel %vm1480, %v4910, %v4912
      %v4914 = vsel %vm1480, %v4912, %v4910
      %v4915 = vld [vmem:[%s1483] ss:$8 sm:$0x3]
      %v4917 = vlaneseq
      %v4918 = vshrl.u32 %v4917, 7
      %v4919 = vsub.s32 0, %v4918
      %v4920 = vrot.slane %v4915, %v4919
      %v4921 = vlaneseq
      %v4922 = vshrl.u32 %v4921, 7
      %v4923 = vsub.s32 1, %v4922
      %v4924 = vrot.slane %v4915, %v4923
      %v4927 = vmul.f32 %v4913, %v4920
      %v4928 = vmul.f32 %v4914, %v4924
      %s4929 = scalar_lea.vmem %s12, 64
      %v4930 = vld [vmem:[%s4929] sm:$0xff]
      %v4932 = vsel %vm684, %v4930, 0
      %v4935 = vsel %vm688, %v4927, 0
      %v4938 = vsel %vm688, %v4928, 0
      %4940 = vmatprep.subr.mxu0 %v4938
      %4941 = vmatpush1.msra.mxu0 %v4935
      %4942 = vmatprep.subr.mxu0 0.0
      %4943 = vmatpush1.msra.mxu0 0.0
      %4944 = vmatprep.subr.mxu0 0.0
      %4945 = vmatpush1.msra.mxu0 0.0
      %4946 = vmatprep.subr.mxu0 0.0
      %4947 = vmatpush1.msra.mxu0 0.0
      %4948 = vmatprep.subr.mxu0 0.0
      %4949 = vmatpush1.msra.mxu0 0.0
      %4950 = vmatprep.subr.mxu0 0.0
      %4951 = vmatpush1.msra.mxu0 0.0
      %4952 = vmatprep.subr.mxu0 0.0
      %4953 = vmatpush1.msra.mxu0 0.0
      %4954 = vmatprep.subr.mxu0 0.0
      %4955 = vmatpush1.msra.mxu0 0.0
      %4956 = vmatprep.subr.mxu0 0.0
      %4957 = vmatpush1.msra.mxu0 0.0
      %4958 = vmatprep.subr.mxu0 0.0
      %4959 = vmatpush1.msra.mxu0 0.0
      %4960 = vmatprep.subr.mxu0 0.0
      %4961 = vmatpush1.msra.mxu0 0.0
      %4962 = vmatprep.subr.mxu0 0.0
      %4963 = vmatpush1.msra.mxu0 0.0
      %4964 = vmatprep.subr.mxu0 0.0
      %4965 = vmatpush1.msra.mxu0 0.0
      %4966 = vmatprep.subr.mxu0 0.0
      %4967 = vmatpush1.msra.mxu0 0.0
      %4968 = vmatprep.subr.mxu0 0.0
      %4969 = vmatpush1.msra.mxu0 0.0
      %4970 = vmatprep.subr.mxu0 0.0
      %4971 = vmatpush1.msra.mxu0 0.0
      %4972 = vmatprep.subr.mxu0 0.0
      %4973 = vmatpush1.msra.mxu0 0.0
      %4974 = vmatprep.subr.mxu0 0.0
      %4975 = vmatpush1.msra.mxu0 0.0
      %4976 = vmatprep.subr.mxu0 0.0
      %4977 = vmatpush1.msra.mxu0 0.0
      %4978 = vmatprep.subr.mxu0 0.0
      %4979 = vmatpush1.msra.mxu0 0.0
      %4980 = vmatprep.subr.mxu0 0.0
      %4981 = vmatpush1.msra.mxu0 0.0
      %4982 = vmatprep.subr.mxu0 0.0
      %4983 = vmatpush1.msra.mxu0 0.0
      %4984 = vmatprep.subr.mxu0 0.0
      %4985 = vmatpush1.msra.mxu0 0.0
      %4986 = vmatprep.subr.mxu0 0.0
      %4987 = vmatpush1.msra.mxu0 0.0
      %4988 = vmatprep.subr.mxu0 0.0
      %4989 = vmatpush1.msra.mxu0 0.0
      %4990 = vmatprep.subr.mxu0 0.0
      %4991 = vmatpush1.msra.mxu0 0.0
      %4992 = vmatprep.subr.mxu0 0.0
      %4993 = vmatpush1.msra.mxu0 0.0
      %4994 = vmatprep.subr.mxu0 0.0
      %4995 = vmatpush1.msra.mxu0 0.0
      %4996 = vmatprep.subr.mxu0 0.0
      %4997 = vmatpush1.msra.mxu0 0.0
      %4998 = vmatprep.subr.mxu0 0.0
      %4999 = vmatpush1.msra.mxu0 0.0
      %5000 = vmatprep.subr.mxu0 0.0
      %5001 = vmatpush1.msra.mxu0 0.0
      %5002 = vmatprep.subr.mxu0 0.0
      %5003 = vmatpush1.msra.mxu0 0.0
      %5004 = vmatprep.mubr.f32.mxu0 0.0
      %5005 = vmatmul.mubr.f32.gmra.mrb[0].mxu0 %v4932
      %v5006 = vpop.f32.mrb[0].mxu0
      %v5007 = vadd.f32 0.0, %v5006
      %v5008 = vpop.f32.mrb[0].mxu0
      %v5009 = vadd.f32 0.0, %v5008
      %5010 = vdwg.mxu0
      %v5011 = vadd.f32 %v4907, %v5007
      %v5012 = vadd.f32 %v4908, %v5009
      %v5013 = vld [vmem:[%s13] sm:$0xff]
      %5015 = vset.pattern.permute.xlu0 0
      %5016 = vperm.xlu0 %5015, %v5013
      %v5017 = vpop.permute.xlu0 %5016
      %v5019 = vadd.f32 %v5011, %v5017
      %v5020 = vadd.f32 %v5012, %v5017
      %v5021 = vld [vmem:[%s17] sm:$0xff]
      %v5022 = vld [vmem:[%s17 + $0x8] sm:$0xff]
      %v5023 = vld [vmem:[%s17 + $0x10] sm:$0xff]
      %v5024 = vld [vmem:[%s17 + $0x18] sm:$0xff]
      %v5025 = vld [vmem:[%s17 + $0x20] sm:$0xff]
      %v5026 = vld [vmem:[%s17 + $0x28] sm:$0xff]
      %v5027 = vld [vmem:[%s17 + $0x30] sm:$0xff]
      %v5028 = vld [vmem:[%s17 + $0x38] sm:$0xff]
      %v5029 = vld [vmem:[%s17 + $0x40] sm:$0xff]
      %v5030 = vld [vmem:[%s17 + $0x48] sm:$0xff]
      %v5031 = vld [vmem:[%s17 + $0x50] sm:$0xff]
      %v5032 = vld [vmem:[%s17 + $0x58] sm:$0xff]
      %v5033 = vld [vmem:[%s17 + $0x60] sm:$0xff]
      %v5034 = vld [vmem:[%s17 + $0x68] sm:$0xff]
      %v5035 = vld [vmem:[%s17 + $0x70] sm:$0xff]
      %v5036 = vld [vmem:[%s17 + $0x78] sm:$0xff]
      %v5037 = vld [vmem:[%s17 + $0x80] sm:$0xff]
      %v5038 = vld [vmem:[%s17 + $0x88] sm:$0xff]
      %v5039 = vld [vmem:[%s17 + $0x90] sm:$0xff]
      %v5040 = vld [vmem:[%s17 + $0x98] sm:$0xff]
      %v5041 = vld [vmem:[%s17 + $0xa0] sm:$0xff]
      %v5042 = vld [vmem:[%s17 + $0xa8] sm:$0xff]
      %v5043 = vld [vmem:[%s17 + $0xb0] sm:$0xff]
      %v5044 = vld [vmem:[%s17 + $0xb8] sm:$0xff]
      %v5045 = vld [vmem:[%s17 + $0xc0] sm:$0xff]
      %v5046 = vld [vmem:[%s17 + $0xc8] sm:$0xff]
      %v5047 = vld [vmem:[%s17 + $0xd0] sm:$0xff]
      %v5048 = vld [vmem:[%s17 + $0xd8] sm:$0xff]
      %v5049 = vld [vmem:[%s17 + $0xe0] sm:$0xff]
      %v5050 = vld [vmem:[%s17 + $0xe8] sm:$0xff]
      %v5051 = vld [vmem:[%s17 + $0xf0] sm:$0xff]
      %v5052 = vld [vmem:[%s17 + $0xf8] sm:$0xff]
      %5053 = vmatprep.subr.mxu0 0.0
      %5054 = vmatpush1.msra.mxu0 %v5021
      %5055 = vmatprep.subr.mxu0 0.0
      %5056 = vmatpush1.msra.mxu0 %v5022
      %5057 = vmatprep.subr.mxu0 0.0
      %5058 = vmatpush1.msra.mxu0 %v5023
      %5059 = vmatprep.subr.mxu0 0.0
      %5060 = vmatpush1.msra.mxu0 %v5024
      %5061 = vmatprep.subr.mxu0 0.0
      %5062 = vmatpush1.msra.mxu0 %v5025
      %5063 = vmatprep.subr.mxu0 0.0
      %5064 = vmatpush1.msra.mxu0 %v5026
      %5065 = vmatprep.subr.mxu0 0.0
      %5066 = vmatpush1.msra.mxu0 %v5027
      %5067 = vmatprep.subr.mxu0 0.0
      %5068 = vmatpush1.msra.mxu0 %v5028
      %5069 = vmatprep.subr.mxu0 0.0
      %5070 = vmatpush1.msra.mxu0 %v5029
      %5071 = vmatprep.subr.mxu0 0.0
      %5072 = vmatpush1.msra.mxu0 %v5030
      %5073 = vmatprep.subr.mxu0 0.0
      %5074 = vmatpush1.msra.mxu0 %v5031
      %5075 = vmatprep.subr.mxu0 0.0
      %5076 = vmatpush1.msra.mxu0 %v5032
      %5077 = vmatprep.subr.mxu0 0.0
      %5078 = vmatpush1.msra.mxu0 %v5033
      %5079 = vmatprep.subr.mxu0 0.0
      %5080 = vmatpush1.msra.mxu0 %v5034
      %5081 = vmatprep.subr.mxu0 0.0
      %5082 = vmatpush1.msra.mxu0 %v5035
      %5083 = vmatprep.subr.mxu0 0.0
      %5084 = vmatpush1.msra.mxu0 %v5036
      %5085 = vmatprep.subr.mxu0 0.0
      %5086 = vmatpush1.msra.mxu0 %v5037
      %5087 = vmatprep.subr.mxu0 0.0
      %5088 = vmatpush1.msra.mxu0 %v5038
      %5089 = vmatprep.subr.mxu0 0.0
      %5090 = vmatpush1.msra.mxu0 %v5039
      %5091 = vmatprep.subr.mxu0 0.0
      %5092 = vmatpush1.msra.mxu0 %v5040
      %5093 = vmatprep.subr.mxu0 0.0
      %5094 = vmatpush1.msra.mxu0 %v5041
      %5095 = vmatprep.subr.mxu0 0.0
      %5096 = vmatpush1.msra.mxu0 %v5042
      %5097 = vmatprep.subr.mxu0 0.0
      %5098 = vmatpush1.msra.mxu0 %v5043
      %5099 = vmatprep.subr.mxu0 0.0
      %5100 = vmatpush1.msra.mxu0 %v5044
      %5101 = vmatprep.subr.mxu0 0.0
      %5102 = vmatpush1.msra.mxu0 %v5045
      %5103 = vmatprep.subr.mxu0 0.0
      %5104 = vmatpush1.msra.mxu0 %v5046
      %5105 = vmatprep.subr.mxu0 0.0
      %5106 = vmatpush1.msra.mxu0 %v5047
      %5107 = vmatprep.subr.mxu0 0.0
      %5108 = vmatpush1.msra.mxu0 %v5048
      %5109 = vmatprep.subr.mxu0 0.0
      %5110 = vmatpush1.msra.mxu0 %v5049
      %5111 = vmatprep.subr.mxu0 0.0
      %5112 = vmatpush1.msra.mxu0 %v5050
      %5113 = vmatprep.subr.mxu0 0.0
      %5114 = vmatpush1.msra.mxu0 %v5051
      %5115 = vmatprep.subr.mxu0 0.0
      %5116 = vmatpush1.msra.mxu0 %v5052
      %5117 = vmatprep.mubr.f32.mxu0 %v5020
      %5118 = vmatmul.mubr.f32.gmra.mrb[0].mxu0 %v5019
      %v5119 = vpop.f32.mrb[0].mxu0
      %v5120 = vadd.f32 %v3895, %v5119
      %v5121 = vpop.f32.mrb[0].mxu0
      %5122 = vdwg.mxu0
      %v5123 = vmax.f32 %v5120, 0.0
      %5124 = vst [vmem:[%s630] sm:$0xff] %v5123
      %p5125 = scmp.lt.s32.totalorder %s31, 1
      %s5126 = scalar_select %p5125, %s31, 1
      %s5127 = smul.addr %s5126, 2
      %s5128 = smul.addr %s5127, 4
      %s5129 = scalar_lea.vmem %s18, %s5128
      %p5130 = scmp.lt.s32.totalorder %s31, 1
      %s5131 = scalar_select %p5130, %s31, 1
      %s5132 = smul.addr %s5131, 8
      %s5133 = scalar_lea.vmem %s19, %s5132
      // Predicated region
      $region93: #{hr_module_forward.1} parent=91 // pred_check
        %p5134 = pneg %p437
      $region94: #{hr_module_forward.1} parent=91 // pred_check_branch
        %5136 = sbr.rel (%p5134) target = $region96
      $region95: #{hr_module_forward.1} parent=91 // pred_region
        _
      $region96: #{hr_module_forward.1} parent=91 // pred_fallthru
        _
      // Predicated region
      $region97: #{hr_module_forward.1} parent=91 // pred_check
        %p5137 = pneg %p463
      $region98: #{hr_module_forward.1} parent=91 // pred_check_branch
        %5139 = sbr.rel (%p5137) target = $region100
      $region99: #{hr_module_forward.1} parent=91 // pred_region
        _
      $region100: #{hr_module_forward.1} parent=91 // pred_fallthru
        _
    $region92: #{hr_module_forward.1} parent=5 // pred_fallthru
      _
    %p5140 = scmp.le.s32.totalorder 2, %s26
    // Predicated region
    $region101: #{hr_module_forward.1} parent=5 // pred_check
      %p5141 = pneg %p5140
    $region102: #{hr_module_forward.1} parent=5 // pred_check_branch
      %5143 = sbr.rel (%p5141) target = $region104
    $region103: #{hr_module_forward.1} parent=5 // pred_region
      %s5144 = ssub.s32 %s26, 2
      // Predicated region
      $region105: #{hr_module_forward.1} parent=103 // pred_check
        %p5145 = pneg %p443
      $region106: #{hr_module_forward.1} parent=103 // pred_check_branch
        %5147 = sbr.rel (%p5145) target = $region108
      $region107: #{hr_module_forward.1} parent=103 // pred_region
        %p5148 = scmp.lt.s32.totalorder %s32, 1
        %s5149 = scalar_select %p5148, %s32, 1
        %s5150 = smul.addr %s5149, 2
        %s5151 = smul.addr %s5150, 4
        %s5152 = scalar_lea.vmem %s18, %s5151
      $region108: #{hr_module_forward.1} parent=103 // pred_fallthru
        _
      // Predicated region
      $region109: #{hr_module_forward.1} parent=103 // pred_check
        %p5153 = pneg %p469
      $region110: #{hr_module_forward.1} parent=103 // pred_check_branch
        %5155 = sbr.rel (%p5153) target = $region112
      $region111: #{hr_module_forward.1} parent=103 // pred_region
        %p5156 = scmp.lt.s32.totalorder %s32, 1
        %s5157 = scalar_select %p5156, %s32, 1
        %s5158 = smul.addr %s5157, 8
        %s5159 = scalar_lea.vmem %s19, %s5158
      $region112: #{hr_module_forward.1} parent=103 // pred_fallthru
        _
    $region104: #{hr_module_forward.1} parent=5 // pred_fallthru
      _
  $region6: #{hr_module_forward.1} parent=0 // loop_footer
    %s30 = sadd.s32 1, %s26
  $region7: #{hr_module_forward.1} parent=0 // loop_footer_branch
    %25 = sbr.rel target = $region3
  $region8: #{hr_module_forward.1} parent=0 // loop_exit
    _

</llo_original>
